<compile_context>
chip_gen: v7x
topology: tpu7x:2x2x1
jax: 0.10.0
libtpu: 0.0.40
codegen_flags: <defaults>
</compile_context>

<pallas_src>
import numpy as np
import jax
import jax.numpy as jnp
from jax.experimental import pallas as pl
from jax.experimental.pallas import tpu as pltpu

# ----------------------------- Pallas kernel ---------------------------------


def fused_gnn_kernel(
    x_ref, ea_ref, src_ref, dst_ref,                      # graph data (raw indices)
    inw_ref, inb_ref,                                     # input_proj
    nw1_ref, nb1_ref, nw2_ref, nb2_ref,                   # node_mlp    [L, ...]
    ew1c_ref, eb1c_ref, ew2_ref, eb2_ref,                 # edge_mlp    (layer-fused / [L, ...])
    mw1a_ref, mw1b_ref, mb1_ref, mw2_ref, mb2_ref,        # message_mlp [L, ...]
    bns_ref, bnb_ref,                                     # folded BN   [L, 1, H]
    outw_ref, outb_ref,                                   # output_proj
    o_ref,
):
    """input_proj -> L x (RadarGraphConv + BN(eval) + ReLU + residual) -> output_proj."""
    L = nw1_ref.shape[0]
    H = nw1_ref.shape[-1]
    N = x_ref.shape[0]
    E = ea_ref.shape[0]

    # ---- graph structure from raw indices (formerly wrapper-side XLA glue) ----
    src = src_ref[...]                                          # [E, 1] int32
    dst = dst_ref[...]                                          # [1, E] int32
    gmat = (src == jax.lax.broadcasted_iota(jnp.int32, (E, N), 1)).astype(jnp.float32)  # [E,N]
    smat = (jax.lax.broadcasted_iota(jnp.int32, (N, E), 0) == dst).astype(jnp.float32)  # [N,E]
    deg = jnp.sum(smat, axis=1, keepdims=True)                  # [N, 1] in-degree
    inv_deg = 1.0 / jnp.maximum(deg, 1.0)                       # [N, 1]
    has_edge = jnp.minimum(deg, 1.0)                            # == deg * inv_deg, exact 0/1

    # ---- input projection: x = x_in @ W_in + b_in -----------------------------
    x = (
        jnp.dot(x_ref[...], inw_ref[...], preferred_element_type=jnp.float32)
        + inb_ref[...]
    )                                                           # [N, H]

    # ---- hoisted edge branch (depends only on edge_attr) ----------------------
    # Fused first layer of all L edge-MLPs: one [E, edge_dim] @ [edge_dim, L*H].
    e_h_all = jnp.maximum(
        jnp.dot(ea_ref[...], ew1c_ref[...], preferred_element_type=jnp.float32)
        + eb1c_ref[...],
        0.0,
    )                                                           # [E, L*H]
    # Per-layer second matmul + pre-projection through mw1b (message-MLP input half).
    ems = []
    for l in range(L):
        ep = (
            jnp.dot(e_h_all[:, l * H:(l + 1) * H], ew2_ref[l],
                    preferred_element_type=jnp.float32)
            + eb2_ref[l]
        )                                                       # [E, H]
        ems.append(jnp.dot(ep, mw1b_ref[l], preferred_element_type=jnp.float32))

    # ---- per-layer node path (unrolled, x stays resident) ---------------------
    for l in range(L):
        # node_mlp: Linear -> ReLU -> Linear
        h = jnp.maximum(
            jnp.dot(x, nw1_ref[l], preferred_element_type=jnp.float32) + nb1_ref[l],
            0.0,
        )
        xp = (
            jnp.dot(h, nw2_ref[l], preferred_element_type=jnp.float32) + nb2_ref[l]
        )                                                       # [N, H]

        # Gather reassociation: project over N rows first, then one-hot select rows.
        xpm = jnp.dot(xp, mw1a_ref[l], preferred_element_type=jnp.float32)      # [N, H]
        m = jnp.maximum(
            jnp.dot(gmat, xpm, preferred_element_type=jnp.float32)              # gather to [E, H]
            + ems[l] + mb1_ref[l],
            0.0,
        )                                                       # [E, H]

        # Scatter reassociation: sum messages per node first, then H x H matmul.
        aggr_pre = jnp.dot(smat, m, preferred_element_type=jnp.float32)          # [N, H]
        aggr = (
            jnp.dot(aggr_pre, mw2_ref[l], preferred_element_type=jnp.float32) * inv_deg
            + has_edge * mb2_ref[l]
        )                                                       # [N, H] scatter-mean

        # MessagePassing.update: aggr + x', then BN(eval, folded) -> ReLU -> residual
        x_new = aggr + xp
        x_new = jnp.maximum(x_new * bns_ref[l] + bnb_ref[l], 0.0)
        x = x + x_new

    # ---- output projection (direct (N, out_dim) store; no lane padding) -------
    o_ref[...] = (
        jnp.dot(x, outw_ref[...], preferred_element_type=jnp.float32) + outb_ref[...]
    )


# ----------------------------- wrapper ----------------------------------------

_VMEM = pl.BlockSpec(memory_space=pltpu.MemorySpace.VMEM)


def prepare_kernel_params(params):
    """One-time (outside the per-call forward) weight stacking / splitting / fusing."""
    hidden = params["in_w"].shape[1]

    def stack(i):
        return jnp.stack([lp[i] for lp in params["layers"]], axis=0)

    nw1, nb1, nw2, nb2 = stack(0), stack(1), stack(2), stack(3)
    ew1, eb1, ew2, eb2 = stack(4), stack(5), stack(6), stack(7)
    mw1, mb1, mw2, mb2 = stack(8), stack(9), stack(10), stack(11)
    bns, bnb = stack(12), stack(13)

    # concat([xj, ep]) @ mw1 == xj @ mw1[:H] + ep @ mw1[H:]  -> split, no in-kernel concat
    mw1a, mw1b = mw1[:, :hidden, :], mw1[:, hidden:, :]
    # Fuse the L edge-MLP first layers into one wide matmul: [edge_dim, L*H].
    ew1c = jnp.concatenate([ew1[l] for l in range(ew1.shape[0])], axis=1)
    eb1c = jnp.concatenate([eb1[l] for l in range(eb1.shape[0])], axis=1)

    return {
        "in_w": params["in_w"], "in_b": params["in_b"],
        "nw1": nw1, "nb1": nb1, "nw2": nw2, "nb2": nb2,
        "ew1c": ew1c, "eb1c": eb1c, "ew2": ew2, "eb2": eb2,
        "mw1a": mw1a, "mw1b": mw1b, "mb1": mb1, "mw2": mw2, "mb2": mb2,
        "bns": bns, "bnb": bnb,
        "out_w": params["out_w"], "out_b": params["out_b"],
    }


def spatial_graph_network_forward(kparams, x, edge_index, edge_attr):
    """Full SpatialGraphNetwork.forward as a single fused Pallas kernel."""
    num_nodes = x.shape[0]
    num_edges = edge_attr.shape[0]
    out_dim = kparams["out_w"].shape[1]

    # Only trivial index reshapes remain wrapper-side; all heavy glue is in-kernel.
    src_col = edge_index[0].astype(jnp.int32).reshape(num_edges, 1)
    dst_row = edge_index[1].astype(jnp.int32).reshape(1, num_edges)

    args = (
        x, edge_attr, src_col, dst_row,
        kparams["in_w"], kparams["in_b"],
        kparams["nw1"], kparams["nb1"], kparams["nw2"], kparams["nb2"],
        kparams["ew1c"], kparams["eb1c"], kparams["ew2"], kparams["eb2"],
        kparams["mw1a"], kparams["mw1b"], kparams["mb1"], kparams["mw2"], kparams["mb2"],
        kparams["bns"], kparams["bnb"],
        kparams["out_w"], kparams["out_b"],
    )

    return pl.pallas_call(
        fused_gnn_kernel,
        out_shape=jax.ShapeDtypeStruct((num_nodes, out_dim), jnp.float32),
        in_specs=[_VMEM] * len(args),
        out_specs=_VMEM,
    )(*args)


# ----------------------------- reference (plain JAX) --------------------------


def reference_forward(params, x, edge_index, edge_attr):
    num_nodes = x.shape[0]
    src, dst = edge_index[0], edge_index[1]
    gmat = jax.nn.one_hot(src, num_nodes, dtype=jnp.float32)
    smat = jax.nn.one_hot(dst, num_nodes, dtype=jnp.float32).T
    deg = jnp.sum(smat, axis=1, keepdims=True)
    inv_deg = 1.0 / jnp.maximum(deg, 1.0)

    x = x @ params["in_w"] + params["in_b"]
    for (nw1, nb1, nw2, nb2, ew1, eb1, ew2, eb2,
         mw1, mb1, mw2, mb2, bns, bnb) in params["layers"]:
        xp = jnp.maximum(x @ nw1 + nb1, 0.0) @ nw2 + nb2
        ep = jnp.maximum(edge_attr @ ew1 + eb1, 0.0) @ ew2 + eb2
        xj = gmat @ xp
        msg = jnp.maximum(jnp.concatenate([xj, ep], -1) @ mw1 + mb1, 0.0) @ mw2 + mb2
        aggr = (smat @ msg) * inv_deg
        x_new = aggr + xp
        x_new = jnp.maximum(x_new * bns + bnb, 0.0)
        x = x + x_new
    return x @ params["out_w"] + params["out_b"]


# ----------------------------- param init -------------------------------------


def init_linear(key, fan_in, fan_out):
    kw, kb = jax.random.split(key)
    bound = 1.0 / np.sqrt(fan_in)
    w = jax.random.uniform(kw, (fan_in, fan_out), jnp.float32, -bound, bound)
    b = jax.random.uniform(kb, (1, fan_out), jnp.float32, -bound, bound)
    return w, b


def init_params(key, input_dim=8, hidden_dim=64, num_layers=3, output_dim=32,
                edge_dim=3):
    keys = jax.random.split(key, 2 + num_layers)
    in_w, in_b = init_linear(keys[0], input_dim, hidden_dim)
    out_w, out_b = init_linear(keys[1], hidden_dim, output_dim)

    # BatchNorm1d fresh init (eval): gamma=1, beta=0, running_mean=0, running_var=1
    eps = 1e-5
    gamma = jnp.ones((1, hidden_dim), jnp.float32)
    beta = jnp.zeros((1, hidden_dim), jnp.float32)
    rmean = jnp.zeros((1, hidden_dim), jnp.float32)
    rvar = jnp.ones((1, hidden_dim), jnp.float32)
    bn_scale = gamma / jnp.sqrt(rvar + eps)
    bn_shift = beta - rmean * bn_scale

    layers = []
    for i in range(num_layers):
        lk = jax.random.split(keys[2 + i], 6)
        nw1, nb1 = init_linear(lk[0], hidden_dim, hidden_dim)
        nw2, nb2 = init_linear(lk[1], hidden_dim, hidden_dim)
        ew1, eb1 = init_linear(lk[2], edge_dim, hidden_dim)
        ew2, eb2 = init_linear(lk[3], hidden_dim, hidden_dim)
        mw1, mb1 = init_linear(lk[4], 2 * hidden_dim, hidden_dim)
        mw2, mb2 = init_linear(lk[5], hidden_dim, hidden_dim)
        layers.append((nw1, nb1, nw2, nb2, ew1, eb1, ew2, eb2,
                       mw1, mb1, mw2, mb2, bn_scale, bn_shift))

    return {"in_w": in_w, "in_b": in_b, "out_w": out_w, "out_b": out_b,
            "layers": layers}


# ----------------------------- main --------------------------------------------

if __name__ == "__main__":
    key = jax.random.PRNGKey(0)
    k_param, k_x, k_src, k_dst, k_ea = jax.random.split(key, 5)

    num_nodes, num_edges = 16, 32
    input_dim, hidden_dim, output_dim, edge_dim = 8, 64, 32, 3

    params = init_params(k_param, input_dim, hidden_dim, 3, output_dim, edge_dim)
    # One-time weight prep (stack / split / fuse) outside the per-call forward.
    kernel_params = jax.tree_util.tree_map(
        jax.block_until_ready, prepare_kernel_params(params))

    x = jax.random.normal(k_x, (num_nodes, input_dim), jnp.float32)
    src = jax.random.randint(k_src, (num_edges,), 0, num_nodes)
    dst = jax.random.randint(k_dst, (num_edges,), 0, num_nodes)
    edge_index = jnp.stack([src, dst], axis=0)                  # [2, E]
    edge_attr = jax.random.normal(k_ea, (num_edges, edge_dim), jnp.float32)

    fwd = jax.jit(spatial_graph_network_forward)
    out = fwd(kernel_params, x, edge_index, edge_attr)
    out = jax.block_until_ready(out)

    ref = reference_forward(params, x, edge_index, edge_attr)
    assert out.shape == (num_nodes, output_dim)
    np.testing.assert_allclose(np.asarray(out), np.asarray(ref),
                               rtol=1e-3, atol=1e-3)

    print("KERNEL_OK")
</pallas_src>

<mosaic_0001>
module attributes {stable_mosaic.version = 11 : i64} {
  func.func @fused_gnn_kernel(%arg0: memref<16x8xf32, #tpu.memory_space<vmem>>, %arg1: memref<32x3xf32, #tpu.memory_space<vmem>>, %arg2: memref<32x1xi32, #tpu.memory_space<vmem>>, %arg3: memref<1x32xi32, #tpu.memory_space<vmem>>, %arg4: memref<8x64xf32, #tpu.memory_space<vmem>>, %arg5: memref<1x64xf32, #tpu.memory_space<vmem>>, %arg6: memref<3x64x64xf32, #tpu.memory_space<vmem>>, %arg7: memref<3x1x64xf32, #tpu.memory_space<vmem>>, %arg8: memref<3x64x64xf32, #tpu.memory_space<vmem>>, %arg9: memref<3x1x64xf32, #tpu.memory_space<vmem>>, %arg10: memref<3x192xf32, #tpu.memory_space<vmem>>, %arg11: memref<1x192xf32, #tpu.memory_space<vmem>>, %arg12: memref<3x64x64xf32, #tpu.memory_space<vmem>>, %arg13: memref<3x1x64xf32, #tpu.memory_space<vmem>>, %arg14: memref<3x64x64xf32, #tpu.memory_space<vmem>>, %arg15: memref<3x64x64xf32, #tpu.memory_space<vmem>>, %arg16: memref<3x1x64xf32, #tpu.memory_space<vmem>>, %arg17: memref<3x64x64xf32, #tpu.memory_space<vmem>>, %arg18: memref<3x1x64xf32, #tpu.memory_space<vmem>>, %arg19: memref<3x1x64xf32, #tpu.memory_space<vmem>>, %arg20: memref<3x1x64xf32, #tpu.memory_space<vmem>>, %arg21: memref<64x32xf32, #tpu.memory_space<vmem>>, %arg22: memref<1x32xf32, #tpu.memory_space<vmem>>, %arg23: memref<16x32xf32, #tpu.memory_space<vmem>>) attributes {dimension_semantics = [], scalar_prefetch = 0 : i64, scratch_operands = 0 : i64, tpu.core_type = #tpu.core_type<tc>} {
    %c0 = arith.constant 0 : index
    %c0_0 = arith.constant 0 : index
    %0 = vector.load %arg2[%c0, %c0_0] : memref<32x1xi32, #tpu.memory_space<vmem>>, vector<32x1xi32>
    %c0_1 = arith.constant 0 : index
    %c0_2 = arith.constant 0 : index
    %1 = vector.load %arg3[%c0_1, %c0_2] : memref<1x32xi32, #tpu.memory_space<vmem>>, vector<1x32xi32>
    %2 = tpu.iota {dimensions = array<i32: 1>} : vector<32x16xi32>
    %3 = vector.broadcast %0 : vector<32x1xi32> to vector<32x16xi32>
    %4 = arith.cmpi eq, %3, %2 : vector<32x16xi32>
    %5 = arith.extui %4 : vector<32x16xi1> to vector<32x16xi32>
    %6 = arith.sitofp %5 : vector<32x16xi32> to vector<32x16xf32>
    %7 = tpu.iota {dimensions = array<i32: 0>} : vector<16x32xi32>
    %8 = vector.broadcast %1 : vector<1x32xi32> to vector<16x32xi32>
    %9 = arith.cmpi eq, %7, %8 : vector<16x32xi32>
    %10 = arith.extui %9 : vector<16x32xi1> to vector<16x32xi32>
    %11 = arith.sitofp %10 : vector<16x32xi32> to vector<16x32xf32>
    %cst = arith.constant dense<0.000000e+00> : vector<16xf32>
    %12 = vector.multi_reduction <add>, %11, %cst [1] : vector<16x32xf32> to vector<16xf32>
    %13 = vector.shape_cast %12 : vector<16xf32> to vector<16x1xf32>
    %cst_3 = arith.constant 1.000000e+00 : f32
    %14 = vector.broadcast %cst_3 : f32 to vector<16x1xf32>
    %15 = arith.maximumf %13, %14 : vector<16x1xf32>
    %cst_4 = arith.constant 1.000000e+00 : f32
    %16 = vector.broadcast %cst_4 : f32 to vector<16x1xf32>
    %17 = arith.divf %16, %15 : vector<16x1xf32>
    %cst_5 = arith.constant 1.000000e+00 : f32
    %18 = vector.broadcast %cst_5 : f32 to vector<16x1xf32>
    %19 = arith.minimumf %13, %18 : vector<16x1xf32>
    %c0_6 = arith.constant 0 : index
    %c0_7 = arith.constant 0 : index
    %20 = vector.load %arg0[%c0_6, %c0_7] : memref<16x8xf32, #tpu.memory_space<vmem>>, vector<16x8xf32>
    %c0_8 = arith.constant 0 : index
    %c0_9 = arith.constant 0 : index
    %21 = vector.load %arg4[%c0_8, %c0_9] : memref<8x64xf32, #tpu.memory_space<vmem>>, vector<8x64xf32>
    %cst_10 = arith.constant dense<0.000000e+00> : vector<16x64xf32>
    %22 = tpu.matmul %20, %21, %cst_10 {dimension_numbers = #tpu.dot_dimension_numbers<[1], [0], [0], [1], [0, 0, 1, 1], [], []>} : vector<16x8xf32>, vector<8x64xf32>, vector<16x64xf32> -> vector<16x64xf32>
    %c0_11 = arith.constant 0 : index
    %c0_12 = arith.constant 0 : index
    %23 = vector.load %arg5[%c0_11, %c0_12] : memref<1x64xf32, #tpu.memory_space<vmem>>, vector<1x64xf32>
    %24 = vector.broadcast %23 : vector<1x64xf32> to vector<16x64xf32>
    %25 = arith.addf %22, %24 : vector<16x64xf32>
    %c0_13 = arith.constant 0 : index
    %c0_14 = arith.constant 0 : index
    %26 = vector.load %arg1[%c0_13, %c0_14] : memref<32x3xf32, #tpu.memory_space<vmem>>, vector<32x3xf32>
    %c0_15 = arith.constant 0 : index
    %c0_16 = arith.constant 0 : index
    %27 = vector.load %arg10[%c0_15, %c0_16] : memref<3x192xf32, #tpu.memory_space<vmem>>, vector<3x192xf32>
    %cst_17 = arith.constant dense<0.000000e+00> : vector<32x192xf32>
    %28 = tpu.matmul %26, %27, %cst_17 {dimension_numbers = #tpu.dot_dimension_numbers<[1], [0], [0], [1], [0, 0, 1, 1], [], []>} : vector<32x3xf32>, vector<3x192xf32>, vector<32x192xf32> -> vector<32x192xf32>
    %c0_18 = arith.constant 0 : index
    %c0_19 = arith.constant 0 : index
    %29 = vector.load %arg11[%c0_18, %c0_19] : memref<1x192xf32, #tpu.memory_space<vmem>>, vector<1x192xf32>
    %30 = vector.broadcast %29 : vector<1x192xf32> to vector<32x192xf32>
    %31 = arith.addf %28, %30 : vector<32x192xf32>
    %cst_20 = arith.constant 0.000000e+00 : f32
    %32 = vector.broadcast %cst_20 : f32 to vector<32x192xf32>
    %33 = arith.maximumf %31, %32 : vector<32x192xf32>
    %34 = vector.extract_strided_slice %33 {offsets = [0, 0], sizes = [32, 64], strides = [1, 1]} : vector<32x192xf32> to vector<32x64xf32>
    %c0_21 = arith.constant 0 : index
    %c0_22 = arith.constant 0 : index
    %c0_23 = arith.constant 0 : index
    %35 = vector.load %arg12[%c0_21, %c0_22, %c0_23] : memref<3x64x64xf32, #tpu.memory_space<vmem>>, vector<1x64x64xf32>
    %36 = vector.shape_cast %35 : vector<1x64x64xf32> to vector<64x64xf32>
    %cst_24 = arith.constant dense<0.000000e+00> : vector<32x64xf32>
    %37 = tpu.matmul %34, %36, %cst_24 {dimension_numbers = #tpu.dot_dimension_numbers<[1], [0], [0], [1], [0, 0, 1, 1], [], []>} : vector<32x64xf32>, vector<64x64xf32>, vector<32x64xf32> -> vector<32x64xf32>
    %c0_25 = arith.constant 0 : index
    %c0_26 = arith.constant 0 : index
    %c0_27 = arith.constant 0 : index
    %38 = vector.load %arg13[%c0_25, %c0_26, %c0_27] : memref<3x1x64xf32, #tpu.memory_space<vmem>>, vector<1x1x64xf32>
    %39 = vector.shape_cast %38 : vector<1x1x64xf32> to vector<1x64xf32>
    %40 = vector.broadcast %39 : vector<1x64xf32> to vector<32x64xf32>
    %41 = arith.addf %37, %40 : vector<32x64xf32>
    %c0_28 = arith.constant 0 : index
    %c0_29 = arith.constant 0 : index
    %c0_30 = arith.constant 0 : index
    %42 = vector.load %arg15[%c0_28, %c0_29, %c0_30] : memref<3x64x64xf32, #tpu.memory_space<vmem>>, vector<1x64x64xf32>
    %43 = vector.shape_cast %42 : vector<1x64x64xf32> to vector<64x64xf32>
    %cst_31 = arith.constant dense<0.000000e+00> : vector<32x64xf32>
    %44 = tpu.matmul %41, %43, %cst_31 {dimension_numbers = #tpu.dot_dimension_numbers<[1], [0], [0], [1], [0, 0, 1, 1], [], []>} : vector<32x64xf32>, vector<64x64xf32>, vector<32x64xf32> -> vector<32x64xf32>
    %45 = vector.extract_strided_slice %33 {offsets = [0, 64], sizes = [32, 64], strides = [1, 1]} : vector<32x192xf32> to vector<32x64xf32>
    %c1 = arith.constant 1 : index
    %c0_32 = arith.constant 0 : index
    %c0_33 = arith.constant 0 : index
    %46 = vector.load %arg12[%c1, %c0_32, %c0_33] : memref<3x64x64xf32, #tpu.memory_space<vmem>>, vector<1x64x64xf32>
    %47 = vector.shape_cast %46 : vector<1x64x64xf32> to vector<64x64xf32>
    %cst_34 = arith.constant dense<0.000000e+00> : vector<32x64xf32>
    %48 = tpu.matmul %45, %47, %cst_34 {dimension_numbers = #tpu.dot_dimension_numbers<[1], [0], [0], [1], [0, 0, 1, 1], [], []>} : vector<32x64xf32>, vector<64x64xf32>, vector<32x64xf32> -> vector<32x64xf32>
    %c1_35 = arith.constant 1 : index
    %c0_36 = arith.constant 0 : index
    %c0_37 = arith.constant 0 : index
    %49 = vector.load %arg13[%c1_35, %c0_36, %c0_37] : memref<3x1x64xf32, #tpu.memory_space<vmem>>, vector<1x1x64xf32>
    %50 = vector.shape_cast %49 : vector<1x1x64xf32> to vector<1x64xf32>
    %51 = vector.broadcast %50 : vector<1x64xf32> to vector<32x64xf32>
    %52 = arith.addf %48, %51 : vector<32x64xf32>
    %c1_38 = arith.constant 1 : index
    %c0_39 = arith.constant 0 : index
    %c0_40 = arith.constant 0 : index
    %53 = vector.load %arg15[%c1_38, %c0_39, %c0_40] : memref<3x64x64xf32, #tpu.memory_space<vmem>>, vector<1x64x64xf32>
    %54 = vector.shape_cast %53 : vector<1x64x64xf32> to vector<64x64xf32>
    %cst_41 = arith.constant dense<0.000000e+00> : vector<32x64xf32>
    %55 = tpu.matmul %52, %54, %cst_41 {dimension_numbers = #tpu.dot_dimension_numbers<[1], [0], [0], [1], [0, 0, 1, 1], [], []>} : vector<32x64xf32>, vector<64x64xf32>, vector<32x64xf32> -> vector<32x64xf32>
    %56 = vector.extract_strided_slice %33 {offsets = [0, 128], sizes = [32, 64], strides = [1, 1]} : vector<32x192xf32> to vector<32x64xf32>
    %c2 = arith.constant 2 : index
    %c0_42 = arith.constant 0 : index
    %c0_43 = arith.constant 0 : index
    %57 = vector.load %arg12[%c2, %c0_42, %c0_43] : memref<3x64x64xf32, #tpu.memory_space<vmem>>, vector<1x64x64xf32>
    %58 = vector.shape_cast %57 : vector<1x64x64xf32> to vector<64x64xf32>
    %cst_44 = arith.constant dense<0.000000e+00> : vector<32x64xf32>
    %59 = tpu.matmul %56, %58, %cst_44 {dimension_numbers = #tpu.dot_dimension_numbers<[1], [0], [0], [1], [0, 0, 1, 1], [], []>} : vector<32x64xf32>, vector<64x64xf32>, vector<32x64xf32> -> vector<32x64xf32>
    %c2_45 = arith.constant 2 : index
    %c0_46 = arith.constant 0 : index
    %c0_47 = arith.constant 0 : index
    %60 = vector.load %arg13[%c2_45, %c0_46, %c0_47] : memref<3x1x64xf32, #tpu.memory_space<vmem>>, vector<1x1x64xf32>
    %61 = vector.shape_cast %60 : vector<1x1x64xf32> to vector<1x64xf32>
    %62 = vector.broadcast %61 : vector<1x64xf32> to vector<32x64xf32>
    %63 = arith.addf %59, %62 : vector<32x64xf32>
    %c2_48 = arith.constant 2 : index
    %c0_49 = arith.constant 0 : index
    %c0_50 = arith.constant 0 : index
    %64 = vector.load %arg15[%c2_48, %c0_49, %c0_50] : memref<3x64x64xf32, #tpu.memory_space<vmem>>, vector<1x64x64xf32>
    %65 = vector.shape_cast %64 : vector<1x64x64xf32> to vector<64x64xf32>
    %cst_51 = arith.constant dense<0.000000e+00> : vector<32x64xf32>
    %66 = tpu.matmul %63, %65, %cst_51 {dimension_numbers = #tpu.dot_dimension_numbers<[1], [0], [0], [1], [0, 0, 1, 1], [], []>} : vector<32x64xf32>, vector<64x64xf32>, vector<32x64xf32> -> vector<32x64xf32>
    %c0_52 = arith.constant 0 : index
    %c0_53 = arith.constant 0 : index
    %c0_54 = arith.constant 0 : index
    %67 = vector.load %arg6[%c0_52, %c0_53, %c0_54] : memref<3x64x64xf32, #tpu.memory_space<vmem>>, vector<1x64x64xf32>
    %68 = vector.shape_cast %67 : vector<1x64x64xf32> to vector<64x64xf32>
    %cst_55 = arith.constant dense<0.000000e+00> : vector<16x64xf32>
    %69 = tpu.matmul %25, %68, %cst_55 {dimension_numbers = #tpu.dot_dimension_numbers<[1], [0], [0], [1], [0, 0, 1, 1], [], []>} : vector<16x64xf32>, vector<64x64xf32>, vector<16x64xf32> -> vector<16x64xf32>
    %c0_56 = arith.constant 0 : index
    %c0_57 = arith.constant 0 : index
    %c0_58 = arith.constant 0 : index
    %70 = vector.load %arg7[%c0_56, %c0_57, %c0_58] : memref<3x1x64xf32, #tpu.memory_space<vmem>>, vector<1x1x64xf32>
    %71 = vector.shape_cast %70 : vector<1x1x64xf32> to vector<1x64xf32>
    %72 = vector.broadcast %71 : vector<1x64xf32> to vector<16x64xf32>
    %73 = arith.addf %69, %72 : vector<16x64xf32>
    %cst_59 = arith.constant 0.000000e+00 : f32
    %74 = vector.broadcast %cst_59 : f32 to vector<16x64xf32>
    %75 = arith.maximumf %73, %74 : vector<16x64xf32>
    %c0_60 = arith.constant 0 : index
    %c0_61 = arith.constant 0 : index
    %c0_62 = arith.constant 0 : index
    %76 = vector.load %arg8[%c0_60, %c0_61, %c0_62] : memref<3x64x64xf32, #tpu.memory_space<vmem>>, vector<1x64x64xf32>
    %77 = vector.shape_cast %76 : vector<1x64x64xf32> to vector<64x64xf32>
    %cst_63 = arith.constant dense<0.000000e+00> : vector<16x64xf32>
    %78 = tpu.matmul %75, %77, %cst_63 {dimension_numbers = #tpu.dot_dimension_numbers<[1], [0], [0], [1], [0, 0, 1, 1], [], []>} : vector<16x64xf32>, vector<64x64xf32>, vector<16x64xf32> -> vector<16x64xf32>
    %c0_64 = arith.constant 0 : index
    %c0_65 = arith.constant 0 : index
    %c0_66 = arith.constant 0 : index
    %79 = vector.load %arg9[%c0_64, %c0_65, %c0_66] : memref<3x1x64xf32, #tpu.memory_space<vmem>>, vector<1x1x64xf32>
    %80 = vector.shape_cast %79 : vector<1x1x64xf32> to vector<1x64xf32>
    %81 = vector.broadcast %80 : vector<1x64xf32> to vector<16x64xf32>
    %82 = arith.addf %78, %81 : vector<16x64xf32>
    %c0_67 = arith.constant 0 : index
    %c0_68 = arith.constant 0 : index
    %c0_69 = arith.constant 0 : index
    %83 = vector.load %arg14[%c0_67, %c0_68, %c0_69] : memref<3x64x64xf32, #tpu.memory_space<vmem>>, vector<1x64x64xf32>
    %84 = vector.shape_cast %83 : vector<1x64x64xf32> to vector<64x64xf32>
    %cst_70 = arith.constant dense<0.000000e+00> : vector<16x64xf32>
    %85 = tpu.matmul %82, %84, %cst_70 {dimension_numbers = #tpu.dot_dimension_numbers<[1], [0], [0], [1], [0, 0, 1, 1], [], []>} : vector<16x64xf32>, vector<64x64xf32>, vector<16x64xf32> -> vector<16x64xf32>
    %cst_71 = arith.constant dense<0.000000e+00> : vector<32x64xf32>
    %86 = tpu.matmul %6, %85, %cst_71 {dimension_numbers = #tpu.dot_dimension_numbers<[1], [0], [0], [1], [0, 0, 1, 1], [], []>} : vector<32x16xf32>, vector<16x64xf32>, vector<32x64xf32> -> vector<32x64xf32>
    %87 = arith.addf %86, %44 : vector<32x64xf32>
    %c0_72 = arith.constant 0 : index
    %c0_73 = arith.constant 0 : index
    %c0_74 = arith.constant 0 : index
    %88 = vector.load %arg16[%c0_72, %c0_73, %c0_74] : memref<3x1x64xf32, #tpu.memory_space<vmem>>, vector<1x1x64xf32>
    %89 = vector.shape_cast %88 : vector<1x1x64xf32> to vector<1x64xf32>
    %90 = vector.broadcast %89 : vector<1x64xf32> to vector<32x64xf32>
    %91 = arith.addf %87, %90 : vector<32x64xf32>
    %cst_75 = arith.constant 0.000000e+00 : f32
    %92 = vector.broadcast %cst_75 : f32 to vector<32x64xf32>
    %93 = arith.maximumf %91, %92 : vector<32x64xf32>
    %cst_76 = arith.constant dense<0.000000e+00> : vector<16x64xf32>
    %94 = tpu.matmul %11, %93, %cst_76 {dimension_numbers = #tpu.dot_dimension_numbers<[1], [0], [0], [1], [0, 0, 1, 1], [], []>} : vector<16x32xf32>, vector<32x64xf32>, vector<16x64xf32> -> vector<16x64xf32>
    %c0_77 = arith.constant 0 : index
    %c0_78 = arith.constant 0 : index
    %c0_79 = arith.constant 0 : index
    %95 = vector.load %arg17[%c0_77, %c0_78, %c0_79] : memref<3x64x64xf32, #tpu.memory_space<vmem>>, vector<1x64x64xf32>
    %96 = vector.shape_cast %95 : vector<1x64x64xf32> to vector<64x64xf32>
    %cst_80 = arith.constant dense<0.000000e+00> : vector<16x64xf32>
    %97 = tpu.matmul %94, %96, %cst_80 {dimension_numbers = #tpu.dot_dimension_numbers<[1], [0], [0], [1], [0, 0, 1, 1], [], []>} : vector<16x64xf32>, vector<64x64xf32>, vector<16x64xf32> -> vector<16x64xf32>
    %98 = vector.broadcast %17 : vector<16x1xf32> to vector<16x64xf32>
    %99 = arith.mulf %97, %98 : vector<16x64xf32>
    %c0_81 = arith.constant 0 : index
    %c0_82 = arith.constant 0 : index
    %c0_83 = arith.constant 0 : index
    %100 = vector.load %arg18[%c0_81, %c0_82, %c0_83] : memref<3x1x64xf32, #tpu.memory_space<vmem>>, vector<1x1x64xf32>
    %101 = vector.shape_cast %100 : vector<1x1x64xf32> to vector<1x64xf32>
    %102 = vector.broadcast %19 : vector<16x1xf32> to vector<16x64xf32>
    %103 = vector.broadcast %101 : vector<1x64xf32> to vector<16x64xf32>
    %104 = arith.mulf %102, %103 : vector<16x64xf32>
    %105 = arith.addf %99, %104 : vector<16x64xf32>
    %106 = arith.addf %105, %82 : vector<16x64xf32>
    %c0_84 = arith.constant 0 : index
    %c0_85 = arith.constant 0 : index
    %c0_86 = arith.constant 0 : index
    %107 = vector.load %arg19[%c0_84, %c0_85, %c0_86] : memref<3x1x64xf32, #tpu.memory_space<vmem>>, vector<1x1x64xf32>
    %108 = vector.shape_cast %107 : vector<1x1x64xf32> to vector<1x64xf32>
    %109 = vector.broadcast %108 : vector<1x64xf32> to vector<16x64xf32>
    %110 = arith.mulf %106, %109 : vector<16x64xf32>
    %c0_87 = arith.constant 0 : index
    %c0_88 = arith.constant 0 : index
    %c0_89 = arith.constant 0 : index
    %111 = vector.load %arg20[%c0_87, %c0_88, %c0_89] : memref<3x1x64xf32, #tpu.memory_space<vmem>>, vector<1x1x64xf32>
    %112 = vector.shape_cast %111 : vector<1x1x64xf32> to vector<1x64xf32>
    %113 = vector.broadcast %112 : vector<1x64xf32> to vector<16x64xf32>
    %114 = arith.addf %110, %113 : vector<16x64xf32>
    %cst_90 = arith.constant 0.000000e+00 : f32
    %115 = vector.broadcast %cst_90 : f32 to vector<16x64xf32>
    %116 = arith.maximumf %114, %115 : vector<16x64xf32>
    %117 = arith.addf %25, %116 : vector<16x64xf32>
    %c1_91 = arith.constant 1 : index
    %c0_92 = arith.constant 0 : index
    %c0_93 = arith.constant 0 : index
    %118 = vector.load %arg6[%c1_91, %c0_92, %c0_93] : memref<3x64x64xf32, #tpu.memory_space<vmem>>, vector<1x64x64xf32>
    %119 = vector.shape_cast %118 : vector<1x64x64xf32> to vector<64x64xf32>
    %cst_94 = arith.constant dense<0.000000e+00> : vector<16x64xf32>
    %120 = tpu.matmul %117, %119, %cst_94 {dimension_numbers = #tpu.dot_dimension_numbers<[1], [0], [0], [1], [0, 0, 1, 1], [], []>} : vector<16x64xf32>, vector<64x64xf32>, vector<16x64xf32> -> vector<16x64xf32>
    %c1_95 = arith.constant 1 : index
    %c0_96 = arith.constant 0 : index
    %c0_97 = arith.constant 0 : index
    %121 = vector.load %arg7[%c1_95, %c0_96, %c0_97] : memref<3x1x64xf32, #tpu.memory_space<vmem>>, vector<1x1x64xf32>
    %122 = vector.shape_cast %121 : vector<1x1x64xf32> to vector<1x64xf32>
    %123 = vector.broadcast %122 : vector<1x64xf32> to vector<16x64xf32>
    %124 = arith.addf %120, %123 : vector<16x64xf32>
    %cst_98 = arith.constant 0.000000e+00 : f32
    %125 = vector.broadcast %cst_98 : f32 to vector<16x64xf32>
    %126 = arith.maximumf %124, %125 : vector<16x64xf32>
    %c1_99 = arith.constant 1 : index
    %c0_100 = arith.constant 0 : index
    %c0_101 = arith.constant 0 : index
    %127 = vector.load %arg8[%c1_99, %c0_100, %c0_101] : memref<3x64x64xf32, #tpu.memory_space<vmem>>, vector<1x64x64xf32>
    %128 = vector.shape_cast %127 : vector<1x64x64xf32> to vector<64x64xf32>
    %cst_102 = arith.constant dense<0.000000e+00> : vector<16x64xf32>
    %129 = tpu.matmul %126, %128, %cst_102 {dimension_numbers = #tpu.dot_dimension_numbers<[1], [0], [0], [1], [0, 0, 1, 1], [], []>} : vector<16x64xf32>, vector<64x64xf32>, vector<16x64xf32> -> vector<16x64xf32>
    %c1_103 = arith.constant 1 : index
    %c0_104 = arith.constant 0 : index
    %c0_105 = arith.constant 0 : index
    %130 = vector.load %arg9[%c1_103, %c0_104, %c0_105] : memref<3x1x64xf32, #tpu.memory_space<vmem>>, vector<1x1x64xf32>
    %131 = vector.shape_cast %130 : vector<1x1x64xf32> to vector<1x64xf32>
    %132 = vector.broadcast %131 : vector<1x64xf32> to vector<16x64xf32>
    %133 = arith.addf %129, %132 : vector<16x64xf32>
    %c1_106 = arith.constant 1 : index
    %c0_107 = arith.constant 0 : index
    %c0_108 = arith.constant 0 : index
    %134 = vector.load %arg14[%c1_106, %c0_107, %c0_108] : memref<3x64x64xf32, #tpu.memory_space<vmem>>, vector<1x64x64xf32>
    %135 = vector.shape_cast %134 : vector<1x64x64xf32> to vector<64x64xf32>
    %cst_109 = arith.constant dense<0.000000e+00> : vector<16x64xf32>
    %136 = tpu.matmul %133, %135, %cst_109 {dimension_numbers = #tpu.dot_dimension_numbers<[1], [0], [0], [1], [0, 0, 1, 1], [], []>} : vector<16x64xf32>, vector<64x64xf32>, vector<16x64xf32> -> vector<16x64xf32>
    %cst_110 = arith.constant dense<0.000000e+00> : vector<32x64xf32>
    %137 = tpu.matmul %6, %136, %cst_110 {dimension_numbers = #tpu.dot_dimension_numbers<[1], [0], [0], [1], [0, 0, 1, 1], [], []>} : vector<32x16xf32>, vector<16x64xf32>, vector<32x64xf32> -> vector<32x64xf32>
    %138 = arith.addf %137, %55 : vector<32x64xf32>
    %c1_111 = arith.constant 1 : index
    %c0_112 = arith.constant 0 : index
    %c0_113 = arith.constant 0 : index
    %139 = vector.load %arg16[%c1_111, %c0_112, %c0_113] : memref<3x1x64xf32, #tpu.memory_space<vmem>>, vector<1x1x64xf32>
    %140 = vector.shape_cast %139 : vector<1x1x64xf32> to vector<1x64xf32>
    %141 = vector.broadcast %140 : vector<1x64xf32> to vector<32x64xf32>
    %142 = arith.addf %138, %141 : vector<32x64xf32>
    %cst_114 = arith.constant 0.000000e+00 : f32
    %143 = vector.broadcast %cst_114 : f32 to vector<32x64xf32>
    %144 = arith.maximumf %142, %143 : vector<32x64xf32>
    %cst_115 = arith.constant dense<0.000000e+00> : vector<16x64xf32>
    %145 = tpu.matmul %11, %144, %cst_115 {dimension_numbers = #tpu.dot_dimension_numbers<[1], [0], [0], [1], [0, 0, 1, 1], [], []>} : vector<16x32xf32>, vector<32x64xf32>, vector<16x64xf32> -> vector<16x64xf32>
    %c1_116 = arith.constant 1 : index
    %c0_117 = arith.constant 0 : index
    %c0_118 = arith.constant 0 : index
    %146 = vector.load %arg17[%c1_116, %c0_117, %c0_118] : memref<3x64x64xf32, #tpu.memory_space<vmem>>, vector<1x64x64xf32>
    %147 = vector.shape_cast %146 : vector<1x64x64xf32> to vector<64x64xf32>
    %cst_119 = arith.constant dense<0.000000e+00> : vector<16x64xf32>
    %148 = tpu.matmul %145, %147, %cst_119 {dimension_numbers = #tpu.dot_dimension_numbers<[1], [0], [0], [1], [0, 0, 1, 1], [], []>} : vector<16x64xf32>, vector<64x64xf32>, vector<16x64xf32> -> vector<16x64xf32>
    %149 = vector.broadcast %17 : vector<16x1xf32> to vector<16x64xf32>
    %150 = arith.mulf %148, %149 : vector<16x64xf32>
    %c1_120 = arith.constant 1 : index
    %c0_121 = arith.constant 0 : index
    %c0_122 = arith.constant 0 : index
    %151 = vector.load %arg18[%c1_120, %c0_121, %c0_122] : memref<3x1x64xf32, #tpu.memory_space<vmem>>, vector<1x1x64xf32>
    %152 = vector.shape_cast %151 : vector<1x1x64xf32> to vector<1x64xf32>
    %153 = vector.broadcast %19 : vector<16x1xf32> to vector<16x64xf32>
    %154 = vector.broadcast %152 : vector<1x64xf32> to vector<16x64xf32>
    %155 = arith.mulf %153, %154 : vector<16x64xf32>
    %156 = arith.addf %150, %155 : vector<16x64xf32>
    %157 = arith.addf %156, %133 : vector<16x64xf32>
    %c1_123 = arith.constant 1 : index
    %c0_124 = arith.constant 0 : index
    %c0_125 = arith.constant 0 : index
    %158 = vector.load %arg19[%c1_123, %c0_124, %c0_125] : memref<3x1x64xf32, #tpu.memory_space<vmem>>, vector<1x1x64xf32>
    %159 = vector.shape_cast %158 : vector<1x1x64xf32> to vector<1x64xf32>
    %160 = vector.broadcast %159 : vector<1x64xf32> to vector<16x64xf32>
    %161 = arith.mulf %157, %160 : vector<16x64xf32>
    %c1_126 = arith.constant 1 : index
    %c0_127 = arith.constant 0 : index
    %c0_128 = arith.constant 0 : index
    %162 = vector.load %arg20[%c1_126, %c0_127, %c0_128] : memref<3x1x64xf32, #tpu.memory_space<vmem>>, vector<1x1x64xf32>
    %163 = vector.shape_cast %162 : vector<1x1x64xf32> to vector<1x64xf32>
    %164 = vector.broadcast %163 : vector<1x64xf32> to vector<16x64xf32>
    %165 = arith.addf %161, %164 : vector<16x64xf32>
    %cst_129 = arith.constant 0.000000e+00 : f32
    %166 = vector.broadcast %cst_129 : f32 to vector<16x64xf32>
    %167 = arith.maximumf %165, %166 : vector<16x64xf32>
    %168 = arith.addf %117, %167 : vector<16x64xf32>
    %c2_130 = arith.constant 2 : index
    %c0_131 = arith.constant 0 : index
    %c0_132 = arith.constant 0 : index
    %169 = vector.load %arg6[%c2_130, %c0_131, %c0_132] : memref<3x64x64xf32, #tpu.memory_space<vmem>>, vector<1x64x64xf32>
    %170 = vector.shape_cast %169 : vector<1x64x64xf32> to vector<64x64xf32>
    %cst_133 = arith.constant dense<0.000000e+00> : vector<16x64xf32>
    %171 = tpu.matmul %168, %170, %cst_133 {dimension_numbers = #tpu.dot_dimension_numbers<[1], [0], [0], [1], [0, 0, 1, 1], [], []>} : vector<16x64xf32>, vector<64x64xf32>, vector<16x64xf32> -> vector<16x64xf32>
    %c2_134 = arith.constant 2 : index
    %c0_135 = arith.constant 0 : index
    %c0_136 = arith.constant 0 : index
    %172 = vector.load %arg7[%c2_134, %c0_135, %c0_136] : memref<3x1x64xf32, #tpu.memory_space<vmem>>, vector<1x1x64xf32>
    %173 = vector.shape_cast %172 : vector<1x1x64xf32> to vector<1x64xf32>
    %174 = vector.broadcast %173 : vector<1x64xf32> to vector<16x64xf32>
    %175 = arith.addf %171, %174 : vector<16x64xf32>
    %cst_137 = arith.constant 0.000000e+00 : f32
    %176 = vector.broadcast %cst_137 : f32 to vector<16x64xf32>
    %177 = arith.maximumf %175, %176 : vector<16x64xf32>
    %c2_138 = arith.constant 2 : index
    %c0_139 = arith.constant 0 : index
    %c0_140 = arith.constant 0 : index
    %178 = vector.load %arg8[%c2_138, %c0_139, %c0_140] : memref<3x64x64xf32, #tpu.memory_space<vmem>>, vector<1x64x64xf32>
    %179 = vector.shape_cast %178 : vector<1x64x64xf32> to vector<64x64xf32>
    %cst_141 = arith.constant dense<0.000000e+00> : vector<16x64xf32>
    %180 = tpu.matmul %177, %179, %cst_141 {dimension_numbers = #tpu.dot_dimension_numbers<[1], [0], [0], [1], [0, 0, 1, 1], [], []>} : vector<16x64xf32>, vector<64x64xf32>, vector<16x64xf32> -> vector<16x64xf32>
    %c2_142 = arith.constant 2 : index
    %c0_143 = arith.constant 0 : index
    %c0_144 = arith.constant 0 : index
    %181 = vector.load %arg9[%c2_142, %c0_143, %c0_144] : memref<3x1x64xf32, #tpu.memory_space<vmem>>, vector<1x1x64xf32>
    %182 = vector.shape_cast %181 : vector<1x1x64xf32> to vector<1x64xf32>
    %183 = vector.broadcast %182 : vector<1x64xf32> to vector<16x64xf32>
    %184 = arith.addf %180, %183 : vector<16x64xf32>
    %c2_145 = arith.constant 2 : index
    %c0_146 = arith.constant 0 : index
    %c0_147 = arith.constant 0 : index
    %185 = vector.load %arg14[%c2_145, %c0_146, %c0_147] : memref<3x64x64xf32, #tpu.memory_space<vmem>>, vector<1x64x64xf32>
    %186 = vector.shape_cast %185 : vector<1x64x64xf32> to vector<64x64xf32>
    %cst_148 = arith.constant dense<0.000000e+00> : vector<16x64xf32>
    %187 = tpu.matmul %184, %186, %cst_148 {dimension_numbers = #tpu.dot_dimension_numbers<[1], [0], [0], [1], [0, 0, 1, 1], [], []>} : vector<16x64xf32>, vector<64x64xf32>, vector<16x64xf32> -> vector<16x64xf32>
    %cst_149 = arith.constant dense<0.000000e+00> : vector<32x64xf32>
    %188 = tpu.matmul %6, %187, %cst_149 {dimension_numbers = #tpu.dot_dimension_numbers<[1], [0], [0], [1], [0, 0, 1, 1], [], []>} : vector<32x16xf32>, vector<16x64xf32>, vector<32x64xf32> -> vector<32x64xf32>
    %189 = arith.addf %188, %66 : vector<32x64xf32>
    %c2_150 = arith.constant 2 : index
    %c0_151 = arith.constant 0 : index
    %c0_152 = arith.constant 0 : index
    %190 = vector.load %arg16[%c2_150, %c0_151, %c0_152] : memref<3x1x64xf32, #tpu.memory_space<vmem>>, vector<1x1x64xf32>
    %191 = vector.shape_cast %190 : vector<1x1x64xf32> to vector<1x64xf32>
    %192 = vector.broadcast %191 : vector<1x64xf32> to vector<32x64xf32>
    %193 = arith.addf %189, %192 : vector<32x64xf32>
    %cst_153 = arith.constant 0.000000e+00 : f32
    %194 = vector.broadcast %cst_153 : f32 to vector<32x64xf32>
    %195 = arith.maximumf %193, %194 : vector<32x64xf32>
    %cst_154 = arith.constant dense<0.000000e+00> : vector<16x64xf32>
    %196 = tpu.matmul %11, %195, %cst_154 {dimension_numbers = #tpu.dot_dimension_numbers<[1], [0], [0], [1], [0, 0, 1, 1], [], []>} : vector<16x32xf32>, vector<32x64xf32>, vector<16x64xf32> -> vector<16x64xf32>
    %c2_155 = arith.constant 2 : index
    %c0_156 = arith.constant 0 : index
    %c0_157 = arith.constant 0 : index
    %197 = vector.load %arg17[%c2_155, %c0_156, %c0_157] : memref<3x64x64xf32, #tpu.memory_space<vmem>>, vector<1x64x64xf32>
    %198 = vector.shape_cast %197 : vector<1x64x64xf32> to vector<64x64xf32>
    %cst_158 = arith.constant dense<0.000000e+00> : vector<16x64xf32>
    %199 = tpu.matmul %196, %198, %cst_158 {dimension_numbers = #tpu.dot_dimension_numbers<[1], [0], [0], [1], [0, 0, 1, 1], [], []>} : vector<16x64xf32>, vector<64x64xf32>, vector<16x64xf32> -> vector<16x64xf32>
    %200 = vector.broadcast %17 : vector<16x1xf32> to vector<16x64xf32>
    %201 = arith.mulf %199, %200 : vector<16x64xf32>
    %c2_159 = arith.constant 2 : index
    %c0_160 = arith.constant 0 : index
    %c0_161 = arith.constant 0 : index
    %202 = vector.load %arg18[%c2_159, %c0_160, %c0_161] : memref<3x1x64xf32, #tpu.memory_space<vmem>>, vector<1x1x64xf32>
    %203 = vector.shape_cast %202 : vector<1x1x64xf32> to vector<1x64xf32>
    %204 = vector.broadcast %19 : vector<16x1xf32> to vector<16x64xf32>
    %205 = vector.broadcast %203 : vector<1x64xf32> to vector<16x64xf32>
    %206 = arith.mulf %204, %205 : vector<16x64xf32>
    %207 = arith.addf %201, %206 : vector<16x64xf32>
    %208 = arith.addf %207, %184 : vector<16x64xf32>
    %c2_162 = arith.constant 2 : index
    %c0_163 = arith.constant 0 : index
    %c0_164 = arith.constant 0 : index
    %209 = vector.load %arg19[%c2_162, %c0_163, %c0_164] : memref<3x1x64xf32, #tpu.memory_space<vmem>>, vector<1x1x64xf32>
    %210 = vector.shape_cast %209 : vector<1x1x64xf32> to vector<1x64xf32>
    %211 = vector.broadcast %210 : vector<1x64xf32> to vector<16x64xf32>
    %212 = arith.mulf %208, %211 : vector<16x64xf32>
    %c2_165 = arith.constant 2 : index
    %c0_166 = arith.constant 0 : index
    %c0_167 = arith.constant 0 : index
    %213 = vector.load %arg20[%c2_165, %c0_166, %c0_167] : memref<3x1x64xf32, #tpu.memory_space<vmem>>, vector<1x1x64xf32>
    %214 = vector.shape_cast %213 : vector<1x1x64xf32> to vector<1x64xf32>
    %215 = vector.broadcast %214 : vector<1x64xf32> to vector<16x64xf32>
    %216 = arith.addf %212, %215 : vector<16x64xf32>
    %cst_168 = arith.constant 0.000000e+00 : f32
    %217 = vector.broadcast %cst_168 : f32 to vector<16x64xf32>
    %218 = arith.maximumf %216, %217 : vector<16x64xf32>
    %219 = arith.addf %168, %218 : vector<16x64xf32>
    %c0_169 = arith.constant 0 : index
    %c0_170 = arith.constant 0 : index
    %220 = vector.load %arg21[%c0_169, %c0_170] : memref<64x32xf32, #tpu.memory_space<vmem>>, vector<64x32xf32>
    %cst_171 = arith.constant dense<0.000000e+00> : vector<16x32xf32>
    %221 = tpu.matmul %219, %220, %cst_171 {dimension_numbers = #tpu.dot_dimension_numbers<[1], [0], [0], [1], [0, 0, 1, 1], [], []>} : vector<16x64xf32>, vector<64x32xf32>, vector<16x32xf32> -> vector<16x32xf32>
    %c0_172 = arith.constant 0 : index
    %c0_173 = arith.constant 0 : index
    %222 = vector.load %arg22[%c0_172, %c0_173] : memref<1x32xf32, #tpu.memory_space<vmem>>, vector<1x32xf32>
    %223 = vector.broadcast %222 : vector<1x32xf32> to vector<16x32xf32>
    %224 = arith.addf %221, %223 : vector<16x32xf32>
    %c0_174 = arith.constant 0 : index
    %c0_175 = arith.constant 0 : index
    %225 = vector.load %arg23[%c0_174, %c0_175] : memref<16x32xf32, #tpu.memory_space<vmem>>, vector<16x32xf32>
    tpu.vector_store %arg23[%c0_174, %c0_175], %224 {strides = array<i32>} : memref<16x32xf32, #tpu.memory_space<vmem>>, vector<16x32xf32>,
    return
  }
}

</mosaic_0001>

<llo_original>
// kernel: spatial_graph_network_forward.1
$region0: #{spatial_graph_network_forward.1}
  #allocation0 [shape = 'u32[]', space=smem, size = 0x4, offset = 0x4, fixed_abs, tag = 'smem constant byte address 0x4 - core index']
  #allocation1 [shape = 'u32[144,128]{1,0:T(1,128)}', space=vmem, size = 0x12000, scoped, tag = 'internal scratch']
  %s0 = inlined_call_operand.vmem [shape: f32[16,8], index: 0, kind: input, shape index: {}]
  %s1 = inlined_call_operand.vmem [shape: f32[32,3], index: 1, kind: input, shape index: {}]
  %s2 = inlined_call_operand.vmem [shape: s32[32,1], index: 2, kind: input, shape index: {}]
  %s3 = inlined_call_operand.vmem [shape: s32[1,32], index: 3, kind: input, shape index: {}]
  %s4 = inlined_call_operand.vmem [shape: f32[8,64], index: 4, kind: input, shape index: {}]
  %s5 = inlined_call_operand.hbm [shape: f32[1,64], index: 5, kind: input, shape index: {}]
  %s6 = inlined_call_operand.vmem [shape: f32[3,64,64], index: 6, kind: input, shape index: {}]
  %s7 = inlined_call_operand.vmem [shape: f32[3,1,64], index: 7, kind: input, shape index: {}]
  %s8 = inlined_call_operand.hbm [shape: f32[3,64,64], index: 8, kind: input, shape index: {}]
  %s9 = inlined_call_operand.vmem [shape: f32[3,1,64], index: 9, kind: input, shape index: {}]
  %s10 = inlined_call_operand.vmem [shape: f32[3,192], index: 10, kind: input, shape index: {}]
  %s11 = inlined_call_operand.hbm [shape: f32[1,192], index: 11, kind: input, shape index: {}]
  %s12 = inlined_call_operand.hbm [shape: f32[3,64,64], index: 12, kind: input, shape index: {}]
  %s13 = inlined_call_operand.vmem [shape: f32[3,1,64], index: 13, kind: input, shape index: {}]
  %s14 = inlined_call_operand.hbm [shape: f32[3,64,64], index: 14, kind: input, shape index: {}]
  %s15 = inlined_call_operand.hbm [shape: f32[3,64,64], index: 15, kind: input, shape index: {}]
  %s16 = inlined_call_operand.hbm [shape: f32[3,1,64], index: 16, kind: input, shape index: {}]
  %s17 = inlined_call_operand.hbm [shape: f32[3,64,64], index: 17, kind: input, shape index: {}]
  %s18 = inlined_call_operand.hbm [shape: f32[3,1,64], index: 18, kind: input, shape index: {}]
  %s19 = inlined_call_operand.hbm [shape: f32[3,1,64], index: 19, kind: input, shape index: {}]
  %s20 = inlined_call_operand.hbm [shape: f32[3,1,64], index: 20, kind: input, shape index: {}]
  %s21 = inlined_call_operand.vmem [shape: f32[64,32], index: 21, kind: input, shape index: {}]
  %s22 = inlined_call_operand.vmem [shape: f32[1,32], index: 22, kind: input, shape index: {}]
  %s23 = inlined_call_operand.hbm [shape: f32[16,32], index: 23, kind: output, shape index: {}]
  %s24 = sld [smem:[#allocation0]]
  $region146: #{spatial_graph_network_forward.1} parent=0
    _
  %s26 = ssub.s32 1, %s24
  %s27 = scalar_select 0, %s26, %s24
  $region1: #{spatial_graph_network_forward.1} parent=0
    #allocation2 [shape = 'u8[512]{0}', space=vmem, size = 0x400, scoped, tag = 'input window, operand 5, single buffered']
    #allocation3 [shape = 's32[1]{0}', space=sflag, size = 0x4, scoped, tag = 'scoped memory for spatial_graph_network_forward.1']
    #allocation4 [shape = 's32[1]{0}', space=sflag, size = 0x4, scoped, tag = 'scoped memory for spatial_graph_network_forward.1']
    #allocation5 [shape = 'u8[98304]{0}', space=vmem, size = 0x18000, scoped, tag = 'input window, operand 8, single buffered']
    #allocation6 [shape = 's32[1]{0}', space=sflag, size = 0x4, scoped, tag = 'scoped memory for spatial_graph_network_forward.1']
    #allocation7 [shape = 'u8[1024]{0}', space=vmem, size = 0x400, scoped, tag = 'input window, operand 11, single buffered']
    #allocation8 [shape = 'u8[98304]{0}', space=vmem, size = 0x18000, scoped, tag = 'input window, operand 12, single buffered']
    #allocation9 [shape = 's32[1]{0}', space=sflag, size = 0x4, scoped, tag = 'scoped memory for spatial_graph_network_forward.1']
    #allocation10 [shape = 'u8[98304]{0}', space=vmem, size = 0x18000, scoped, tag = 'input window, operand 14, single buffered']
    #allocation11 [shape = 'u8[98304]{0}', space=vmem, size = 0x18000, scoped, tag = 'input window, operand 15, single buffered']
    #allocation12 [shape = 's32[1]{0}', space=sflag, size = 0x4, scoped, tag = 'scoped memory for spatial_graph_network_forward.1']
    #allocation13 [shape = 'u8[1536]{0}', space=vmem, size = 0x800, scoped, tag = 'input window, operand 16, single buffered']
    #allocation14 [shape = 'u8[98304]{0}', space=vmem, size = 0x18000, scoped, tag = 'input window, operand 17, single buffered']
    #allocation15 [shape = 's32[1]{0}', space=sflag, size = 0x4, scoped, tag = 'scoped memory for spatial_graph_network_forward.1']
    #allocation16 [shape = 'u8[1536]{0}', space=vmem, size = 0x800, scoped, tag = 'input window, operand 18, single buffered']
    #allocation17 [shape = 'u8[1536]{0}', space=vmem, size = 0x800, scoped, tag = 'input window, operand 19, single buffered']
    #allocation18 [shape = 's32[1]{0}', space=sflag, size = 0x4, scoped, tag = 'scoped memory for spatial_graph_network_forward.1']
    #allocation19 [shape = 'u8[1536]{0}', space=vmem, size = 0x800, scoped, tag = 'input window, operand 20, single buffered']
    #allocation20 [shape = 'u8[8192]{0}', space=vmem, size = 0x2000, scoped, tag = 'output window, operand 0, single buffered']
    %28 = vsyncpa [#allocation3], 0
    %29 = vsyncpa [#allocation6], 0
    %30 = vsyncpa [#allocation9], 0
    %31 = vsyncpa [#allocation12], 0
    %32 = vsyncpa [#allocation15], 0
    %33 = vsyncpa [#allocation18], 0
    %34 = vsyncpa [#allocation4], 0
    // Predicated region
    $region2: #{spatial_graph_network_forward.1} parent=1 // pred_check
      _
    $region3: #{spatial_graph_network_forward.1} parent=1 // pred_check_branch
      %36 = sbr.rel (0) target = $region5
    $region4: #{spatial_graph_network_forward.1} parent=1 // pred_region
      _
    $region5: #{spatial_graph_network_forward.1} parent=1 // pred_fallthru
      _
    // Predicated region
    $region6: #{spatial_graph_network_forward.1} parent=1 // pred_check
      _
    $region7: #{spatial_graph_network_forward.1} parent=1 // pred_check_branch
      %38 = sbr.rel (0) target = $region9
    $region8: #{spatial_graph_network_forward.1} parent=1 // pred_region
      _
    $region9: #{spatial_graph_network_forward.1} parent=1 // pred_fallthru
      _
    // Predicated region
    $region10: #{spatial_graph_network_forward.1} parent=1 // pred_check
      _
    $region11: #{spatial_graph_network_forward.1} parent=1 // pred_check_branch
      %40 = sbr.rel (0) target = $region13
    $region12: #{spatial_graph_network_forward.1} parent=1 // pred_region
      _
    $region13: #{spatial_graph_network_forward.1} parent=1 // pred_fallthru
      _
    // Predicated region
    $region14: #{spatial_graph_network_forward.1} parent=1 // pred_check
      _
    $region15: #{spatial_graph_network_forward.1} parent=1 // pred_check_branch
      %42 = sbr.rel (0) target = $region17
    $region16: #{spatial_graph_network_forward.1} parent=1 // pred_region
      _
    $region17: #{spatial_graph_network_forward.1} parent=1 // pred_fallthru
      _
    // Predicated region
    $region18: #{spatial_graph_network_forward.1} parent=1 // pred_check
      _
    $region19: #{spatial_graph_network_forward.1} parent=1 // pred_check_branch
      %44 = sbr.rel (0) target = $region21
    $region20: #{spatial_graph_network_forward.1} parent=1 // pred_region
      _
    $region21: #{spatial_graph_network_forward.1} parent=1 // pred_fallthru
      _
    // Predicated region
    $region22: #{spatial_graph_network_forward.1} parent=1 // pred_check
      _
    $region23: #{spatial_graph_network_forward.1} parent=1 // pred_check_branch
      %46 = sbr.rel (0) target = $region25
    $region24: #{spatial_graph_network_forward.1} parent=1 // pred_region
      %s48 = ssub.s32 16, 16
      %49 = vsyncadd [#allocation3], %s48
      %s51 = sshll.u32 [#allocation2], 4
      %s52 = int_to_ptr.vmem [resolvable:$true] %s51
      %54 = dma.hbm_to_vmem [thread:$0]  %s5, 16, %s52, [#allocation3]
    $region25: #{spatial_graph_network_forward.1} parent=1 // pred_fallthru
      _
    // Predicated region
    $region26: #{spatial_graph_network_forward.1} parent=1 // pred_check
      _
    $region27: #{spatial_graph_network_forward.1} parent=1 // pred_check_branch
      %56 = sbr.rel (0) target = $region29
    $region28: #{spatial_graph_network_forward.1} parent=1 // pred_region
      _
    $region29: #{spatial_graph_network_forward.1} parent=1 // pred_fallthru
      _
    // Predicated region
    $region30: #{spatial_graph_network_forward.1} parent=1 // pred_check
      _
    $region31: #{spatial_graph_network_forward.1} parent=1 // pred_check_branch
      %58 = sbr.rel (0) target = $region33
    $region32: #{spatial_graph_network_forward.1} parent=1 // pred_region
      _
    $region33: #{spatial_graph_network_forward.1} parent=1 // pred_fallthru
      _
    // Predicated region
    $region34: #{spatial_graph_network_forward.1} parent=1 // pred_check
      _
    $region35: #{spatial_graph_network_forward.1} parent=1 // pred_check_branch
      %60 = sbr.rel (0) target = $region37
    $region36: #{spatial_graph_network_forward.1} parent=1 // pred_region
      %s62 = ssub.s32 3072, 3072
      %63 = vsyncadd [#allocation6], %s62
      %s64 = sshll.u32 [#allocation5], 4
      %s65 = int_to_ptr.vmem [resolvable:$true] %s64
      %70 = dma.hbm_to_vmem [thread:$0]  %s8, 3072, %s65, [#allocation6], 128, 128, 8
    $region37: #{spatial_graph_network_forward.1} parent=1 // pred_fallthru
      _
    // Predicated region
    $region38: #{spatial_graph_network_forward.1} parent=1 // pred_check
      _
    $region39: #{spatial_graph_network_forward.1} parent=1 // pred_check_branch
      %72 = sbr.rel (0) target = $region41
    $region40: #{spatial_graph_network_forward.1} parent=1 // pred_region
      _
    $region41: #{spatial_graph_network_forward.1} parent=1 // pred_fallthru
      _
    // Predicated region
    $region42: #{spatial_graph_network_forward.1} parent=1 // pred_check
      _
    $region43: #{spatial_graph_network_forward.1} parent=1 // pred_check_branch
      %74 = sbr.rel (0) target = $region45
    $region44: #{spatial_graph_network_forward.1} parent=1 // pred_region
      _
    $region45: #{spatial_graph_network_forward.1} parent=1 // pred_fallthru
      _
    // Predicated region
    $region46: #{spatial_graph_network_forward.1} parent=1 // pred_check
      _
    $region47: #{spatial_graph_network_forward.1} parent=1 // pred_check_branch
      %76 = sbr.rel (0) target = $region49
    $region48: #{spatial_graph_network_forward.1} parent=1 // pred_region
      %s78 = ssub.s32 32, 32
      %79 = vsyncadd [#allocation6], %s78
      %s81 = sshll.u32 [#allocation7], 4
      %s82 = int_to_ptr.vmem [resolvable:$true] %s81
      %84 = dma.hbm_to_vmem [thread:$0]  %s11, 32, %s82, [#allocation6]
    $region49: #{spatial_graph_network_forward.1} parent=1 // pred_fallthru
      _
    // Predicated region
    $region50: #{spatial_graph_network_forward.1} parent=1 // pred_check
      _
    $region51: #{spatial_graph_network_forward.1} parent=1 // pred_check_branch
      %86 = sbr.rel (0) target = $region53
    $region52: #{spatial_graph_network_forward.1} parent=1 // pred_region
      %s88 = ssub.s32 3072, 3072
      %89 = vsyncadd [#allocation9], %s88
      %s90 = sshll.u32 [#allocation8], 4
      %s91 = int_to_ptr.vmem [resolvable:$true] %s90
      %96 = dma.hbm_to_vmem [thread:$0]  %s12, 3072, %s91, [#allocation9], 128, 128, 8
    $region53: #{spatial_graph_network_forward.1} parent=1 // pred_fallthru
      _
    // Predicated region
    $region54: #{spatial_graph_network_forward.1} parent=1 // pred_check
      _
    $region55: #{spatial_graph_network_forward.1} parent=1 // pred_check_branch
      %98 = sbr.rel (0) target = $region57
    $region56: #{spatial_graph_network_forward.1} parent=1 // pred_region
      _
    $region57: #{spatial_graph_network_forward.1} parent=1 // pred_fallthru
      _
    // Predicated region
    $region58: #{spatial_graph_network_forward.1} parent=1 // pred_check
      _
    $region59: #{spatial_graph_network_forward.1} parent=1 // pred_check_branch
      %100 = sbr.rel (0) target = $region61
    $region60: #{spatial_graph_network_forward.1} parent=1 // pred_region
      %s102 = ssub.s32 3072, 3072
      %103 = vsyncadd [#allocation9], %s102
      %s104 = sshll.u32 [#allocation10], 4
      %s105 = int_to_ptr.vmem [resolvable:$true] %s104
      %110 = dma.hbm_to_vmem [thread:$0]  %s14, 3072, %s105, [#allocation9], 128, 128, 8
    $region61: #{spatial_graph_network_forward.1} parent=1 // pred_fallthru
      _
    // Predicated region
    $region62: #{spatial_graph_network_forward.1} parent=1 // pred_check
      _
    $region63: #{spatial_graph_network_forward.1} parent=1 // pred_check_branch
      %112 = sbr.rel (0) target = $region65
    $region64: #{spatial_graph_network_forward.1} parent=1 // pred_region
      %s114 = ssub.s32 3072, 3072
      %115 = vsyncadd [#allocation12], %s114
      %s116 = sshll.u32 [#allocation11], 4
      %s117 = int_to_ptr.vmem [resolvable:$true] %s116
      %122 = dma.hbm_to_vmem [thread:$0]  %s15, 3072, %s117, [#allocation12], 128, 128, 8
    $region65: #{spatial_graph_network_forward.1} parent=1 // pred_fallthru
      _
    // Predicated region
    $region66: #{spatial_graph_network_forward.1} parent=1 // pred_check
      _
    $region67: #{spatial_graph_network_forward.1} parent=1 // pred_check_branch
      %124 = sbr.rel (0) target = $region69
    $region68: #{spatial_graph_network_forward.1} parent=1 // pred_region
      %s126 = ssub.s32 48, 48
      %127 = vsyncadd [#allocation12], %s126
      %s128 = sshll.u32 [#allocation13], 4
      %s129 = int_to_ptr.vmem [resolvable:$true] %s128
      %134 = dma.hbm_to_vmem [thread:$0]  %s16, 48, %s129, [#allocation12], 16, 16, 1
    $region69: #{spatial_graph_network_forward.1} parent=1 // pred_fallthru
      _
    // Predicated region
    $region70: #{spatial_graph_network_forward.1} parent=1 // pred_check
      _
    $region71: #{spatial_graph_network_forward.1} parent=1 // pred_check_branch
      %136 = sbr.rel (0) target = $region73
    $region72: #{spatial_graph_network_forward.1} parent=1 // pred_region
      %s138 = ssub.s32 3072, 3072
      %139 = vsyncadd [#allocation15], %s138
      %s140 = sshll.u32 [#allocation14], 4
      %s141 = int_to_ptr.vmem [resolvable:$true] %s140
      %146 = dma.hbm_to_vmem [thread:$0]  %s17, 3072, %s141, [#allocation15], 128, 128, 8
    $region73: #{spatial_graph_network_forward.1} parent=1 // pred_fallthru
      _
    // Predicated region
    $region74: #{spatial_graph_network_forward.1} parent=1 // pred_check
      _
    $region75: #{spatial_graph_network_forward.1} parent=1 // pred_check_branch
      %148 = sbr.rel (0) target = $region77
    $region76: #{spatial_graph_network_forward.1} parent=1 // pred_region
      %s150 = ssub.s32 48, 48
      %151 = vsyncadd [#allocation15], %s150
      %s152 = sshll.u32 [#allocation16], 4
      %s153 = int_to_ptr.vmem [resolvable:$true] %s152
      %158 = dma.hbm_to_vmem [thread:$0]  %s18, 48, %s153, [#allocation15], 16, 16, 1
    $region77: #{spatial_graph_network_forward.1} parent=1 // pred_fallthru
      _
    // Predicated region
    $region78: #{spatial_graph_network_forward.1} parent=1 // pred_check
      _
    $region79: #{spatial_graph_network_forward.1} parent=1 // pred_check_branch
      %160 = sbr.rel (0) target = $region81
    $region80: #{spatial_graph_network_forward.1} parent=1 // pred_region
      %s162 = ssub.s32 48, 48
      %163 = vsyncadd [#allocation18], %s162
      %s164 = sshll.u32 [#allocation17], 4
      %s165 = int_to_ptr.vmem [resolvable:$true] %s164
      %170 = dma.hbm_to_vmem [thread:$0]  %s19, 48, %s165, [#allocation18], 16, 16, 1
    $region81: #{spatial_graph_network_forward.1} parent=1 // pred_fallthru
      _
    // Predicated region
    $region82: #{spatial_graph_network_forward.1} parent=1 // pred_check
      _
    $region83: #{spatial_graph_network_forward.1} parent=1 // pred_check_branch
      %172 = sbr.rel (0) target = $region85
    $region84: #{spatial_graph_network_forward.1} parent=1 // pred_region
      %s174 = ssub.s32 48, 48
      %175 = vsyncadd [#allocation18], %s174
      %s176 = sshll.u32 [#allocation19], 4
      %s177 = int_to_ptr.vmem [resolvable:$true] %s176
      %182 = dma.hbm_to_vmem [thread:$0]  %s20, 48, %s177, [#allocation18], 16, 16, 1
    $region85: #{spatial_graph_network_forward.1} parent=1 // pred_fallthru
      _
    // Predicated region
    $region86: #{spatial_graph_network_forward.1} parent=1 // pred_check
      _
    $region87: #{spatial_graph_network_forward.1} parent=1 // pred_check_branch
      %184 = sbr.rel (0) target = $region89
    $region88: #{spatial_graph_network_forward.1} parent=1 // pred_region
      _
    $region89: #{spatial_graph_network_forward.1} parent=1 // pred_fallthru
      _
    // Predicated region
    $region90: #{spatial_graph_network_forward.1} parent=1 // pred_check
      _
    $region91: #{spatial_graph_network_forward.1} parent=1 // pred_check_branch
      %186 = sbr.rel (0) target = $region93
    $region92: #{spatial_graph_network_forward.1} parent=1 // pred_region
      _
    $region93: #{spatial_graph_network_forward.1} parent=1 // pred_fallthru
      _
    // Predicated region
    $region94: #{spatial_graph_network_forward.1} parent=1 // pred_check
      _
    $region95: #{spatial_graph_network_forward.1} parent=1 // pred_check_branch
      %188 = sbr.rel (0) target = $region97
    $region96: #{spatial_graph_network_forward.1} parent=1 // pred_region
      %189 = dma.done [#allocation3], 16
    $region97: #{spatial_graph_network_forward.1} parent=1 // pred_fallthru
      _
    // Predicated region
    $region98: #{spatial_graph_network_forward.1} parent=1 // pred_check
      _
    $region99: #{spatial_graph_network_forward.1} parent=1 // pred_check_branch
      %191 = sbr.rel (0) target = $region101
    $region100: #{spatial_graph_network_forward.1} parent=1 // pred_region
      %192 = dma.done [#allocation6], 3072
    $region101: #{spatial_graph_network_forward.1} parent=1 // pred_fallthru
      _
    // Predicated region
    $region102: #{spatial_graph_network_forward.1} parent=1 // pred_check
      _
    $region103: #{spatial_graph_network_forward.1} parent=1 // pred_check_branch
      %194 = sbr.rel (0) target = $region105
    $region104: #{spatial_graph_network_forward.1} parent=1 // pred_region
      %195 = dma.done [#allocation6], 32
    $region105: #{spatial_graph_network_forward.1} parent=1 // pred_fallthru
      _
    // Predicated region
    $region106: #{spatial_graph_network_forward.1} parent=1 // pred_check
      _
    $region107: #{spatial_graph_network_forward.1} parent=1 // pred_check_branch
      %197 = sbr.rel (0) target = $region109
    $region108: #{spatial_graph_network_forward.1} parent=1 // pred_region
      %198 = dma.done [#allocation9], 3072
    $region109: #{spatial_graph_network_forward.1} parent=1 // pred_fallthru
      _
    // Predicated region
    $region110: #{spatial_graph_network_forward.1} parent=1 // pred_check
      _
    $region111: #{spatial_graph_network_forward.1} parent=1 // pred_check_branch
      %200 = sbr.rel (0) target = $region113
    $region112: #{spatial_graph_network_forward.1} parent=1 // pred_region
      %201 = dma.done [#allocation9], 3072
    $region113: #{spatial_graph_network_forward.1} parent=1 // pred_fallthru
      _
    // Predicated region
    $region114: #{spatial_graph_network_forward.1} parent=1 // pred_check
      _
    $region115: #{spatial_graph_network_forward.1} parent=1 // pred_check_branch
      %203 = sbr.rel (0) target = $region117
    $region116: #{spatial_graph_network_forward.1} parent=1 // pred_region
      %204 = dma.done [#allocation12], 3072
    $region117: #{spatial_graph_network_forward.1} parent=1 // pred_fallthru
      _
    // Predicated region
    $region118: #{spatial_graph_network_forward.1} parent=1 // pred_check
      _
    $region119: #{spatial_graph_network_forward.1} parent=1 // pred_check_branch
      %206 = sbr.rel (0) target = $region121
    $region120: #{spatial_graph_network_forward.1} parent=1 // pred_region
      %207 = dma.done [#allocation12], 48
    $region121: #{spatial_graph_network_forward.1} parent=1 // pred_fallthru
      _
    // Predicated region
    $region122: #{spatial_graph_network_forward.1} parent=1 // pred_check
      _
    $region123: #{spatial_graph_network_forward.1} parent=1 // pred_check_branch
      %209 = sbr.rel (0) target = $region125
    $region124: #{spatial_graph_network_forward.1} parent=1 // pred_region
      %210 = dma.done [#allocation15], 3072
    $region125: #{spatial_graph_network_forward.1} parent=1 // pred_fallthru
      _
    // Predicated region
    $region126: #{spatial_graph_network_forward.1} parent=1 // pred_check
      _
    $region127: #{spatial_graph_network_forward.1} parent=1 // pred_check_branch
      %212 = sbr.rel (0) target = $region129
    $region128: #{spatial_graph_network_forward.1} parent=1 // pred_region
      %213 = dma.done [#allocation15], 48
    $region129: #{spatial_graph_network_forward.1} parent=1 // pred_fallthru
      _
    // Predicated region
    $region130: #{spatial_graph_network_forward.1} parent=1 // pred_check
      _
    $region131: #{spatial_graph_network_forward.1} parent=1 // pred_check_branch
      %215 = sbr.rel (0) target = $region133
    $region132: #{spatial_graph_network_forward.1} parent=1 // pred_region
      %216 = dma.done [#allocation18], 48
    $region133: #{spatial_graph_network_forward.1} parent=1 // pred_fallthru
      _
    // Predicated region
    $region134: #{spatial_graph_network_forward.1} parent=1 // pred_check
      _
    $region135: #{spatial_graph_network_forward.1} parent=1 // pred_check_branch
      %218 = sbr.rel (0) target = $region137
    $region136: #{spatial_graph_network_forward.1} parent=1 // pred_region
      %219 = dma.done [#allocation18], 48
    $region137: #{spatial_graph_network_forward.1} parent=1 // pred_fallthru
      _
    %v220 = vld [vmem:[%s2] sm:$0xff]
    %v221 = vld [vmem:[%s2 + $0x8] sm:$0xff]
    %v222 = vld [vmem:[%s2 + $0x10] sm:$0xff]
    %v223 = vld [vmem:[%s2 + $0x18] sm:$0xff]
    %v224 = vld [vmem:[%s3] sm:$0x1]
    %v225 = vlaneseq
    %v226 = vand.u32 %v225, 127
    %227 = vset.pattern.permute.xlu0 0
    %228 = vperm.xlu0 %227, %v220
    %v229 = vpop.permute.xlu0 %228
    %230 = vset.pattern.permute.xlu0 0
    %231 = vperm.xlu0 %230, %v221
    %v232 = vpop.permute.xlu0 %231
    %233 = vset.pattern.permute.xlu0 0
    %234 = vperm.xlu0 %233, %v222
    %v235 = vpop.permute.xlu0 %234
    %236 = vset.pattern.permute.xlu0 0
    %237 = vperm.xlu0 %236, %v223
    %v238 = vpop.permute.xlu0 %237
    %vm239 = vcmp.eq.s32.totalorder %v229, %v226
    %vm240 = vcmp.eq.s32.totalorder %v232, %v226
    %vm241 = vcmp.eq.s32.totalorder %v235, %v226
    %vm242 = vcmp.eq.s32.totalorder %v238, %v226
    %v243 = vsel %vm239, 1, 0
    %v244 = vsel %vm240, 1, 0
    %v245 = vsel %vm241, 1, 0
    %v246 = vsel %vm242, 1, 0
    %v247 = vcvt.s32.f32 %v243
    %v248 = vcvt.s32.f32 %v244
    %v249 = vcvt.s32.f32 %v245
    %v250 = vcvt.s32.f32 %v246
    %v251 = vlaneseq
    %v252 = vshrl.u32 %v251, 7
    %v253 = vadd.s32 %v252, 8
    %v254 = vlaneseq
    %v255 = vshrl.u32 %v254, 7
    %v256 = vsub.s32 0, %v255
    %v257 = vrot.slane %v224, %v256
    %vm258 = vcmp.eq.s32.totalorder %v252, %v257
    %vm259 = vcmp.eq.s32.totalorder %v253, %v257
    %v260 = vsel %vm258, 1, 0
    %v261 = vsel %vm259, 1, 0
    %v262 = vcvt.s32.f32 %v260
    %v263 = vcvt.s32.f32 %v261
    %vm264 = vcmask 261120
    %v265 = vsel %vm264, %v262, 0.0
    %266 = vadd.xlane.f32.xlu0 %v265
    %v267 = vpop.xlane.xlu0 %266
    %v268 = vsel %vm264, %v263, 0.0
    %269 = vadd.xlane.f32.xlu0 %v268
    %v270 = vpop.xlane.xlu0 %269
    %v271 = vmax.f32 %v267, 1.0
    %v272 = vmax.f32 %v270, 1.0
    %v273 = vrcp.pop %v271
    %v274 = vmul.f32 1.0, %v273
    %v275 = vrcp.pop %v272
    %v276 = vmul.f32 1.0, %v275
    %v277 = vmin.f32 %v267, 1.0
    %v278 = vmin.f32 %v270, 1.0
    %v279 = vld [vmem:[%s0] sm:$0xff]
    %v280 = vld [vmem:[%s0 + $0x8] sm:$0xff]
    %v281 = vld [vmem:[%s4] sm:$0xff]
    %v282 = vld [vmem:[#allocation2] sm:$0x1]
    %v284 = vlaneseq
    %v285 = vshrl.u32 %v284, 7
    %v286 = vsub.s32 0, %v285
    %v287 = vrot.slane %v282, %v286
    %vm289 = vcmask 64512
    %v291 = vsel %vm289, %v279, 0
    %v294 = vsel %vm289, %v280, 0
    %296 = vmatprep.subr.mxu0 0.0
    %297 = vmatpush1.msra.mxu0 %v281
    %298 = vmatprep.subr.mxu0 0.0
    %299 = vmatpush1.msra.mxu0 0.0
    %300 = vmatprep.subr.mxu0 0.0
    %301 = vmatpush1.msra.mxu0 0.0
    %302 = vmatprep.subr.mxu0 0.0
    %303 = vmatpush1.msra.mxu0 0.0
    %304 = vmatprep.subr.mxu0 0.0
    %305 = vmatpush1.msra.mxu0 0.0
    %306 = vmatprep.subr.mxu0 0.0
    %307 = vmatpush1.msra.mxu0 0.0
    %308 = vmatprep.subr.mxu0 0.0
    %309 = vmatpush1.msra.mxu0 0.0
    %310 = vmatprep.subr.mxu0 0.0
    %311 = vmatpush1.msra.mxu0 0.0
    %312 = vmatprep.subr.mxu0 0.0
    %313 = vmatpush1.msra.mxu0 0.0
    %314 = vmatprep.subr.mxu0 0.0
    %315 = vmatpush1.msra.mxu0 0.0
    %316 = vmatprep.subr.mxu0 0.0
    %317 = vmatpush1.msra.mxu0 0.0
    %318 = vmatprep.subr.mxu0 0.0
    %319 = vmatpush1.msra.mxu0 0.0
    %320 = vmatprep.subr.mxu0 0.0
    %321 = vmatpush1.msra.mxu0 0.0
    %322 = vmatprep.subr.mxu0 0.0
    %323 = vmatpush1.msra.mxu0 0.0
    %324 = vmatprep.subr.mxu0 0.0
    %325 = vmatpush1.msra.mxu0 0.0
    %326 = vmatprep.subr.mxu0 0.0
    %327 = vmatpush1.msra.mxu0 0.0
    %328 = vmatprep.subr.mxu0 0.0
    %329 = vmatpush1.msra.mxu0 0.0
    %330 = vmatprep.subr.mxu0 0.0
    %331 = vmatpush1.msra.mxu0 0.0
    %332 = vmatprep.subr.mxu0 0.0
    %333 = vmatpush1.msra.mxu0 0.0
    %334 = vmatprep.subr.mxu0 0.0
    %335 = vmatpush1.msra.mxu0 0.0
    %336 = vmatprep.subr.mxu0 0.0
    %337 = vmatpush1.msra.mxu0 0.0
    %338 = vmatprep.subr.mxu0 0.0
    %339 = vmatpush1.msra.mxu0 0.0
    %340 = vmatprep.subr.mxu0 0.0
    %341 = vmatpush1.msra.mxu0 0.0
    %342 = vmatprep.subr.mxu0 0.0
    %343 = vmatpush1.msra.mxu0 0.0
    %344 = vmatprep.subr.mxu0 0.0
    %345 = vmatpush1.msra.mxu0 0.0
    %346 = vmatprep.subr.mxu0 0.0
    %347 = vmatpush1.msra.mxu0 0.0
    %348 = vmatprep.subr.mxu0 0.0
    %349 = vmatpush1.msra.mxu0 0.0
    %350 = vmatprep.subr.mxu0 0.0
    %351 = vmatpush1.msra.mxu0 0.0
    %352 = vmatprep.subr.mxu0 0.0
    %353 = vmatpush1.msra.mxu0 0.0
    %354 = vmatprep.subr.mxu0 0.0
    %355 = vmatpush1.msra.mxu0 0.0
    %356 = vmatprep.subr.mxu0 0.0
    %357 = vmatpush1.msra.mxu0 0.0
    %358 = vmatprep.subr.mxu0 0.0
    %359 = vmatpush1.msra.mxu0 0.0
    %360 = vmatprep.mubr.f32.mxu0 0.0
    %361 = vmatmul.mubr.f32.gmra.mrb[0].mxu0 %v291
    %v362 = vpop.f32.mrb[0].mxu0
    %v363 = vadd.f32 %v287, %v362
    %v364 = vpop.f32.mrb[0].mxu0
    %365 = vmatprep.mubr.f32.mxu0 0.0
    %366 = vmatmul.mubr.f32.gmra.mrb[0].mxu0 %v294
    %v367 = vpop.f32.mrb[0].mxu0
    %v368 = vadd.f32 %v287, %v367
    %v369 = vpop.f32.mrb[0].mxu0
    %370 = vdwg.mxu0
    %v371 = vld [vmem:[%s1] sm:$0xff]
    %v372 = vld [vmem:[%s1 + $0x8] sm:$0xff]
    %v373 = vld [vmem:[%s1 + $0x10] sm:$0xff]
    %v374 = vld [vmem:[%s1 + $0x18] sm:$0xff]
    %v375 = vld [vmem:[%s10] sm:$0x77]
    %v376 = vld [vmem:[#allocation7] sm:$0x3]
    %v378 = vlaneseq
    %v379 = vshrl.u32 %v378, 7
    %v380 = vsub.s32 0, %v379
    %v381 = vrot.slane %v376, %v380
    %v382 = vlaneseq
    %v383 = vshrl.u32 %v382, 7
    %v384 = vsub.s32 1, %v383
    %v385 = vrot.slane %v376, %v384
    %v389 = vcombine.high %v375, %v375
    %vm390 = vcmask 23552
    %v392 = vsel %vm390, %v371, 0
    %v395 = vsel %vm390, %v372, 0
    %v398 = vsel %vm390, %v373, 0
    %v401 = vsel %vm390, %v374, 0
    %vm403 = vcmask 1042432
    %v404 = vsel %vm403, %v375, 0
    %v406 = vsel %vm403, %v389, 0
    %408 = vmatprep.subr.mxu0 %v406
    %409 = vmatpush1.msra.mxu0 %v404
    %410 = vmatprep.subr.mxu0 0.0
    %411 = vmatpush1.msra.mxu0 0.0
    %412 = vmatprep.subr.mxu0 0.0
    %413 = vmatpush1.msra.mxu0 0.0
    %414 = vmatprep.subr.mxu0 0.0
    %415 = vmatpush1.msra.mxu0 0.0
    %416 = vmatprep.subr.mxu0 0.0
    %417 = vmatpush1.msra.mxu0 0.0
    %418 = vmatprep.subr.mxu0 0.0
    %419 = vmatpush1.msra.mxu0 0.0
    %420 = vmatprep.subr.mxu0 0.0
    %421 = vmatpush1.msra.mxu0 0.0
    %422 = vmatprep.subr.mxu0 0.0
    %423 = vmatpush1.msra.mxu0 0.0
    %424 = vmatprep.subr.mxu0 0.0
    %425 = vmatpush1.msra.mxu0 0.0
    %426 = vmatprep.subr.mxu0 0.0
    %427 = vmatpush1.msra.mxu0 0.0
    %428 = vmatprep.subr.mxu0 0.0
    %429 = vmatpush1.msra.mxu0 0.0
    %430 = vmatprep.subr.mxu0 0.0
    %431 = vmatpush1.msra.mxu0 0.0
    %432 = vmatprep.subr.mxu0 0.0
    %433 = vmatpush1.msra.mxu0 0.0
    %434 = vmatprep.subr.mxu0 0.0
    %435 = vmatpush1.msra.mxu0 0.0
    %436 = vmatprep.subr.mxu0 0.0
    %437 = vmatpush1.msra.mxu0 0.0
    %438 = vmatprep.subr.mxu0 0.0
    %439 = vmatpush1.msra.mxu0 0.0
    %440 = vmatprep.subr.mxu0 0.0
    %441 = vmatpush1.msra.mxu0 0.0
    %442 = vmatprep.subr.mxu0 0.0
    %443 = vmatpush1.msra.mxu0 0.0
    %444 = vmatprep.subr.mxu0 0.0
    %445 = vmatpush1.msra.mxu0 0.0
    %446 = vmatprep.subr.mxu0 0.0
    %447 = vmatpush1.msra.mxu0 0.0
    %448 = vmatprep.subr.mxu0 0.0
    %449 = vmatpush1.msra.mxu0 0.0
    %450 = vmatprep.subr.mxu0 0.0
    %451 = vmatpush1.msra.mxu0 0.0
    %452 = vmatprep.subr.mxu0 0.0
    %453 = vmatpush1.msra.mxu0 0.0
    %454 = vmatprep.subr.mxu0 0.0
    %455 = vmatpush1.msra.mxu0 0.0
    %456 = vmatprep.subr.mxu0 0.0
    %457 = vmatpush1.msra.mxu0 0.0
    %458 = vmatprep.subr.mxu0 0.0
    %459 = vmatpush1.msra.mxu0 0.0
    %460 = vmatprep.subr.mxu0 0.0
    %461 = vmatpush1.msra.mxu0 0.0
    %462 = vmatprep.subr.mxu0 0.0
    %463 = vmatpush1.msra.mxu0 0.0
    %464 = vmatprep.subr.mxu0 0.0
    %465 = vmatpush1.msra.mxu0 0.0
    %466 = vmatprep.subr.mxu0 0.0
    %467 = vmatpush1.msra.mxu0 0.0
    %468 = vmatprep.subr.mxu0 0.0
    %469 = vmatpush1.msra.mxu0 0.0
    %470 = vmatprep.subr.mxu0 0.0
    %471 = vmatpush1.msra.mxu0 0.0
    %472 = vmatprep.mubr.f32.mxu0 0.0
    %473 = vmatmul.mubr.f32.gmra.mrb[0].mxu0 %v392
    %v474 = vpop.f32.mrb[0].mxu0
    %v475 = vadd.f32 %v381, %v474
    %v476 = vpop.f32.mrb[0].mxu0
    %v477 = vadd.f32 %v385, %v476
    %478 = vmatprep.mubr.f32.mxu0 0.0
    %479 = vmatmul.mubr.f32.gmra.mrb[0].mxu0 %v395
    %v480 = vpop.f32.mrb[0].mxu0
    %v481 = vadd.f32 %v381, %v480
    %v482 = vpop.f32.mrb[0].mxu0
    %v483 = vadd.f32 %v385, %v482
    %484 = vmatprep.mubr.f32.mxu0 0.0
    %485 = vmatmul.mubr.f32.gmra.mrb[0].mxu0 %v398
    %v486 = vpop.f32.mrb[0].mxu0
    %v487 = vadd.f32 %v381, %v486
    %v488 = vpop.f32.mrb[0].mxu0
    %v489 = vadd.f32 %v385, %v488
    %490 = vmatprep.mubr.f32.mxu0 0.0
    %491 = vmatmul.mubr.f32.gmra.mrb[0].mxu0 %v401
    %v492 = vpop.f32.mrb[0].mxu0
    %v493 = vadd.f32 %v381, %v492
    %v494 = vpop.f32.mrb[0].mxu0
    %v495 = vadd.f32 %v385, %v494
    %496 = vdwg.mxu0
    %v497 = vmax.f32 %v475, 0.0
    %v498 = vmax.f32 %v477, 0.0
    %v499 = vmax.f32 %v481, 0.0
    %v500 = vmax.f32 %v483, 0.0
    %v501 = vmax.f32 %v487, 0.0
    %v502 = vmax.f32 %v489, 0.0
    %v503 = vmax.f32 %v493, 0.0
    %v504 = vmax.f32 %v495, 0.0
    %v505 = vld [vmem:[#allocation8] sm:$0xff]
    %v506 = vld [vmem:[#allocation8 + $0x8] sm:$0xff]
    %v507 = vld [vmem:[#allocation8 + $0x10] sm:$0xff]
    %v508 = vld [vmem:[#allocation8 + $0x18] sm:$0xff]
    %v509 = vld [vmem:[#allocation8 + $0x20] sm:$0xff]
    %v510 = vld [vmem:[#allocation8 + $0x28] sm:$0xff]
    %v511 = vld [vmem:[#allocation8 + $0x30] sm:$0xff]
    %v512 = vld [vmem:[#allocation8 + $0x38] sm:$0xff]
    %v513 = vld [vmem:[%s13] sm:$0x1]
    %v515 = vlaneseq
    %v516 = vshrl.u32 %v515, 7
    %v517 = vsub.s32 0, %v516
    %v518 = vrot.slane %v513, %v517
    %vm520 = vcmask 523264
    %v522 = vsel %vm520, %v497, 0
    %v525 = vsel %vm520, %v499, 0
    %v528 = vsel %vm520, %v501, 0
    %v531 = vsel %vm520, %v503, 0
    %533 = vmatprep.subr.mxu0 0.0
    %534 = vmatpush1.msra.mxu0 %v505
    %535 = vmatprep.subr.mxu0 0.0
    %536 = vmatpush1.msra.mxu0 %v506
    %537 = vmatprep.subr.mxu0 0.0
    %538 = vmatpush1.msra.mxu0 %v507
    %539 = vmatprep.subr.mxu0 0.0
    %540 = vmatpush1.msra.mxu0 %v508
    %541 = vmatprep.subr.mxu0 0.0
    %542 = vmatpush1.msra.mxu0 %v509
    %543 = vmatprep.subr.mxu0 0.0
    %544 = vmatpush1.msra.mxu0 %v510
    %545 = vmatprep.subr.mxu0 0.0
    %546 = vmatpush1.msra.mxu0 %v511
    %547 = vmatprep.subr.mxu0 0.0
    %548 = vmatpush1.msra.mxu0 %v512
    %549 = vmatprep.subr.mxu0 0.0
    %550 = vmatpush1.msra.mxu0 0.0
    %551 = vmatprep.subr.mxu0 0.0
    %552 = vmatpush1.msra.mxu0 0.0
    %553 = vmatprep.subr.mxu0 0.0
    %554 = vmatpush1.msra.mxu0 0.0
    %555 = vmatprep.subr.mxu0 0.0
    %556 = vmatpush1.msra.mxu0 0.0
    %557 = vmatprep.subr.mxu0 0.0
    %558 = vmatpush1.msra.mxu0 0.0
    %559 = vmatprep.subr.mxu0 0.0
    %560 = vmatpush1.msra.mxu0 0.0
    %561 = vmatprep.subr.mxu0 0.0
    %562 = vmatpush1.msra.mxu0 0.0
    %563 = vmatprep.subr.mxu0 0.0
    %564 = vmatpush1.msra.mxu0 0.0
    %565 = vmatprep.subr.mxu0 0.0
    %566 = vmatpush1.msra.mxu0 0.0
    %567 = vmatprep.subr.mxu0 0.0
    %568 = vmatpush1.msra.mxu0 0.0
    %569 = vmatprep.subr.mxu0 0.0
    %570 = vmatpush1.msra.mxu0 0.0
    %571 = vmatprep.subr.mxu0 0.0
    %572 = vmatpush1.msra.mxu0 0.0
    %573 = vmatprep.subr.mxu0 0.0
    %574 = vmatpush1.msra.mxu0 0.0
    %575 = vmatprep.subr.mxu0 0.0
    %576 = vmatpush1.msra.mxu0 0.0
    %577 = vmatprep.subr.mxu0 0.0
    %578 = vmatpush1.msra.mxu0 0.0
    %579 = vmatprep.subr.mxu0 0.0
    %580 = vmatpush1.msra.mxu0 0.0
    %581 = vmatprep.subr.mxu0 0.0
    %582 = vmatpush1.msra.mxu0 0.0
    %583 = vmatprep.subr.mxu0 0.0
    %584 = vmatpush1.msra.mxu0 0.0
    %585 = vmatprep.subr.mxu0 0.0
    %586 = vmatpush1.msra.mxu0 0.0
    %587 = vmatprep.subr.mxu0 0.0
    %588 = vmatpush1.msra.mxu0 0.0
    %589 = vmatprep.subr.mxu0 0.0
    %590 = vmatpush1.msra.mxu0 0.0
    %591 = vmatprep.subr.mxu0 0.0
    %592 = vmatpush1.msra.mxu0 0.0
    %593 = vmatprep.subr.mxu0 0.0
    %594 = vmatpush1.msra.mxu0 0.0
    %595 = vmatprep.subr.mxu0 0.0
    %596 = vmatpush1.msra.mxu0 0.0
    %597 = vmatprep.mubr.f32.mxu0 0.0
    %598 = vmatmul.mubr.f32.gmra.mrb[0].mxu0 %v522
    %v599 = vpop.f32.mrb[0].mxu0
    %v600 = vadd.f32 %v518, %v599
    %v601 = vpop.f32.mrb[0].mxu0
    %602 = vmatprep.mubr.f32.mxu0 0.0
    %603 = vmatmul.mubr.f32.gmra.mrb[0].mxu0 %v525
    %v604 = vpop.f32.mrb[0].mxu0
    %v605 = vadd.f32 %v518, %v604
    %v606 = vpop.f32.mrb[0].mxu0
    %607 = vmatprep.mubr.f32.mxu0 0.0
    %608 = vmatmul.mubr.f32.gmra.mrb[0].mxu0 %v528
    %v609 = vpop.f32.mrb[0].mxu0
    %v610 = vadd.f32 %v518, %v609
    %v611 = vpop.f32.mrb[0].mxu0
    %612 = vmatprep.mubr.f32.mxu0 0.0
    %613 = vmatmul.mubr.f32.gmra.mrb[0].mxu0 %v531
    %v614 = vpop.f32.mrb[0].mxu0
    %v615 = vadd.f32 %v518, %v614
    %v616 = vpop.f32.mrb[0].mxu0
    %617 = vdwg.mxu0
    %v618 = vld [vmem:[#allocation11] sm:$0xff]
    %v619 = vld [vmem:[#allocation11 + $0x8] sm:$0xff]
    %v620 = vld [vmem:[#allocation11 + $0x10] sm:$0xff]
    %v621 = vld [vmem:[#allocation11 + $0x18] sm:$0xff]
    %v622 = vld [vmem:[#allocation11 + $0x20] sm:$0xff]
    %v623 = vld [vmem:[#allocation11 + $0x28] sm:$0xff]
    %v624 = vld [vmem:[#allocation11 + $0x30] sm:$0xff]
    %v625 = vld [vmem:[#allocation11 + $0x38] sm:$0xff]
    %v627 = vsel %vm520, %v600, 0
    %v630 = vsel %vm520, %v605, 0
    %v633 = vsel %vm520, %v610, 0
    %v636 = vsel %vm520, %v615, 0
    %638 = vmatprep.subr.mxu0 0.0
    %639 = vmatpush1.msra.mxu0 %v618
    %640 = vmatprep.subr.mxu0 0.0
    %641 = vmatpush1.msra.mxu0 %v619
    %642 = vmatprep.subr.mxu0 0.0
    %643 = vmatpush1.msra.mxu0 %v620
    %644 = vmatprep.subr.mxu0 0.0
    %645 = vmatpush1.msra.mxu0 %v621
    %646 = vmatprep.subr.mxu0 0.0
    %647 = vmatpush1.msra.mxu0 %v622
    %648 = vmatprep.subr.mxu0 0.0
    %649 = vmatpush1.msra.mxu0 %v623
    %650 = vmatprep.subr.mxu0 0.0
    %651 = vmatpush1.msra.mxu0 %v624
    %652 = vmatprep.subr.mxu0 0.0
    %653 = vmatpush1.msra.mxu0 %v625
    %654 = vmatprep.subr.mxu0 0.0
    %655 = vmatpush1.msra.mxu0 0.0
    %656 = vmatprep.subr.mxu0 0.0
    %657 = vmatpush1.msra.mxu0 0.0
    %658 = vmatprep.subr.mxu0 0.0
    %659 = vmatpush1.msra.mxu0 0.0
    %660 = vmatprep.subr.mxu0 0.0
    %661 = vmatpush1.msra.mxu0 0.0
    %662 = vmatprep.subr.mxu0 0.0
    %663 = vmatpush1.msra.mxu0 0.0
    %664 = vmatprep.subr.mxu0 0.0
    %665 = vmatpush1.msra.mxu0 0.0
    %666 = vmatprep.subr.mxu0 0.0
    %667 = vmatpush1.msra.mxu0 0.0
    %668 = vmatprep.subr.mxu0 0.0
    %669 = vmatpush1.msra.mxu0 0.0
    %670 = vmatprep.subr.mxu0 0.0
    %671 = vmatpush1.msra.mxu0 0.0
    %672 = vmatprep.subr.mxu0 0.0
    %673 = vmatpush1.msra.mxu0 0.0
    %674 = vmatprep.subr.mxu0 0.0
    %675 = vmatpush1.msra.mxu0 0.0
    %676 = vmatprep.subr.mxu0 0.0
    %677 = vmatpush1.msra.mxu0 0.0
    %678 = vmatprep.subr.mxu0 0.0
    %679 = vmatpush1.msra.mxu0 0.0
    %680 = vmatprep.subr.mxu0 0.0
    %681 = vmatpush1.msra.mxu0 0.0
    %682 = vmatprep.subr.mxu0 0.0
    %683 = vmatpush1.msra.mxu0 0.0
    %684 = vmatprep.subr.mxu0 0.0
    %685 = vmatpush1.msra.mxu0 0.0
    %686 = vmatprep.subr.mxu0 0.0
    %687 = vmatpush1.msra.mxu0 0.0
    %688 = vmatprep.subr.mxu0 0.0
    %689 = vmatpush1.msra.mxu0 0.0
    %690 = vmatprep.subr.mxu0 0.0
    %691 = vmatpush1.msra.mxu0 0.0
    %692 = vmatprep.subr.mxu0 0.0
    %693 = vmatpush1.msra.mxu0 0.0
    %694 = vmatprep.subr.mxu0 0.0
    %695 = vmatpush1.msra.mxu0 0.0
    %696 = vmatprep.subr.mxu0 0.0
    %697 = vmatpush1.msra.mxu0 0.0
    %698 = vmatprep.subr.mxu0 0.0
    %699 = vmatpush1.msra.mxu0 0.0
    %700 = vmatprep.subr.mxu0 0.0
    %701 = vmatpush1.msra.mxu0 0.0
    %702 = vmatprep.mubr.f32.mxu0 0.0
    %703 = vmatmul.mubr.f32.gmra.mrb[0].mxu0 %v627
    %v704 = vpop.f32.mrb[0].mxu0
    %v705 = vadd.f32 0.0, %v704
    %v706 = vpop.f32.mrb[0].mxu0
    %707 = vmatprep.mubr.f32.mxu0 0.0
    %708 = vmatmul.mubr.f32.gmra.mrb[0].mxu0 %v630
    %v709 = vpop.f32.mrb[0].mxu0
    %v710 = vadd.f32 0.0, %v709
    %v711 = vpop.f32.mrb[0].mxu0
    %712 = vmatprep.mubr.f32.mxu0 0.0
    %713 = vmatmul.mubr.f32.gmra.mrb[0].mxu0 %v633
    %v714 = vpop.f32.mrb[0].mxu0
    %v715 = vadd.f32 0.0, %v714
    %v716 = vpop.f32.mrb[0].mxu0
    %717 = vmatprep.mubr.f32.mxu0 0.0
    %718 = vmatmul.mubr.f32.gmra.mrb[0].mxu0 %v636
    %v719 = vpop.f32.mrb[0].mxu0
    %v720 = vadd.f32 0.0, %v719
    %v721 = vpop.f32.mrb[0].mxu0
    %722 = vdwg.mxu0
    %s723 = scalar_lea.vmem [#allocation8], 64
    %v724 = vld [vmem:[%s723] sm:$0xff]
    %v725 = vld [vmem:[%s723 + $0x8] sm:$0xff]
    %v726 = vld [vmem:[%s723 + $0x10] sm:$0xff]
    %v727 = vld [vmem:[%s723 + $0x18] sm:$0xff]
    %v728 = vld [vmem:[%s723 + $0x20] sm:$0xff]
    %v729 = vld [vmem:[%s723 + $0x28] sm:$0xff]
    %v730 = vld [vmem:[%s723 + $0x30] sm:$0xff]
    %v731 = vld [vmem:[%s723 + $0x38] sm:$0xff]
    %s732 = scalar_lea.vmem %s13, 1
    %v733 = vld [vmem:[%s732] sm:$0x1]
    %v735 = vlaneseq
    %v736 = vshrl.u32 %v735, 7
    %v737 = vsub.s32 0, %v736
    %v738 = vrot.slane %v733, %v737
    %740 = vrot.lane.b32.xlu0 %v497, 64
    %v741 = vpop.permute.xlu0 %740
    %742 = vrot.lane.b32.xlu0 %v499, 64
    %v743 = vpop.permute.xlu0 %742
    %744 = vrot.lane.b32.xlu0 %v501, 64
    %v745 = vpop.permute.xlu0 %744
    %746 = vrot.lane.b32.xlu0 %v503, 64
    %v747 = vpop.permute.xlu0 %746
    %v748 = vsel %vm520, %v741, 0
    %v750 = vsel %vm520, %v743, 0
    %v752 = vsel %vm520, %v745, 0
    %v754 = vsel %vm520, %v747, 0
    %756 = vmatprep.subr.mxu0 0.0
    %757 = vmatpush1.msra.mxu0 %v724
    %758 = vmatprep.subr.mxu0 0.0
    %759 = vmatpush1.msra.mxu0 %v725
    %760 = vmatprep.subr.mxu0 0.0
    %761 = vmatpush1.msra.mxu0 %v726
    %762 = vmatprep.subr.mxu0 0.0
    %763 = vmatpush1.msra.mxu0 %v727
    %764 = vmatprep.subr.mxu0 0.0
    %765 = vmatpush1.msra.mxu0 %v728
    %766 = vmatprep.subr.mxu0 0.0
    %767 = vmatpush1.msra.mxu0 %v729
    %768 = vmatprep.subr.mxu0 0.0
    %769 = vmatpush1.msra.mxu0 %v730
    %770 = vmatprep.subr.mxu0 0.0
    %771 = vmatpush1.msra.mxu0 %v731
    %772 = vmatprep.subr.mxu0 0.0
    %773 = vmatpush1.msra.mxu0 0.0
    %774 = vmatprep.subr.mxu0 0.0
    %775 = vmatpush1.msra.mxu0 0.0
    %776 = vmatprep.subr.mxu0 0.0
    %777 = vmatpush1.msra.mxu0 0.0
    %778 = vmatprep.subr.mxu0 0.0
    %779 = vmatpush1.msra.mxu0 0.0
    %780 = vmatprep.subr.mxu0 0.0
    %781 = vmatpush1.msra.mxu0 0.0
    %782 = vmatprep.subr.mxu0 0.0
    %783 = vmatpush1.msra.mxu0 0.0
    %784 = vmatprep.subr.mxu0 0.0
    %785 = vmatpush1.msra.mxu0 0.0
    %786 = vmatprep.subr.mxu0 0.0
    %787 = vmatpush1.msra.mxu0 0.0
    %788 = vmatprep.subr.mxu0 0.0
    %789 = vmatpush1.msra.mxu0 0.0
    %790 = vmatprep.subr.mxu0 0.0
    %791 = vmatpush1.msra.mxu0 0.0
    %792 = vmatprep.subr.mxu0 0.0
    %793 = vmatpush1.msra.mxu0 0.0
    %794 = vmatprep.subr.mxu0 0.0
    %795 = vmatpush1.msra.mxu0 0.0
    %796 = vmatprep.subr.mxu0 0.0
    %797 = vmatpush1.msra.mxu0 0.0
    %798 = vmatprep.subr.mxu0 0.0
    %799 = vmatpush1.msra.mxu0 0.0
    %800 = vmatprep.subr.mxu0 0.0
    %801 = vmatpush1.msra.mxu0 0.0
    %802 = vmatprep.subr.mxu0 0.0
    %803 = vmatpush1.msra.mxu0 0.0
    %804 = vmatprep.subr.mxu0 0.0
    %805 = vmatpush1.msra.mxu0 0.0
    %806 = vmatprep.subr.mxu0 0.0
    %807 = vmatpush1.msra.mxu0 0.0
    %808 = vmatprep.subr.mxu0 0.0
    %809 = vmatpush1.msra.mxu0 0.0
    %810 = vmatprep.subr.mxu0 0.0
    %811 = vmatpush1.msra.mxu0 0.0
    %812 = vmatprep.subr.mxu0 0.0
    %813 = vmatpush1.msra.mxu0 0.0
    %814 = vmatprep.subr.mxu0 0.0
    %815 = vmatpush1.msra.mxu0 0.0
    %816 = vmatprep.subr.mxu0 0.0
    %817 = vmatpush1.msra.mxu0 0.0
    %818 = vmatprep.subr.mxu0 0.0
    %819 = vmatpush1.msra.mxu0 0.0
    %820 = vmatprep.mubr.f32.mxu0 0.0
    %821 = vmatmul.mubr.f32.gmra.mrb[0].mxu0 %v748
    %v822 = vpop.f32.mrb[0].mxu0
    %v823 = vadd.f32 %v738, %v822
    %v824 = vpop.f32.mrb[0].mxu0
    %825 = vmatprep.mubr.f32.mxu0 0.0
    %826 = vmatmul.mubr.f32.gmra.mrb[0].mxu0 %v750
    %v827 = vpop.f32.mrb[0].mxu0
    %v828 = vadd.f32 %v738, %v827
    %v829 = vpop.f32.mrb[0].mxu0
    %830 = vmatprep.mubr.f32.mxu0 0.0
    %831 = vmatmul.mubr.f32.gmra.mrb[0].mxu0 %v752
    %v832 = vpop.f32.mrb[0].mxu0
    %v833 = vadd.f32 %v738, %v832
    %v834 = vpop.f32.mrb[0].mxu0
    %835 = vmatprep.mubr.f32.mxu0 0.0
    %836 = vmatmul.mubr.f32.gmra.mrb[0].mxu0 %v754
    %v837 = vpop.f32.mrb[0].mxu0
    %v838 = vadd.f32 %v738, %v837
    %v839 = vpop.f32.mrb[0].mxu0
    %840 = vdwg.mxu0
    %s841 = scalar_lea.vmem [#allocation11], 64
    %v842 = vld [vmem:[%s841] sm:$0xff]
    %v843 = vld [vmem:[%s841 + $0x8] sm:$0xff]
    %v844 = vld [vmem:[%s841 + $0x10] sm:$0xff]
    %v845 = vld [vmem:[%s841 + $0x18] sm:$0xff]
    %v846 = vld [vmem:[%s841 + $0x20] sm:$0xff]
    %v847 = vld [vmem:[%s841 + $0x28] sm:$0xff]
    %v848 = vld [vmem:[%s841 + $0x30] sm:$0xff]
    %v849 = vld [vmem:[%s841 + $0x38] sm:$0xff]
    %v851 = vsel %vm520, %v823, 0
    %v854 = vsel %vm520, %v828, 0
    %v857 = vsel %vm520, %v833, 0
    %v860 = vsel %vm520, %v838, 0
    %862 = vmatprep.subr.mxu0 0.0
    %863 = vmatpush1.msra.mxu0 %v842
    %864 = vmatprep.subr.mxu0 0.0
    %865 = vmatpush1.msra.mxu0 %v843
    %866 = vmatprep.subr.mxu0 0.0
    %867 = vmatpush1.msra.mxu0 %v844
    %868 = vmatprep.subr.mxu0 0.0
    %869 = vmatpush1.msra.mxu0 %v845
    %870 = vmatprep.subr.mxu0 0.0
    %871 = vmatpush1.msra.mxu0 %v846
    %872 = vmatprep.subr.mxu0 0.0
    %873 = vmatpush1.msra.mxu0 %v847
    %874 = vmatprep.subr.mxu0 0.0
    %875 = vmatpush1.msra.mxu0 %v848
    %876 = vmatprep.subr.mxu0 0.0
    %877 = vmatpush1.msra.mxu0 %v849
    %878 = vmatprep.subr.mxu0 0.0
    %879 = vmatpush1.msra.mxu0 0.0
    %880 = vmatprep.subr.mxu0 0.0
    %881 = vmatpush1.msra.mxu0 0.0
    %882 = vmatprep.subr.mxu0 0.0
    %883 = vmatpush1.msra.mxu0 0.0
    %884 = vmatprep.subr.mxu0 0.0
    %885 = vmatpush1.msra.mxu0 0.0
    %886 = vmatprep.subr.mxu0 0.0
    %887 = vmatpush1.msra.mxu0 0.0
    %888 = vmatprep.subr.mxu0 0.0
    %889 = vmatpush1.msra.mxu0 0.0
    %890 = vmatprep.subr.mxu0 0.0
    %891 = vmatpush1.msra.mxu0 0.0
    %892 = vmatprep.subr.mxu0 0.0
    %893 = vmatpush1.msra.mxu0 0.0
    %894 = vmatprep.subr.mxu0 0.0
    %895 = vmatpush1.msra.mxu0 0.0
    %896 = vmatprep.subr.mxu0 0.0
    %897 = vmatpush1.msra.mxu0 0.0
    %898 = vmatprep.subr.mxu0 0.0
    %899 = vmatpush1.msra.mxu0 0.0
    %900 = vmatprep.subr.mxu0 0.0
    %901 = vmatpush1.msra.mxu0 0.0
    %902 = vmatprep.subr.mxu0 0.0
    %903 = vmatpush1.msra.mxu0 0.0
    %904 = vmatprep.subr.mxu0 0.0
    %905 = vmatpush1.msra.mxu0 0.0
    %906 = vmatprep.subr.mxu0 0.0
    %907 = vmatpush1.msra.mxu0 0.0
    %908 = vmatprep.subr.mxu0 0.0
    %909 = vmatpush1.msra.mxu0 0.0
    %910 = vmatprep.subr.mxu0 0.0
    %911 = vmatpush1.msra.mxu0 0.0
    %912 = vmatprep.subr.mxu0 0.0
    %913 = vmatpush1.msra.mxu0 0.0
    %914 = vmatprep.subr.mxu0 0.0
    %915 = vmatpush1.msra.mxu0 0.0
    %916 = vmatprep.subr.mxu0 0.0
    %917 = vmatpush1.msra.mxu0 0.0
    %918 = vmatprep.subr.mxu0 0.0
    %919 = vmatpush1.msra.mxu0 0.0
    %920 = vmatprep.subr.mxu0 0.0
    %921 = vmatpush1.msra.mxu0 0.0
    %922 = vmatprep.subr.mxu0 0.0
    %923 = vmatpush1.msra.mxu0 0.0
    %924 = vmatprep.subr.mxu0 0.0
    %925 = vmatpush1.msra.mxu0 0.0
    %926 = vmatprep.mubr.f32.mxu0 0.0
    %927 = vmatmul.mubr.f32.gmra.mrb[0].mxu0 %v851
    %v928 = vpop.f32.mrb[0].mxu0
    %v929 = vadd.f32 0.0, %v928
    %v930 = vpop.f32.mrb[0].mxu0
    %931 = vmatprep.mubr.f32.mxu0 0.0
    %932 = vmatmul.mubr.f32.gmra.mrb[0].mxu0 %v854
    %v933 = vpop.f32.mrb[0].mxu0
    %v934 = vadd.f32 0.0, %v933
    %v935 = vpop.f32.mrb[0].mxu0
    %936 = vmatprep.mubr.f32.mxu0 0.0
    %937 = vmatmul.mubr.f32.gmra.mrb[0].mxu0 %v857
    %v938 = vpop.f32.mrb[0].mxu0
    %v939 = vadd.f32 0.0, %v938
    %v940 = vpop.f32.mrb[0].mxu0
    %941 = vmatprep.mubr.f32.mxu0 0.0
    %942 = vmatmul.mubr.f32.gmra.mrb[0].mxu0 %v860
    %v943 = vpop.f32.mrb[0].mxu0
    %v944 = vadd.f32 0.0, %v943
    %v945 = vpop.f32.mrb[0].mxu0
    %946 = vdwg.mxu0
    %s947 = scalar_lea.vmem [#allocation8], 128
    %v948 = vld [vmem:[%s947] sm:$0xff]
    %v949 = vld [vmem:[%s947 + $0x8] sm:$0xff]
    %v950 = vld [vmem:[%s947 + $0x10] sm:$0xff]
    %v951 = vld [vmem:[%s947 + $0x18] sm:$0xff]
    %v952 = vld [vmem:[%s947 + $0x20] sm:$0xff]
    %v953 = vld [vmem:[%s947 + $0x28] sm:$0xff]
    %v954 = vld [vmem:[%s947 + $0x30] sm:$0xff]
    %v955 = vld [vmem:[%s947 + $0x38] sm:$0xff]
    %s956 = scalar_lea.vmem %s13, 2
    %v957 = vld [vmem:[%s956] sm:$0x1]
    %v959 = vlaneseq
    %v960 = vshrl.u32 %v959, 7
    %v961 = vsub.s32 0, %v960
    %v962 = vrot.slane %v957, %v961
    %v965 = vsel %vm520, %v498, 0
    %v968 = vsel %vm520, %v500, 0
    %v971 = vsel %vm520, %v502, 0
    %v974 = vsel %vm520, %v504, 0
    %976 = vmatprep.subr.mxu0 0.0
    %977 = vmatpush1.msra.mxu0 %v948
    %978 = vmatprep.subr.mxu0 0.0
    %979 = vmatpush1.msra.mxu0 %v949
    %980 = vmatprep.subr.mxu0 0.0
    %981 = vmatpush1.msra.mxu0 %v950
    %982 = vmatprep.subr.mxu0 0.0
    %983 = vmatpush1.msra.mxu0 %v951
    %984 = vmatprep.subr.mxu0 0.0
    %985 = vmatpush1.msra.mxu0 %v952
    %986 = vmatprep.subr.mxu0 0.0
    %987 = vmatpush1.msra.mxu0 %v953
    %988 = vmatprep.subr.mxu0 0.0
    %989 = vmatpush1.msra.mxu0 %v954
    %990 = vmatprep.subr.mxu0 0.0
    %991 = vmatpush1.msra.mxu0 %v955
    %992 = vmatprep.subr.mxu0 0.0
    %993 = vmatpush1.msra.mxu0 0.0
    %994 = vmatprep.subr.mxu0 0.0
    %995 = vmatpush1.msra.mxu0 0.0
    %996 = vmatprep.subr.mxu0 0.0
    %997 = vmatpush1.msra.mxu0 0.0
    %998 = vmatprep.subr.mxu0 0.0
    %999 = vmatpush1.msra.mxu0 0.0
    %1000 = vmatprep.subr.mxu0 0.0
    %1001 = vmatpush1.msra.mxu0 0.0
    %1002 = vmatprep.subr.mxu0 0.0
    %1003 = vmatpush1.msra.mxu0 0.0
    %1004 = vmatprep.subr.mxu0 0.0
    %1005 = vmatpush1.msra.mxu0 0.0
    %1006 = vmatprep.subr.mxu0 0.0
    %1007 = vmatpush1.msra.mxu0 0.0
    %1008 = vmatprep.subr.mxu0 0.0
    %1009 = vmatpush1.msra.mxu0 0.0
    %1010 = vmatprep.subr.mxu0 0.0
    %1011 = vmatpush1.msra.mxu0 0.0
    %1012 = vmatprep.subr.mxu0 0.0
    %1013 = vmatpush1.msra.mxu0 0.0
    %1014 = vmatprep.subr.mxu0 0.0
    %1015 = vmatpush1.msra.mxu0 0.0
    %1016 = vmatprep.subr.mxu0 0.0
    %1017 = vmatpush1.msra.mxu0 0.0
    %1018 = vmatprep.subr.mxu0 0.0
    %1019 = vmatpush1.msra.mxu0 0.0
    %1020 = vmatprep.subr.mxu0 0.0
    %1021 = vmatpush1.msra.mxu0 0.0
    %1022 = vmatprep.subr.mxu0 0.0
    %1023 = vmatpush1.msra.mxu0 0.0
    %1024 = vmatprep.subr.mxu0 0.0
    %1025 = vmatpush1.msra.mxu0 0.0
    %1026 = vmatprep.subr.mxu0 0.0
    %1027 = vmatpush1.msra.mxu0 0.0
    %1028 = vmatprep.subr.mxu0 0.0
    %1029 = vmatpush1.msra.mxu0 0.0
    %1030 = vmatprep.subr.mxu0 0.0
    %1031 = vmatpush1.msra.mxu0 0.0
    %1032 = vmatprep.subr.mxu0 0.0
    %1033 = vmatpush1.msra.mxu0 0.0
    %1034 = vmatprep.subr.mxu0 0.0
    %1035 = vmatpush1.msra.mxu0 0.0
    %1036 = vmatprep.subr.mxu0 0.0
    %1037 = vmatpush1.msra.mxu0 0.0
    %1038 = vmatprep.subr.mxu0 0.0
    %1039 = vmatpush1.msra.mxu0 0.0
    %1040 = vmatprep.mubr.f32.mxu0 0.0
    %1041 = vmatmul.mubr.f32.gmra.mrb[0].mxu0 %v965
    %v1042 = vpop.f32.mrb[0].mxu0
    %v1043 = vadd.f32 %v962, %v1042
    %v1044 = vpop.f32.mrb[0].mxu0
    %1045 = vmatprep.mubr.f32.mxu0 0.0
    %1046 = vmatmul.mubr.f32.gmra.mrb[0].mxu0 %v968
    %v1047 = vpop.f32.mrb[0].mxu0
    %v1048 = vadd.f32 %v962, %v1047
    %v1049 = vpop.f32.mrb[0].mxu0
    %1050 = vmatprep.mubr.f32.mxu0 0.0
    %1051 = vmatmul.mubr.f32.gmra.mrb[0].mxu0 %v971
    %v1052 = vpop.f32.mrb[0].mxu0
    %v1053 = vadd.f32 %v962, %v1052
    %v1054 = vpop.f32.mrb[0].mxu0
    %1055 = vmatprep.mubr.f32.mxu0 0.0
    %1056 = vmatmul.mubr.f32.gmra.mrb[0].mxu0 %v974
    %v1057 = vpop.f32.mrb[0].mxu0
    %v1058 = vadd.f32 %v962, %v1057
    %v1059 = vpop.f32.mrb[0].mxu0
    %1060 = vdwg.mxu0
    %s1061 = scalar_lea.vmem [#allocation11], 128
    %v1062 = vld [vmem:[%s1061] sm:$0xff]
    %v1063 = vld [vmem:[%s1061 + $0x8] sm:$0xff]
    %v1064 = vld [vmem:[%s1061 + $0x10] sm:$0xff]
    %v1065 = vld [vmem:[%s1061 + $0x18] sm:$0xff]
    %v1066 = vld [vmem:[%s1061 + $0x20] sm:$0xff]
    %v1067 = vld [vmem:[%s1061 + $0x28] sm:$0xff]
    %v1068 = vld [vmem:[%s1061 + $0x30] sm:$0xff]
    %v1069 = vld [vmem:[%s1061 + $0x38] sm:$0xff]
    %v1071 = vsel %vm520, %v1043, 0
    %v1074 = vsel %vm520, %v1048, 0
    %v1077 = vsel %vm520, %v1053, 0
    %v1080 = vsel %vm520, %v1058, 0
    %1082 = vmatprep.subr.mxu0 0.0
    %1083 = vmatpush1.msra.mxu0 %v1062
    %1084 = vmatprep.subr.mxu0 0.0
    %1085 = vmatpush1.msra.mxu0 %v1063
    %1086 = vmatprep.subr.mxu0 0.0
    %1087 = vmatpush1.msra.mxu0 %v1064
    %1088 = vmatprep.subr.mxu0 0.0
    %1089 = vmatpush1.msra.mxu0 %v1065
    %1090 = vmatprep.subr.mxu0 0.0
    %1091 = vmatpush1.msra.mxu0 %v1066
    %1092 = vmatprep.subr.mxu0 0.0
    %1093 = vmatpush1.msra.mxu0 %v1067
    %1094 = vmatprep.subr.mxu0 0.0
    %1095 = vmatpush1.msra.mxu0 %v1068
    %1096 = vmatprep.subr.mxu0 0.0
    %1097 = vmatpush1.msra.mxu0 %v1069
    %1098 = vmatprep.subr.mxu0 0.0
    %1099 = vmatpush1.msra.mxu0 0.0
    %1100 = vmatprep.subr.mxu0 0.0
    %1101 = vmatpush1.msra.mxu0 0.0
    %1102 = vmatprep.subr.mxu0 0.0
    %1103 = vmatpush1.msra.mxu0 0.0
    %1104 = vmatprep.subr.mxu0 0.0
    %1105 = vmatpush1.msra.mxu0 0.0
    %1106 = vmatprep.subr.mxu0 0.0
    %1107 = vmatpush1.msra.mxu0 0.0
    %1108 = vmatprep.subr.mxu0 0.0
    %1109 = vmatpush1.msra.mxu0 0.0
    %1110 = vmatprep.subr.mxu0 0.0
    %1111 = vmatpush1.msra.mxu0 0.0
    %1112 = vmatprep.subr.mxu0 0.0
    %1113 = vmatpush1.msra.mxu0 0.0
    %1114 = vmatprep.subr.mxu0 0.0
    %1115 = vmatpush1.msra.mxu0 0.0
    %1116 = vmatprep.subr.mxu0 0.0
    %1117 = vmatpush1.msra.mxu0 0.0
    %1118 = vmatprep.subr.mxu0 0.0
    %1119 = vmatpush1.msra.mxu0 0.0
    %1120 = vmatprep.subr.mxu0 0.0
    %1121 = vmatpush1.msra.mxu0 0.0
    %1122 = vmatprep.subr.mxu0 0.0
    %1123 = vmatpush1.msra.mxu0 0.0
    %1124 = vmatprep.subr.mxu0 0.0
    %1125 = vmatpush1.msra.mxu0 0.0
    %1126 = vmatprep.subr.mxu0 0.0
    %1127 = vmatpush1.msra.mxu0 0.0
    %1128 = vmatprep.subr.mxu0 0.0
    %1129 = vmatpush1.msra.mxu0 0.0
    %1130 = vmatprep.subr.mxu0 0.0
    %1131 = vmatpush1.msra.mxu0 0.0
    %1132 = vmatprep.subr.mxu0 0.0
    %1133 = vmatpush1.msra.mxu0 0.0
    %1134 = vmatprep.subr.mxu0 0.0
    %1135 = vmatpush1.msra.mxu0 0.0
    %1136 = vmatprep.subr.mxu0 0.0
    %1137 = vmatpush1.msra.mxu0 0.0
    %1138 = vmatprep.subr.mxu0 0.0
    %1139 = vmatpush1.msra.mxu0 0.0
    %1140 = vmatprep.subr.mxu0 0.0
    %1141 = vmatpush1.msra.mxu0 0.0
    %1142 = vmatprep.subr.mxu0 0.0
    %1143 = vmatpush1.msra.mxu0 0.0
    %1144 = vmatprep.subr.mxu0 0.0
    %1145 = vmatpush1.msra.mxu0 0.0
    %1146 = vmatprep.mubr.f32.mxu0 0.0
    %1147 = vmatmul.mubr.f32.gmra.mrb[0].mxu0 %v1071
    %v1148 = vpop.f32.mrb[0].mxu0
    %v1149 = vadd.f32 0.0, %v1148
    %v1150 = vpop.f32.mrb[0].mxu0
    %1151 = vmatprep.mubr.f32.mxu0 0.0
    %1152 = vmatmul.mubr.f32.gmra.mrb[0].mxu0 %v1074
    %v1153 = vpop.f32.mrb[0].mxu0
    %v1154 = vadd.f32 0.0, %v1153
    %v1155 = vpop.f32.mrb[0].mxu0
    %1156 = vmatprep.mubr.f32.mxu0 0.0
    %1157 = vmatmul.mubr.f32.gmra.mrb[0].mxu0 %v1077
    %v1158 = vpop.f32.mrb[0].mxu0
    %v1159 = vadd.f32 0.0, %v1158
    %v1160 = vpop.f32.mrb[0].mxu0
    %1161 = vmatprep.mubr.f32.mxu0 0.0
    %1162 = vmatmul.mubr.f32.gmra.mrb[0].mxu0 %v1080
    %v1163 = vpop.f32.mrb[0].mxu0
    %v1164 = vadd.f32 0.0, %v1163
    %v1165 = vpop.f32.mrb[0].mxu0
    %1166 = vdwg.mxu0
    %v1167 = vld [vmem:[%s6] sm:$0xff]
    %v1168 = vld [vmem:[%s6 + $0x8] sm:$0xff]
    %v1169 = vld [vmem:[%s6 + $0x10] sm:$0xff]
    %v1170 = vld [vmem:[%s6 + $0x18] sm:$0xff]
    %v1171 = vld [vmem:[%s6 + $0x20] sm:$0xff]
    %v1172 = vld [vmem:[%s6 + $0x28] sm:$0xff]
    %v1173 = vld [vmem:[%s6 + $0x30] sm:$0xff]
    %v1174 = vld [vmem:[%s6 + $0x38] sm:$0xff]
    %v1175 = vld [vmem:[%s7] sm:$0x1]
    %v1177 = vlaneseq
    %v1178 = vshrl.u32 %v1177, 7
    %v1179 = vsub.s32 0, %v1178
    %v1180 = vrot.slane %v1175, %v1179
    %v1183 = vsel %vm520, %v363, 0
    %v1186 = vsel %vm520, %v368, 0
    %1188 = vmatprep.subr.mxu0 0.0
    %1189 = vmatpush1.msra.mxu0 %v1167
    %1190 = vmatprep.subr.mxu0 0.0
    %1191 = vmatpush1.msra.mxu0 %v1168
    %1192 = vmatprep.subr.mxu0 0.0
    %1193 = vmatpush1.msra.mxu0 %v1169
    %1194 = vmatprep.subr.mxu0 0.0
    %1195 = vmatpush1.msra.mxu0 %v1170
    %1196 = vmatprep.subr.mxu0 0.0
    %1197 = vmatpush1.msra.mxu0 %v1171
    %1198 = vmatprep.subr.mxu0 0.0
    %1199 = vmatpush1.msra.mxu0 %v1172
    %1200 = vmatprep.subr.mxu0 0.0
    %1201 = vmatpush1.msra.mxu0 %v1173
    %1202 = vmatprep.subr.mxu0 0.0
    %1203 = vmatpush1.msra.mxu0 %v1174
    %1204 = vmatprep.subr.mxu0 0.0
    %1205 = vmatpush1.msra.mxu0 0.0
    %1206 = vmatprep.subr.mxu0 0.0
    %1207 = vmatpush1.msra.mxu0 0.0
    %1208 = vmatprep.subr.mxu0 0.0
    %1209 = vmatpush1.msra.mxu0 0.0
    %1210 = vmatprep.subr.mxu0 0.0
    %1211 = vmatpush1.msra.mxu0 0.0
    %1212 = vmatprep.subr.mxu0 0.0
    %1213 = vmatpush1.msra.mxu0 0.0
    %1214 = vmatprep.subr.mxu0 0.0
    %1215 = vmatpush1.msra.mxu0 0.0
    %1216 = vmatprep.subr.mxu0 0.0
    %1217 = vmatpush1.msra.mxu0 0.0
    %1218 = vmatprep.subr.mxu0 0.0
    %1219 = vmatpush1.msra.mxu0 0.0
    %1220 = vmatprep.subr.mxu0 0.0
    %1221 = vmatpush1.msra.mxu0 0.0
    %1222 = vmatprep.subr.mxu0 0.0
    %1223 = vmatpush1.msra.mxu0 0.0
    %1224 = vmatprep.subr.mxu0 0.0
    %1225 = vmatpush1.msra.mxu0 0.0
    %1226 = vmatprep.subr.mxu0 0.0
    %1227 = vmatpush1.msra.mxu0 0.0
    %1228 = vmatprep.subr.mxu0 0.0
    %1229 = vmatpush1.msra.mxu0 0.0
    %1230 = vmatprep.subr.mxu0 0.0
    %1231 = vmatpush1.msra.mxu0 0.0
    %1232 = vmatprep.subr.mxu0 0.0
    %1233 = vmatpush1.msra.mxu0 0.0
    %1234 = vmatprep.subr.mxu0 0.0
    %1235 = vmatpush1.msra.mxu0 0.0
    %1236 = vmatprep.subr.mxu0 0.0
    %1237 = vmatpush1.msra.mxu0 0.0
    %1238 = vmatprep.subr.mxu0 0.0
    %1239 = vmatpush1.msra.mxu0 0.0
    %1240 = vmatprep.subr.mxu0 0.0
    %1241 = vmatpush1.msra.mxu0 0.0
    %1242 = vmatprep.subr.mxu0 0.0
    %1243 = vmatpush1.msra.mxu0 0.0
    %1244 = vmatprep.subr.mxu0 0.0
    %1245 = vmatpush1.msra.mxu0 0.0
    %1246 = vmatprep.subr.mxu0 0.0
    %1247 = vmatpush1.msra.mxu0 0.0
    %1248 = vmatprep.subr.mxu0 0.0
    %1249 = vmatpush1.msra.mxu0 0.0
    %1250 = vmatprep.subr.mxu0 0.0
    %1251 = vmatpush1.msra.mxu0 0.0
    %1252 = vmatprep.mubr.f32.mxu0 0.0
    %1253 = vmatmul.mubr.f32.gmra.mrb[0].mxu0 %v1183
    %v1254 = vpop.f32.mrb[0].mxu0
    %v1255 = vadd.f32 %v1180, %v1254
    %v1256 = vpop.f32.mrb[0].mxu0
    %1257 = vmatprep.mubr.f32.mxu0 0.0
    %1258 = vmatmul.mubr.f32.gmra.mrb[0].mxu0 %v1186
    %v1259 = vpop.f32.mrb[0].mxu0
    %v1260 = vadd.f32 %v1180, %v1259
    %v1261 = vpop.f32.mrb[0].mxu0
    %1262 = vdwg.mxu0
    %v1263 = vmax.f32 %v1255, 0.0
    %v1264 = vmax.f32 %v1260, 0.0
    %v1265 = vld [vmem:[#allocation5] sm:$0xff]
    %v1266 = vld [vmem:[#allocation5 + $0x8] sm:$0xff]
    %v1267 = vld [vmem:[#allocation5 + $0x10] sm:$0xff]
    %v1268 = vld [vmem:[#allocation5 + $0x18] sm:$0xff]
    %v1269 = vld [vmem:[#allocation5 + $0x20] sm:$0xff]
    %v1270 = vld [vmem:[#allocation5 + $0x28] sm:$0xff]
    %v1271 = vld [vmem:[#allocation5 + $0x30] sm:$0xff]
    %v1272 = vld [vmem:[#allocation5 + $0x38] sm:$0xff]
    %v1273 = vld [vmem:[%s9] sm:$0x1]
    %v1275 = vlaneseq
    %v1276 = vshrl.u32 %v1275, 7
    %v1277 = vsub.s32 0, %v1276
    %v1278 = vrot.slane %v1273, %v1277
    %v1281 = vsel %vm520, %v1263, 0
    %v1284 = vsel %vm520, %v1264, 0
    %1286 = vmatprep.subr.mxu0 0.0
    %1287 = vmatpush1.msra.mxu0 %v1265
    %1288 = vmatprep.subr.mxu0 0.0
    %1289 = vmatpush1.msra.mxu0 %v1266
    %1290 = vmatprep.subr.mxu0 0.0
    %1291 = vmatpush1.msra.mxu0 %v1267
    %1292 = vmatprep.subr.mxu0 0.0
    %1293 = vmatpush1.msra.mxu0 %v1268
    %1294 = vmatprep.subr.mxu0 0.0
    %1295 = vmatpush1.msra.mxu0 %v1269
    %1296 = vmatprep.subr.mxu0 0.0
    %1297 = vmatpush1.msra.mxu0 %v1270
    %1298 = vmatprep.subr.mxu0 0.0
    %1299 = vmatpush1.msra.mxu0 %v1271
    %1300 = vmatprep.subr.mxu0 0.0
    %1301 = vmatpush1.msra.mxu0 %v1272
    %1302 = vmatprep.subr.mxu0 0.0
    %1303 = vmatpush1.msra.mxu0 0.0
    %1304 = vmatprep.subr.mxu0 0.0
    %1305 = vmatpush1.msra.mxu0 0.0
    %1306 = vmatprep.subr.mxu0 0.0
    %1307 = vmatpush1.msra.mxu0 0.0
    %1308 = vmatprep.subr.mxu0 0.0
    %1309 = vmatpush1.msra.mxu0 0.0
    %1310 = vmatprep.subr.mxu0 0.0
    %1311 = vmatpush1.msra.mxu0 0.0
    %1312 = vmatprep.subr.mxu0 0.0
    %1313 = vmatpush1.msra.mxu0 0.0
    %1314 = vmatprep.subr.mxu0 0.0
    %1315 = vmatpush1.msra.mxu0 0.0
    %1316 = vmatprep.subr.mxu0 0.0
    %1317 = vmatpush1.msra.mxu0 0.0
    %1318 = vmatprep.subr.mxu0 0.0
    %1319 = vmatpush1.msra.mxu0 0.0
    %1320 = vmatprep.subr.mxu0 0.0
    %1321 = vmatpush1.msra.mxu0 0.0
    %1322 = vmatprep.subr.mxu0 0.0
    %1323 = vmatpush1.msra.mxu0 0.0
    %1324 = vmatprep.subr.mxu0 0.0
    %1325 = vmatpush1.msra.mxu0 0.0
    %1326 = vmatprep.subr.mxu0 0.0
    %1327 = vmatpush1.msra.mxu0 0.0
    %1328 = vmatprep.subr.mxu0 0.0
    %1329 = vmatpush1.msra.mxu0 0.0
    %1330 = vmatprep.subr.mxu0 0.0
    %1331 = vmatpush1.msra.mxu0 0.0
    %1332 = vmatprep.subr.mxu0 0.0
    %1333 = vmatpush1.msra.mxu0 0.0
    %1334 = vmatprep.subr.mxu0 0.0
    %1335 = vmatpush1.msra.mxu0 0.0
    %1336 = vmatprep.subr.mxu0 0.0
    %1337 = vmatpush1.msra.mxu0 0.0
    %1338 = vmatprep.subr.mxu0 0.0
    %1339 = vmatpush1.msra.mxu0 0.0
    %1340 = vmatprep.subr.mxu0 0.0
    %1341 = vmatpush1.msra.mxu0 0.0
    %1342 = vmatprep.subr.mxu0 0.0
    %1343 = vmatpush1.msra.mxu0 0.0
    %1344 = vmatprep.subr.mxu0 0.0
    %1345 = vmatpush1.msra.mxu0 0.0
    %1346 = vmatprep.subr.mxu0 0.0
    %1347 = vmatpush1.msra.mxu0 0.0
    %1348 = vmatprep.subr.mxu0 0.0
    %1349 = vmatpush1.msra.mxu0 0.0
    %1350 = vmatprep.mubr.f32.mxu0 0.0
    %1351 = vmatmul.mubr.f32.gmra.mrb[0].mxu0 %v1281
    %v1352 = vpop.f32.mrb[0].mxu0
    %v1353 = vadd.f32 %v1278, %v1352
    %v1354 = vpop.f32.mrb[0].mxu0
    %1355 = vmatprep.mubr.f32.mxu0 0.0
    %1356 = vmatmul.mubr.f32.gmra.mrb[0].mxu0 %v1284
    %v1357 = vpop.f32.mrb[0].mxu0
    %v1358 = vadd.f32 %v1278, %v1357
    %v1359 = vpop.f32.mrb[0].mxu0
    %1360 = vdwg.mxu0
    %v1361 = vld [vmem:[#allocation10] sm:$0xff]
    %v1362 = vld [vmem:[#allocation10 + $0x8] sm:$0xff]
    %v1363 = vld [vmem:[#allocation10 + $0x10] sm:$0xff]
    %v1364 = vld [vmem:[#allocation10 + $0x18] sm:$0xff]
    %v1365 = vld [vmem:[#allocation10 + $0x20] sm:$0xff]
    %v1366 = vld [vmem:[#allocation10 + $0x28] sm:$0xff]
    %v1367 = vld [vmem:[#allocation10 + $0x30] sm:$0xff]
    %v1368 = vld [vmem:[#allocation10 + $0x38] sm:$0xff]
    %v1370 = vsel %vm520, %v1353, 0
    %v1373 = vsel %vm520, %v1358, 0
    %1375 = vmatprep.subr.mxu0 0.0
    %1376 = vmatpush1.msra.mxu0 %v1361
    %1377 = vmatprep.subr.mxu0 0.0
    %1378 = vmatpush1.msra.mxu0 %v1362
    %1379 = vmatprep.subr.mxu0 0.0
    %1380 = vmatpush1.msra.mxu0 %v1363
    %1381 = vmatprep.subr.mxu0 0.0
    %1382 = vmatpush1.msra.mxu0 %v1364
    %1383 = vmatprep.subr.mxu0 0.0
    %1384 = vmatpush1.msra.mxu0 %v1365
    %1385 = vmatprep.subr.mxu0 0.0
    %1386 = vmatpush1.msra.mxu0 %v1366
    %1387 = vmatprep.subr.mxu0 0.0
    %1388 = vmatpush1.msra.mxu0 %v1367
    %1389 = vmatprep.subr.mxu0 0.0
    %1390 = vmatpush1.msra.mxu0 %v1368
    %1391 = vmatprep.subr.mxu0 0.0
    %1392 = vmatpush1.msra.mxu0 0.0
    %1393 = vmatprep.subr.mxu0 0.0
    %1394 = vmatpush1.msra.mxu0 0.0
    %1395 = vmatprep.subr.mxu0 0.0
    %1396 = vmatpush1.msra.mxu0 0.0
    %1397 = vmatprep.subr.mxu0 0.0
    %1398 = vmatpush1.msra.mxu0 0.0
    %1399 = vmatprep.subr.mxu0 0.0
    %1400 = vmatpush1.msra.mxu0 0.0
    %1401 = vmatprep.subr.mxu0 0.0
    %1402 = vmatpush1.msra.mxu0 0.0
    %1403 = vmatprep.subr.mxu0 0.0
    %1404 = vmatpush1.msra.mxu0 0.0
    %1405 = vmatprep.subr.mxu0 0.0
    %1406 = vmatpush1.msra.mxu0 0.0
    %1407 = vmatprep.subr.mxu0 0.0
    %1408 = vmatpush1.msra.mxu0 0.0
    %1409 = vmatprep.subr.mxu0 0.0
    %1410 = vmatpush1.msra.mxu0 0.0
    %1411 = vmatprep.subr.mxu0 0.0
    %1412 = vmatpush1.msra.mxu0 0.0
    %1413 = vmatprep.subr.mxu0 0.0
    %1414 = vmatpush1.msra.mxu0 0.0
    %1415 = vmatprep.subr.mxu0 0.0
    %1416 = vmatpush1.msra.mxu0 0.0
    %1417 = vmatprep.subr.mxu0 0.0
    %1418 = vmatpush1.msra.mxu0 0.0
    %1419 = vmatprep.subr.mxu0 0.0
    %1420 = vmatpush1.msra.mxu0 0.0
    %1421 = vmatprep.subr.mxu0 0.0
    %1422 = vmatpush1.msra.mxu0 0.0
    %1423 = vmatprep.subr.mxu0 0.0
    %1424 = vmatpush1.msra.mxu0 0.0
    %1425 = vmatprep.subr.mxu0 0.0
    %1426 = vmatpush1.msra.mxu0 0.0
    %1427 = vmatprep.subr.mxu0 0.0
    %1428 = vmatpush1.msra.mxu0 0.0
    %1429 = vmatprep.subr.mxu0 0.0
    %1430 = vmatpush1.msra.mxu0 0.0
    %1431 = vmatprep.subr.mxu0 0.0
    %1432 = vmatpush1.msra.mxu0 0.0
    %1433 = vmatprep.subr.mxu0 0.0
    %1434 = vmatpush1.msra.mxu0 0.0
    %1435 = vmatprep.subr.mxu0 0.0
    %1436 = vmatpush1.msra.mxu0 0.0
    %1437 = vmatprep.subr.mxu0 0.0
    %1438 = vmatpush1.msra.mxu0 0.0
    %1439 = vmatprep.mubr.f32.mxu0 0.0
    %1440 = vmatmul.mubr.f32.gmra.mrb[0].mxu0 %v1370
    %v1441 = vpop.f32.mrb[0].mxu0
    %v1442 = vadd.f32 0.0, %v1441
    %v1443 = vpop.f32.mrb[0].mxu0
    %1444 = vmatprep.mubr.f32.mxu0 0.0
    %1445 = vmatmul.mubr.f32.gmra.mrb[0].mxu0 %v1373
    %v1446 = vpop.f32.mrb[0].mxu0
    %v1447 = vadd.f32 0.0, %v1446
    %v1448 = vpop.f32.mrb[0].mxu0
    %1449 = vdwg.mxu0
    %vm1450 = vcmask 130048
    %v1452 = vsel %vm1450, %v247, 0
    %v1455 = vsel %vm1450, %v248, 0
    %v1458 = vsel %vm1450, %v249, 0
    %v1461 = vsel %vm1450, %v250, 0
    %1463 = vmatprep.subr.mxu0 0.0
    %1464 = vmatpush1.msra.mxu0 %v1442
    %1465 = vmatprep.subr.mxu0 0.0
    %1466 = vmatpush1.msra.mxu0 %v1447
    %1467 = vmatprep.subr.mxu0 0.0
    %1468 = vmatpush1.msra.mxu0 0.0
    %1469 = vmatprep.subr.mxu0 0.0
    %1470 = vmatpush1.msra.mxu0 0.0
    %1471 = vmatprep.subr.mxu0 0.0
    %1472 = vmatpush1.msra.mxu0 0.0
    %1473 = vmatprep.subr.mxu0 0.0
    %1474 = vmatpush1.msra.mxu0 0.0
    %1475 = vmatprep.subr.mxu0 0.0
    %1476 = vmatpush1.msra.mxu0 0.0
    %1477 = vmatprep.subr.mxu0 0.0
    %1478 = vmatpush1.msra.mxu0 0.0
    %1479 = vmatprep.subr.mxu0 0.0
    %1480 = vmatpush1.msra.mxu0 0.0
    %1481 = vmatprep.subr.mxu0 0.0
    %1482 = vmatpush1.msra.mxu0 0.0
    %1483 = vmatprep.subr.mxu0 0.0
    %1484 = vmatpush1.msra.mxu0 0.0
    %1485 = vmatprep.subr.mxu0 0.0
    %1486 = vmatpush1.msra.mxu0 0.0
    %1487 = vmatprep.subr.mxu0 0.0
    %1488 = vmatpush1.msra.mxu0 0.0
    %1489 = vmatprep.subr.mxu0 0.0
    %1490 = vmatpush1.msra.mxu0 0.0
    %1491 = vmatprep.subr.mxu0 0.0
    %1492 = vmatpush1.msra.mxu0 0.0
    %1493 = vmatprep.subr.mxu0 0.0
    %1494 = vmatpush1.msra.mxu0 0.0
    %1495 = vmatprep.subr.mxu0 0.0
    %1496 = vmatpush1.msra.mxu0 0.0
    %1497 = vmatprep.subr.mxu0 0.0
    %1498 = vmatpush1.msra.mxu0 0.0
    %1499 = vmatprep.subr.mxu0 0.0
    %1500 = vmatpush1.msra.mxu0 0.0
    %1501 = vmatprep.subr.mxu0 0.0
    %1502 = vmatpush1.msra.mxu0 0.0
    %1503 = vmatprep.subr.mxu0 0.0
    %1504 = vmatpush1.msra.mxu0 0.0
    %1505 = vmatprep.subr.mxu0 0.0
    %1506 = vmatpush1.msra.mxu0 0.0
    %1507 = vmatprep.subr.mxu0 0.0
    %1508 = vmatpush1.msra.mxu0 0.0
    %1509 = vmatprep.subr.mxu0 0.0
    %1510 = vmatpush1.msra.mxu0 0.0
    %1511 = vmatprep.subr.mxu0 0.0
    %1512 = vmatpush1.msra.mxu0 0.0
    %1513 = vmatprep.subr.mxu0 0.0
    %1514 = vmatpush1.msra.mxu0 0.0
    %1515 = vmatprep.subr.mxu0 0.0
    %1516 = vmatpush1.msra.mxu0 0.0
    %1517 = vmatprep.subr.mxu0 0.0
    %1518 = vmatpush1.msra.mxu0 0.0
    %1519 = vmatprep.subr.mxu0 0.0
    %1520 = vmatpush1.msra.mxu0 0.0
    %1521 = vmatprep.subr.mxu0 0.0
    %1522 = vmatpush1.msra.mxu0 0.0
    %1523 = vmatprep.subr.mxu0 0.0
    %1524 = vmatpush1.msra.mxu0 0.0
    %1525 = vmatprep.subr.mxu0 0.0
    %1526 = vmatpush1.msra.mxu0 0.0
    %1527 = vmatprep.mubr.f32.mxu0 0.0
    %1528 = vmatmul.mubr.f32.gmra.mrb[0].mxu0 %v1452
    %v1529 = vpop.f32.mrb[0].mxu0
    %v1530 = vadd.f32 %v705, %v1529
    %v1531 = vpop.f32.mrb[0].mxu0
    %1532 = vmatprep.mubr.f32.mxu0 0.0
    %1533 = vmatmul.mubr.f32.gmra.mrb[0].mxu0 %v1455
    %v1534 = vpop.f32.mrb[0].mxu0
    %v1535 = vadd.f32 %v710, %v1534
    %v1536 = vpop.f32.mrb[0].mxu0
    %1537 = vmatprep.mubr.f32.mxu0 0.0
    %1538 = vmatmul.mubr.f32.gmra.mrb[0].mxu0 %v1458
    %v1539 = vpop.f32.mrb[0].mxu0
    %v1540 = vadd.f32 %v715, %v1539
    %v1541 = vpop.f32.mrb[0].mxu0
    %1542 = vmatprep.mubr.f32.mxu0 0.0
    %1543 = vmatmul.mubr.f32.gmra.mrb[0].mxu0 %v1461
    %v1544 = vpop.f32.mrb[0].mxu0
    %v1545 = vadd.f32 %v720, %v1544
    %v1546 = vpop.f32.mrb[0].mxu0
    %1547 = vdwg.mxu0
    %v1548 = vld [vmem:[#allocation13] sm:$0x1]
    %v1550 = vlaneseq
    %v1551 = vshrl.u32 %v1550, 7
    %v1552 = vsub.s32 0, %v1551
    %v1553 = vrot.slane %v1548, %v1552
    %v1555 = vadd.f32 %v1530, %v1553
    %v1556 = vadd.f32 %v1535, %v1553
    %v1557 = vadd.f32 %v1540, %v1553
    %v1558 = vadd.f32 %v1545, %v1553
    %v1559 = vmax.f32 %v1555, 0.0
    %v1560 = vmax.f32 %v1556, 0.0
    %v1561 = vmax.f32 %v1557, 0.0
    %v1562 = vmax.f32 %v1558, 0.0
    %v1564 = vsel %vm264, %v262, 0
    %v1567 = vsel %vm264, %v263, 0
    %1569 = vmatprep.subr.mxu0 0.0
    %1570 = vmatpush1.msra.mxu0 %v1559
    %1571 = vmatprep.subr.mxu0 0.0
    %1572 = vmatpush1.msra.mxu0 %v1560
    %1573 = vmatprep.subr.mxu0 0.0
    %1574 = vmatpush1.msra.mxu0 %v1561
    %1575 = vmatprep.subr.mxu0 0.0
    %1576 = vmatpush1.msra.mxu0 %v1562
    %1577 = vmatprep.subr.mxu0 0.0
    %1578 = vmatpush1.msra.mxu0 0.0
    %1579 = vmatprep.subr.mxu0 0.0
    %1580 = vmatpush1.msra.mxu0 0.0
    %1581 = vmatprep.subr.mxu0 0.0
    %1582 = vmatpush1.msra.mxu0 0.0
    %1583 = vmatprep.subr.mxu0 0.0
    %1584 = vmatpush1.msra.mxu0 0.0
    %1585 = vmatprep.subr.mxu0 0.0
    %1586 = vmatpush1.msra.mxu0 0.0
    %1587 = vmatprep.subr.mxu0 0.0
    %1588 = vmatpush1.msra.mxu0 0.0
    %1589 = vmatprep.subr.mxu0 0.0
    %1590 = vmatpush1.msra.mxu0 0.0
    %1591 = vmatprep.subr.mxu0 0.0
    %1592 = vmatpush1.msra.mxu0 0.0
    %1593 = vmatprep.subr.mxu0 0.0
    %1594 = vmatpush1.msra.mxu0 0.0
    %1595 = vmatprep.subr.mxu0 0.0
    %1596 = vmatpush1.msra.mxu0 0.0
    %1597 = vmatprep.subr.mxu0 0.0
    %1598 = vmatpush1.msra.mxu0 0.0
    %1599 = vmatprep.subr.mxu0 0.0
    %1600 = vmatpush1.msra.mxu0 0.0
    %1601 = vmatprep.subr.mxu0 0.0
    %1602 = vmatpush1.msra.mxu0 0.0
    %1603 = vmatprep.subr.mxu0 0.0
    %1604 = vmatpush1.msra.mxu0 0.0
    %1605 = vmatprep.subr.mxu0 0.0
    %1606 = vmatpush1.msra.mxu0 0.0
    %1607 = vmatprep.subr.mxu0 0.0
    %1608 = vmatpush1.msra.mxu0 0.0
    %1609 = vmatprep.subr.mxu0 0.0
    %1610 = vmatpush1.msra.mxu0 0.0
    %1611 = vmatprep.subr.mxu0 0.0
    %1612 = vmatpush1.msra.mxu0 0.0
    %1613 = vmatprep.subr.mxu0 0.0
    %1614 = vmatpush1.msra.mxu0 0.0
    %1615 = vmatprep.subr.mxu0 0.0
    %1616 = vmatpush1.msra.mxu0 0.0
    %1617 = vmatprep.subr.mxu0 0.0
    %1618 = vmatpush1.msra.mxu0 0.0
    %1619 = vmatprep.subr.mxu0 0.0
    %1620 = vmatpush1.msra.mxu0 0.0
    %1621 = vmatprep.subr.mxu0 0.0
    %1622 = vmatpush1.msra.mxu0 0.0
    %1623 = vmatprep.subr.mxu0 0.0
    %1624 = vmatpush1.msra.mxu0 0.0
    %1625 = vmatprep.subr.mxu0 0.0
    %1626 = vmatpush1.msra.mxu0 0.0
    %1627 = vmatprep.subr.mxu0 0.0
    %1628 = vmatpush1.msra.mxu0 0.0
    %1629 = vmatprep.subr.mxu0 0.0
    %1630 = vmatpush1.msra.mxu0 0.0
    %1631 = vmatprep.subr.mxu0 0.0
    %1632 = vmatpush1.msra.mxu0 0.0
    %1633 = vmatprep.mubr.f32.mxu0 0.0
    %1634 = vmatmul.mubr.f32.gmra.mrb[0].mxu0 %v1564
    %v1635 = vpop.f32.mrb[0].mxu0
    %v1636 = vadd.f32 0.0, %v1635
    %v1637 = vpop.f32.mrb[0].mxu0
    %1638 = vmatprep.mubr.f32.mxu0 0.0
    %1639 = vmatmul.mubr.f32.gmra.mrb[0].mxu0 %v1567
    %v1640 = vpop.f32.mrb[0].mxu0
    %v1641 = vadd.f32 0.0, %v1640
    %v1642 = vpop.f32.mrb[0].mxu0
    %1643 = vdwg.mxu0
    %v1644 = vld [vmem:[#allocation14] sm:$0xff]
    %v1645 = vld [vmem:[#allocation14 + $0x8] sm:$0xff]
    %v1646 = vld [vmem:[#allocation14 + $0x10] sm:$0xff]
    %v1647 = vld [vmem:[#allocation14 + $0x18] sm:$0xff]
    %v1648 = vld [vmem:[#allocation14 + $0x20] sm:$0xff]
    %v1649 = vld [vmem:[#allocation14 + $0x28] sm:$0xff]
    %v1650 = vld [vmem:[#allocation14 + $0x30] sm:$0xff]
    %v1651 = vld [vmem:[#allocation14 + $0x38] sm:$0xff]
    %v1653 = vsel %vm520, %v1636, 0
    %v1656 = vsel %vm520, %v1641, 0
    %1658 = vmatprep.subr.mxu0 0.0
    %1659 = vmatpush1.msra.mxu0 %v1644
    %1660 = vmatprep.subr.mxu0 0.0
    %1661 = vmatpush1.msra.mxu0 %v1645
    %1662 = vmatprep.subr.mxu0 0.0
    %1663 = vmatpush1.msra.mxu0 %v1646
    %1664 = vmatprep.subr.mxu0 0.0
    %1665 = vmatpush1.msra.mxu0 %v1647
    %1666 = vmatprep.subr.mxu0 0.0
    %1667 = vmatpush1.msra.mxu0 %v1648
    %1668 = vmatprep.subr.mxu0 0.0
    %1669 = vmatpush1.msra.mxu0 %v1649
    %1670 = vmatprep.subr.mxu0 0.0
    %1671 = vmatpush1.msra.mxu0 %v1650
    %1672 = vmatprep.subr.mxu0 0.0
    %1673 = vmatpush1.msra.mxu0 %v1651
    %1674 = vmatprep.subr.mxu0 0.0
    %1675 = vmatpush1.msra.mxu0 0.0
    %1676 = vmatprep.subr.mxu0 0.0
    %1677 = vmatpush1.msra.mxu0 0.0
    %1678 = vmatprep.subr.mxu0 0.0
    %1679 = vmatpush1.msra.mxu0 0.0
    %1680 = vmatprep.subr.mxu0 0.0
    %1681 = vmatpush1.msra.mxu0 0.0
    %1682 = vmatprep.subr.mxu0 0.0
    %1683 = vmatpush1.msra.mxu0 0.0
    %1684 = vmatprep.subr.mxu0 0.0
    %1685 = vmatpush1.msra.mxu0 0.0
    %1686 = vmatprep.subr.mxu0 0.0
    %1687 = vmatpush1.msra.mxu0 0.0
    %1688 = vmatprep.subr.mxu0 0.0
    %1689 = vmatpush1.msra.mxu0 0.0
    %1690 = vmatprep.subr.mxu0 0.0
    %1691 = vmatpush1.msra.mxu0 0.0
    %1692 = vmatprep.subr.mxu0 0.0
    %1693 = vmatpush1.msra.mxu0 0.0
    %1694 = vmatprep.subr.mxu0 0.0
    %1695 = vmatpush1.msra.mxu0 0.0
    %1696 = vmatprep.subr.mxu0 0.0
    %1697 = vmatpush1.msra.mxu0 0.0
    %1698 = vmatprep.subr.mxu0 0.0
    %1699 = vmatpush1.msra.mxu0 0.0
    %1700 = vmatprep.subr.mxu0 0.0
    %1701 = vmatpush1.msra.mxu0 0.0
    %1702 = vmatprep.subr.mxu0 0.0
    %1703 = vmatpush1.msra.mxu0 0.0
    %1704 = vmatprep.subr.mxu0 0.0
    %1705 = vmatpush1.msra.mxu0 0.0
    %1706 = vmatprep.subr.mxu0 0.0
    %1707 = vmatpush1.msra.mxu0 0.0
    %1708 = vmatprep.subr.mxu0 0.0
    %1709 = vmatpush1.msra.mxu0 0.0
    %1710 = vmatprep.subr.mxu0 0.0
    %1711 = vmatpush1.msra.mxu0 0.0
    %1712 = vmatprep.subr.mxu0 0.0
    %1713 = vmatpush1.msra.mxu0 0.0
    %1714 = vmatprep.subr.mxu0 0.0
    %1715 = vmatpush1.msra.mxu0 0.0
    %1716 = vmatprep.subr.mxu0 0.0
    %1717 = vmatpush1.msra.mxu0 0.0
    %1718 = vmatprep.subr.mxu0 0.0
    %1719 = vmatpush1.msra.mxu0 0.0
    %1720 = vmatprep.subr.mxu0 0.0
    %1721 = vmatpush1.msra.mxu0 0.0
    %1722 = vmatprep.mubr.f32.mxu0 0.0
    %1723 = vmatmul.mubr.f32.gmra.mrb[0].mxu0 %v1653
    %v1724 = vpop.f32.mrb[0].mxu0
    %v1725 = vadd.f32 0.0, %v1724
    %v1726 = vpop.f32.mrb[0].mxu0
    %1727 = vmatprep.mubr.f32.mxu0 0.0
    %1728 = vmatmul.mubr.f32.gmra.mrb[0].mxu0 %v1656
    %v1729 = vpop.f32.mrb[0].mxu0
    %v1730 = vadd.f32 0.0, %v1729
    %v1731 = vpop.f32.mrb[0].mxu0
    %1732 = vdwg.mxu0
    %v1733 = vmul.f32 %v1725, %v274
    %v1734 = vmul.f32 %v1730, %v276
    %v1735 = vld [vmem:[#allocation16] sm:$0x1]
    %v1737 = vlaneseq
    %v1738 = vshrl.u32 %v1737, 7
    %v1739 = vsub.s32 0, %v1738
    %v1740 = vrot.slane %v1735, %v1739
    %v1742 = vmul.f32 %v277, %v1740
    %v1743 = vmul.f32 %v278, %v1740
    %v1744 = vadd.f32 %v1733, %v1742
    %v1745 = vadd.f32 %v1734, %v1743
    %v1746 = vadd.f32 %v1744, %v1353
    %v1747 = vadd.f32 %v1745, %v1358
    %v1748 = vld [vmem:[#allocation17] sm:$0x1]
    %v1750 = vlaneseq
    %v1751 = vshrl.u32 %v1750, 7
    %v1752 = vsub.s32 0, %v1751
    %v1753 = vrot.slane %v1748, %v1752
    %v1755 = vmul.f32 %v1746, %v1753
    %v1756 = vmul.f32 %v1747, %v1753
    %v1757 = vld [vmem:[#allocation19] sm:$0x1]
    %v1759 = vlaneseq
    %v1760 = vshrl.u32 %v1759, 7
    %v1761 = vsub.s32 0, %v1760
    %v1762 = vrot.slane %v1757, %v1761
    %v1764 = vadd.f32 %v1755, %v1762
    %v1765 = vadd.f32 %v1756, %v1762
    %v1766 = vmax.f32 %v1764, 0.0
    %v1767 = vmax.f32 %v1765, 0.0
    %v1768 = vadd.f32 %v363, %v1766
    %v1769 = vadd.f32 %v368, %v1767
    %s1770 = scalar_lea.vmem %s6, 64
    %v1771 = vld [vmem:[%s1770] sm:$0xff]
    %v1772 = vld [vmem:[%s1770 + $0x8] sm:$0xff]
    %v1773 = vld [vmem:[%s1770 + $0x10] sm:$0xff]
    %v1774 = vld [vmem:[%s1770 + $0x18] sm:$0xff]
    %v1775 = vld [vmem:[%s1770 + $0x20] sm:$0xff]
    %v1776 = vld [vmem:[%s1770 + $0x28] sm:$0xff]
    %v1777 = vld [vmem:[%s1770 + $0x30] sm:$0xff]
    %v1778 = vld [vmem:[%s1770 + $0x38] sm:$0xff]
    %s1779 = scalar_lea.vmem %s7, 1
    %v1780 = vld [vmem:[%s1779] sm:$0x1]
    %v1782 = vlaneseq
    %v1783 = vshrl.u32 %v1782, 7
    %v1784 = vsub.s32 0, %v1783
    %v1785 = vrot.slane %v1780, %v1784
    %v1788 = vsel %vm520, %v1768, 0
    %v1791 = vsel %vm520, %v1769, 0
    %1793 = vmatprep.subr.mxu0 0.0
    %1794 = vmatpush1.msra.mxu0 %v1771
    %1795 = vmatprep.subr.mxu0 0.0
    %1796 = vmatpush1.msra.mxu0 %v1772
    %1797 = vmatprep.subr.mxu0 0.0
    %1798 = vmatpush1.msra.mxu0 %v1773
    %1799 = vmatprep.subr.mxu0 0.0
    %1800 = vmatpush1.msra.mxu0 %v1774
    %1801 = vmatprep.subr.mxu0 0.0
    %1802 = vmatpush1.msra.mxu0 %v1775
    %1803 = vmatprep.subr.mxu0 0.0
    %1804 = vmatpush1.msra.mxu0 %v1776
    %1805 = vmatprep.subr.mxu0 0.0
    %1806 = vmatpush1.msra.mxu0 %v1777
    %1807 = vmatprep.subr.mxu0 0.0
    %1808 = vmatpush1.msra.mxu0 %v1778
    %1809 = vmatprep.subr.mxu0 0.0
    %1810 = vmatpush1.msra.mxu0 0.0
    %1811 = vmatprep.subr.mxu0 0.0
    %1812 = vmatpush1.msra.mxu0 0.0
    %1813 = vmatprep.subr.mxu0 0.0
    %1814 = vmatpush1.msra.mxu0 0.0
    %1815 = vmatprep.subr.mxu0 0.0
    %1816 = vmatpush1.msra.mxu0 0.0
    %1817 = vmatprep.subr.mxu0 0.0
    %1818 = vmatpush1.msra.mxu0 0.0
    %1819 = vmatprep.subr.mxu0 0.0
    %1820 = vmatpush1.msra.mxu0 0.0
    %1821 = vmatprep.subr.mxu0 0.0
    %1822 = vmatpush1.msra.mxu0 0.0
    %1823 = vmatprep.subr.mxu0 0.0
    %1824 = vmatpush1.msra.mxu0 0.0
    %1825 = vmatprep.subr.mxu0 0.0
    %1826 = vmatpush1.msra.mxu0 0.0
    %1827 = vmatprep.subr.mxu0 0.0
    %1828 = vmatpush1.msra.mxu0 0.0
    %1829 = vmatprep.subr.mxu0 0.0
    %1830 = vmatpush1.msra.mxu0 0.0
    %1831 = vmatprep.subr.mxu0 0.0
    %1832 = vmatpush1.msra.mxu0 0.0
    %1833 = vmatprep.subr.mxu0 0.0
    %1834 = vmatpush1.msra.mxu0 0.0
    %1835 = vmatprep.subr.mxu0 0.0
    %1836 = vmatpush1.msra.mxu0 0.0
    %1837 = vmatprep.subr.mxu0 0.0
    %1838 = vmatpush1.msra.mxu0 0.0
    %1839 = vmatprep.subr.mxu0 0.0
    %1840 = vmatpush1.msra.mxu0 0.0
    %1841 = vmatprep.subr.mxu0 0.0
    %1842 = vmatpush1.msra.mxu0 0.0
    %1843 = vmatprep.subr.mxu0 0.0
    %1844 = vmatpush1.msra.mxu0 0.0
    %1845 = vmatprep.subr.mxu0 0.0
    %1846 = vmatpush1.msra.mxu0 0.0
    %1847 = vmatprep.subr.mxu0 0.0
    %1848 = vmatpush1.msra.mxu0 0.0
    %1849 = vmatprep.subr.mxu0 0.0
    %1850 = vmatpush1.msra.mxu0 0.0
    %1851 = vmatprep.subr.mxu0 0.0
    %1852 = vmatpush1.msra.mxu0 0.0
    %1853 = vmatprep.subr.mxu0 0.0
    %1854 = vmatpush1.msra.mxu0 0.0
    %1855 = vmatprep.subr.mxu0 0.0
    %1856 = vmatpush1.msra.mxu0 0.0
    %1857 = vmatprep.mubr.f32.mxu0 0.0
    %1858 = vmatmul.mubr.f32.gmra.mrb[0].mxu0 %v1788
    %v1859 = vpop.f32.mrb[0].mxu0
    %v1860 = vadd.f32 %v1785, %v1859
    %v1861 = vpop.f32.mrb[0].mxu0
    %1862 = vmatprep.mubr.f32.mxu0 0.0
    %1863 = vmatmul.mubr.f32.gmra.mrb[0].mxu0 %v1791
    %v1864 = vpop.f32.mrb[0].mxu0
    %v1865 = vadd.f32 %v1785, %v1864
    %v1866 = vpop.f32.mrb[0].mxu0
    %1867 = vdwg.mxu0
    %v1868 = vmax.f32 %v1860, 0.0
    %v1869 = vmax.f32 %v1865, 0.0
    %s1870 = scalar_lea.vmem [#allocation5], 64
    %v1871 = vld [vmem:[%s1870] sm:$0xff]
    %v1872 = vld [vmem:[%s1870 + $0x8] sm:$0xff]
    %v1873 = vld [vmem:[%s1870 + $0x10] sm:$0xff]
    %v1874 = vld [vmem:[%s1870 + $0x18] sm:$0xff]
    %v1875 = vld [vmem:[%s1870 + $0x20] sm:$0xff]
    %v1876 = vld [vmem:[%s1870 + $0x28] sm:$0xff]
    %v1877 = vld [vmem:[%s1870 + $0x30] sm:$0xff]
    %v1878 = vld [vmem:[%s1870 + $0x38] sm:$0xff]
    %s1879 = scalar_lea.vmem %s9, 1
    %v1880 = vld [vmem:[%s1879] sm:$0x1]
    %v1882 = vlaneseq
    %v1883 = vshrl.u32 %v1882, 7
    %v1884 = vsub.s32 0, %v1883
    %v1885 = vrot.slane %v1880, %v1884
    %v1888 = vsel %vm520, %v1868, 0
    %v1891 = vsel %vm520, %v1869, 0
    %1893 = vmatprep.subr.mxu0 0.0
    %1894 = vmatpush1.msra.mxu0 %v1871
    %1895 = vmatprep.subr.mxu0 0.0
    %1896 = vmatpush1.msra.mxu0 %v1872
    %1897 = vmatprep.subr.mxu0 0.0
    %1898 = vmatpush1.msra.mxu0 %v1873
    %1899 = vmatprep.subr.mxu0 0.0
    %1900 = vmatpush1.msra.mxu0 %v1874
    %1901 = vmatprep.subr.mxu0 0.0
    %1902 = vmatpush1.msra.mxu0 %v1875
    %1903 = vmatprep.subr.mxu0 0.0
    %1904 = vmatpush1.msra.mxu0 %v1876
    %1905 = vmatprep.subr.mxu0 0.0
    %1906 = vmatpush1.msra.mxu0 %v1877
    %1907 = vmatprep.subr.mxu0 0.0
    %1908 = vmatpush1.msra.mxu0 %v1878
    %1909 = vmatprep.subr.mxu0 0.0
    %1910 = vmatpush1.msra.mxu0 0.0
    %1911 = vmatprep.subr.mxu0 0.0
    %1912 = vmatpush1.msra.mxu0 0.0
    %1913 = vmatprep.subr.mxu0 0.0
    %1914 = vmatpush1.msra.mxu0 0.0
    %1915 = vmatprep.subr.mxu0 0.0
    %1916 = vmatpush1.msra.mxu0 0.0
    %1917 = vmatprep.subr.mxu0 0.0
    %1918 = vmatpush1.msra.mxu0 0.0
    %1919 = vmatprep.subr.mxu0 0.0
    %1920 = vmatpush1.msra.mxu0 0.0
    %1921 = vmatprep.subr.mxu0 0.0
    %1922 = vmatpush1.msra.mxu0 0.0
    %1923 = vmatprep.subr.mxu0 0.0
    %1924 = vmatpush1.msra.mxu0 0.0
    %1925 = vmatprep.subr.mxu0 0.0
    %1926 = vmatpush1.msra.mxu0 0.0
    %1927 = vmatprep.subr.mxu0 0.0
    %1928 = vmatpush1.msra.mxu0 0.0
    %1929 = vmatprep.subr.mxu0 0.0
    %1930 = vmatpush1.msra.mxu0 0.0
    %1931 = vmatprep.subr.mxu0 0.0
    %1932 = vmatpush1.msra.mxu0 0.0
    %1933 = vmatprep.subr.mxu0 0.0
    %1934 = vmatpush1.msra.mxu0 0.0
    %1935 = vmatprep.subr.mxu0 0.0
    %1936 = vmatpush1.msra.mxu0 0.0
    %1937 = vmatprep.subr.mxu0 0.0
    %1938 = vmatpush1.msra.mxu0 0.0
    %1939 = vmatprep.subr.mxu0 0.0
    %1940 = vmatpush1.msra.mxu0 0.0
    %1941 = vmatprep.subr.mxu0 0.0
    %1942 = vmatpush1.msra.mxu0 0.0
    %1943 = vmatprep.subr.mxu0 0.0
    %1944 = vmatpush1.msra.mxu0 0.0
    %1945 = vmatprep.subr.mxu0 0.0
    %1946 = vmatpush1.msra.mxu0 0.0
    %1947 = vmatprep.subr.mxu0 0.0
    %1948 = vmatpush1.msra.mxu0 0.0
    %1949 = vmatprep.subr.mxu0 0.0
    %1950 = vmatpush1.msra.mxu0 0.0
    %1951 = vmatprep.subr.mxu0 0.0
    %1952 = vmatpush1.msra.mxu0 0.0
    %1953 = vmatprep.subr.mxu0 0.0
    %1954 = vmatpush1.msra.mxu0 0.0
    %1955 = vmatprep.subr.mxu0 0.0
    %1956 = vmatpush1.msra.mxu0 0.0
    %1957 = vmatprep.mubr.f32.mxu0 0.0
    %1958 = vmatmul.mubr.f32.gmra.mrb[0].mxu0 %v1888
    %v1959 = vpop.f32.mrb[0].mxu0
    %v1960 = vadd.f32 %v1885, %v1959
    %v1961 = vpop.f32.mrb[0].mxu0
    %1962 = vmatprep.mubr.f32.mxu0 0.0
    %1963 = vmatmul.mubr.f32.gmra.mrb[0].mxu0 %v1891
    %v1964 = vpop.f32.mrb[0].mxu0
    %v1965 = vadd.f32 %v1885, %v1964
    %v1966 = vpop.f32.mrb[0].mxu0
    %1967 = vdwg.mxu0
    %s1968 = scalar_lea.vmem [#allocation10], 64
    %v1969 = vld [vmem:[%s1968] sm:$0xff]
    %v1970 = vld [vmem:[%s1968 + $0x8] sm:$0xff]
    %v1971 = vld [vmem:[%s1968 + $0x10] sm:$0xff]
    %v1972 = vld [vmem:[%s1968 + $0x18] sm:$0xff]
    %v1973 = vld [vmem:[%s1968 + $0x20] sm:$0xff]
    %v1974 = vld [vmem:[%s1968 + $0x28] sm:$0xff]
    %v1975 = vld [vmem:[%s1968 + $0x30] sm:$0xff]
    %v1976 = vld [vmem:[%s1968 + $0x38] sm:$0xff]
    %v1978 = vsel %vm520, %v1960, 0
    %v1981 = vsel %vm520, %v1965, 0
    %1983 = vmatprep.subr.mxu0 0.0
    %1984 = vmatpush1.msra.mxu0 %v1969
    %1985 = vmatprep.subr.mxu0 0.0
    %1986 = vmatpush1.msra.mxu0 %v1970
    %1987 = vmatprep.subr.mxu0 0.0
    %1988 = vmatpush1.msra.mxu0 %v1971
    %1989 = vmatprep.subr.mxu0 0.0
    %1990 = vmatpush1.msra.mxu0 %v1972
    %1991 = vmatprep.subr.mxu0 0.0
    %1992 = vmatpush1.msra.mxu0 %v1973
    %1993 = vmatprep.subr.mxu0 0.0
    %1994 = vmatpush1.msra.mxu0 %v1974
    %1995 = vmatprep.subr.mxu0 0.0
    %1996 = vmatpush1.msra.mxu0 %v1975
    %1997 = vmatprep.subr.mxu0 0.0
    %1998 = vmatpush1.msra.mxu0 %v1976
    %1999 = vmatprep.subr.mxu0 0.0
    %2000 = vmatpush1.msra.mxu0 0.0
    %2001 = vmatprep.subr.mxu0 0.0
    %2002 = vmatpush1.msra.mxu0 0.0
    %2003 = vmatprep.subr.mxu0 0.0
    %2004 = vmatpush1.msra.mxu0 0.0
    %2005 = vmatprep.subr.mxu0 0.0
    %2006 = vmatpush1.msra.mxu0 0.0
    %2007 = vmatprep.subr.mxu0 0.0
    %2008 = vmatpush1.msra.mxu0 0.0
    %2009 = vmatprep.subr.mxu0 0.0
    %2010 = vmatpush1.msra.mxu0 0.0
    %2011 = vmatprep.subr.mxu0 0.0
    %2012 = vmatpush1.msra.mxu0 0.0
    %2013 = vmatprep.subr.mxu0 0.0
    %2014 = vmatpush1.msra.mxu0 0.0
    %2015 = vmatprep.subr.mxu0 0.0
    %2016 = vmatpush1.msra.mxu0 0.0
    %2017 = vmatprep.subr.mxu0 0.0
    %2018 = vmatpush1.msra.mxu0 0.0
    %2019 = vmatprep.subr.mxu0 0.0
    %2020 = vmatpush1.msra.mxu0 0.0
    %2021 = vmatprep.subr.mxu0 0.0
    %2022 = vmatpush1.msra.mxu0 0.0
    %2023 = vmatprep.subr.mxu0 0.0
    %2024 = vmatpush1.msra.mxu0 0.0
    %2025 = vmatprep.subr.mxu0 0.0
    %2026 = vmatpush1.msra.mxu0 0.0
    %2027 = vmatprep.subr.mxu0 0.0
    %2028 = vmatpush1.msra.mxu0 0.0
    %2029 = vmatprep.subr.mxu0 0.0
    %2030 = vmatpush1.msra.mxu0 0.0
    %2031 = vmatprep.subr.mxu0 0.0
    %2032 = vmatpush1.msra.mxu0 0.0
    %2033 = vmatprep.subr.mxu0 0.0
    %2034 = vmatpush1.msra.mxu0 0.0
    %2035 = vmatprep.subr.mxu0 0.0
    %2036 = vmatpush1.msra.mxu0 0.0
    %2037 = vmatprep.subr.mxu0 0.0
    %2038 = vmatpush1.msra.mxu0 0.0
    %2039 = vmatprep.subr.mxu0 0.0
    %2040 = vmatpush1.msra.mxu0 0.0
    %2041 = vmatprep.subr.mxu0 0.0
    %2042 = vmatpush1.msra.mxu0 0.0
    %2043 = vmatprep.subr.mxu0 0.0
    %2044 = vmatpush1.msra.mxu0 0.0
    %2045 = vmatprep.subr.mxu0 0.0
    %2046 = vmatpush1.msra.mxu0 0.0
    %2047 = vmatprep.mubr.f32.mxu0 0.0
    %2048 = vmatmul.mubr.f32.gmra.mrb[0].mxu0 %v1978
    %v2049 = vpop.f32.mrb[0].mxu0
    %v2050 = vadd.f32 0.0, %v2049
    %v2051 = vpop.f32.mrb[0].mxu0
    %2052 = vmatprep.mubr.f32.mxu0 0.0
    %2053 = vmatmul.mubr.f32.gmra.mrb[0].mxu0 %v1981
    %v2054 = vpop.f32.mrb[0].mxu0
    %v2055 = vadd.f32 0.0, %v2054
    %v2056 = vpop.f32.mrb[0].mxu0
    %2057 = vdwg.mxu0
    %2058 = vmatprep.subr.mxu0 0.0
    %2059 = vmatpush1.msra.mxu0 %v2050
    %2060 = vmatprep.subr.mxu0 0.0
    %2061 = vmatpush1.msra.mxu0 %v2055
    %2062 = vmatprep.subr.mxu0 0.0
    %2063 = vmatpush1.msra.mxu0 0.0
    %2064 = vmatprep.subr.mxu0 0.0
    %2065 = vmatpush1.msra.mxu0 0.0
    %2066 = vmatprep.subr.mxu0 0.0
    %2067 = vmatpush1.msra.mxu0 0.0
    %2068 = vmatprep.subr.mxu0 0.0
    %2069 = vmatpush1.msra.mxu0 0.0
    %2070 = vmatprep.subr.mxu0 0.0
    %2071 = vmatpush1.msra.mxu0 0.0
    %2072 = vmatprep.subr.mxu0 0.0
    %2073 = vmatpush1.msra.mxu0 0.0
    %2074 = vmatprep.subr.mxu0 0.0
    %2075 = vmatpush1.msra.mxu0 0.0
    %2076 = vmatprep.subr.mxu0 0.0
    %2077 = vmatpush1.msra.mxu0 0.0
    %2078 = vmatprep.subr.mxu0 0.0
    %2079 = vmatpush1.msra.mxu0 0.0
    %2080 = vmatprep.subr.mxu0 0.0
    %2081 = vmatpush1.msra.mxu0 0.0
    %2082 = vmatprep.subr.mxu0 0.0
    %2083 = vmatpush1.msra.mxu0 0.0
    %2084 = vmatprep.subr.mxu0 0.0
    %2085 = vmatpush1.msra.mxu0 0.0
    %2086 = vmatprep.subr.mxu0 0.0
    %2087 = vmatpush1.msra.mxu0 0.0
    %2088 = vmatprep.subr.mxu0 0.0
    %2089 = vmatpush1.msra.mxu0 0.0
    %2090 = vmatprep.subr.mxu0 0.0
    %2091 = vmatpush1.msra.mxu0 0.0
    %2092 = vmatprep.subr.mxu0 0.0
    %2093 = vmatpush1.msra.mxu0 0.0
    %2094 = vmatprep.subr.mxu0 0.0
    %2095 = vmatpush1.msra.mxu0 0.0
    %2096 = vmatprep.subr.mxu0 0.0
    %2097 = vmatpush1.msra.mxu0 0.0
    %2098 = vmatprep.subr.mxu0 0.0
    %2099 = vmatpush1.msra.mxu0 0.0
    %2100 = vmatprep.subr.mxu0 0.0
    %2101 = vmatpush1.msra.mxu0 0.0
    %2102 = vmatprep.subr.mxu0 0.0
    %2103 = vmatpush1.msra.mxu0 0.0
    %2104 = vmatprep.subr.mxu0 0.0
    %2105 = vmatpush1.msra.mxu0 0.0
    %2106 = vmatprep.subr.mxu0 0.0
    %2107 = vmatpush1.msra.mxu0 0.0
    %2108 = vmatprep.subr.mxu0 0.0
    %2109 = vmatpush1.msra.mxu0 0.0
    %2110 = vmatprep.subr.mxu0 0.0
    %2111 = vmatpush1.msra.mxu0 0.0
    %2112 = vmatprep.subr.mxu0 0.0
    %2113 = vmatpush1.msra.mxu0 0.0
    %2114 = vmatprep.subr.mxu0 0.0
    %2115 = vmatpush1.msra.mxu0 0.0
    %2116 = vmatprep.subr.mxu0 0.0
    %2117 = vmatpush1.msra.mxu0 0.0
    %2118 = vmatprep.subr.mxu0 0.0
    %2119 = vmatpush1.msra.mxu0 0.0
    %2120 = vmatprep.subr.mxu0 0.0
    %2121 = vmatpush1.msra.mxu0 0.0
    %2122 = vmatprep.mubr.f32.mxu0 0.0
    %2123 = vmatmul.mubr.f32.gmra.mrb[0].mxu0 %v1452
    %v2124 = vpop.f32.mrb[0].mxu0
    %v2125 = vadd.f32 %v929, %v2124
    %v2126 = vpop.f32.mrb[0].mxu0
    %2127 = vmatprep.mubr.f32.mxu0 0.0
    %2128 = vmatmul.mubr.f32.gmra.mrb[0].mxu0 %v1455
    %v2129 = vpop.f32.mrb[0].mxu0
    %v2130 = vadd.f32 %v934, %v2129
    %v2131 = vpop.f32.mrb[0].mxu0
    %2132 = vmatprep.mubr.f32.mxu0 0.0
    %2133 = vmatmul.mubr.f32.gmra.mrb[0].mxu0 %v1458
    %v2134 = vpop.f32.mrb[0].mxu0
    %v2135 = vadd.f32 %v939, %v2134
    %v2136 = vpop.f32.mrb[0].mxu0
    %2137 = vmatprep.mubr.f32.mxu0 0.0
    %2138 = vmatmul.mubr.f32.gmra.mrb[0].mxu0 %v1461
    %v2139 = vpop.f32.mrb[0].mxu0
    %v2140 = vadd.f32 %v944, %v2139
    %v2141 = vpop.f32.mrb[0].mxu0
    %2142 = vdwg.mxu0
    %s2143 = scalar_lea.vmem [#allocation13], 1
    %v2144 = vld [vmem:[%s2143] sm:$0x1]
    %v2146 = vlaneseq
    %v2147 = vshrl.u32 %v2146, 7
    %v2148 = vsub.s32 0, %v2147
    %v2149 = vrot.slane %v2144, %v2148
    %v2151 = vadd.f32 %v2125, %v2149
    %v2152 = vadd.f32 %v2130, %v2149
    %v2153 = vadd.f32 %v2135, %v2149
    %v2154 = vadd.f32 %v2140, %v2149
    %v2155 = vmax.f32 %v2151, 0.0
    %v2156 = vmax.f32 %v2152, 0.0
    %v2157 = vmax.f32 %v2153, 0.0
    %v2158 = vmax.f32 %v2154, 0.0
    %2159 = vmatprep.subr.mxu0 0.0
    %2160 = vmatpush1.msra.mxu0 %v2155
    %2161 = vmatprep.subr.mxu0 0.0
    %2162 = vmatpush1.msra.mxu0 %v2156
    %2163 = vmatprep.subr.mxu0 0.0
    %2164 = vmatpush1.msra.mxu0 %v2157
    %2165 = vmatprep.subr.mxu0 0.0
    %2166 = vmatpush1.msra.mxu0 %v2158
    %2167 = vmatprep.subr.mxu0 0.0
    %2168 = vmatpush1.msra.mxu0 0.0
    %2169 = vmatprep.subr.mxu0 0.0
    %2170 = vmatpush1.msra.mxu0 0.0
    %2171 = vmatprep.subr.mxu0 0.0
    %2172 = vmatpush1.msra.mxu0 0.0
    %2173 = vmatprep.subr.mxu0 0.0
    %2174 = vmatpush1.msra.mxu0 0.0
    %2175 = vmatprep.subr.mxu0 0.0
    %2176 = vmatpush1.msra.mxu0 0.0
    %2177 = vmatprep.subr.mxu0 0.0
    %2178 = vmatpush1.msra.mxu0 0.0
    %2179 = vmatprep.subr.mxu0 0.0
    %2180 = vmatpush1.msra.mxu0 0.0
    %2181 = vmatprep.subr.mxu0 0.0
    %2182 = vmatpush1.msra.mxu0 0.0
    %2183 = vmatprep.subr.mxu0 0.0
    %2184 = vmatpush1.msra.mxu0 0.0
    %2185 = vmatprep.subr.mxu0 0.0
    %2186 = vmatpush1.msra.mxu0 0.0
    %2187 = vmatprep.subr.mxu0 0.0
    %2188 = vmatpush1.msra.mxu0 0.0
    %2189 = vmatprep.subr.mxu0 0.0
    %2190 = vmatpush1.msra.mxu0 0.0
    %2191 = vmatprep.subr.mxu0 0.0
    %2192 = vmatpush1.msra.mxu0 0.0
    %2193 = vmatprep.subr.mxu0 0.0
    %2194 = vmatpush1.msra.mxu0 0.0
    %2195 = vmatprep.subr.mxu0 0.0
    %2196 = vmatpush1.msra.mxu0 0.0
    %2197 = vmatprep.subr.mxu0 0.0
    %2198 = vmatpush1.msra.mxu0 0.0
    %2199 = vmatprep.subr.mxu0 0.0
    %2200 = vmatpush1.msra.mxu0 0.0
    %2201 = vmatprep.subr.mxu0 0.0
    %2202 = vmatpush1.msra.mxu0 0.0
    %2203 = vmatprep.subr.mxu0 0.0
    %2204 = vmatpush1.msra.mxu0 0.0
    %2205 = vmatprep.subr.mxu0 0.0
    %2206 = vmatpush1.msra.mxu0 0.0
    %2207 = vmatprep.subr.mxu0 0.0
    %2208 = vmatpush1.msra.mxu0 0.0
    %2209 = vmatprep.subr.mxu0 0.0
    %2210 = vmatpush1.msra.mxu0 0.0
    %2211 = vmatprep.subr.mxu0 0.0
    %2212 = vmatpush1.msra.mxu0 0.0
    %2213 = vmatprep.subr.mxu0 0.0
    %2214 = vmatpush1.msra.mxu0 0.0
    %2215 = vmatprep.subr.mxu0 0.0
    %2216 = vmatpush1.msra.mxu0 0.0
    %2217 = vmatprep.subr.mxu0 0.0
    %2218 = vmatpush1.msra.mxu0 0.0
    %2219 = vmatprep.subr.mxu0 0.0
    %2220 = vmatpush1.msra.mxu0 0.0
    %2221 = vmatprep.subr.mxu0 0.0
    %2222 = vmatpush1.msra.mxu0 0.0
    %2223 = vmatprep.mubr.f32.mxu0 0.0
    %2224 = vmatmul.mubr.f32.gmra.mrb[0].mxu0 %v1564
    %v2225 = vpop.f32.mrb[0].mxu0
    %v2226 = vadd.f32 0.0, %v2225
    %v2227 = vpop.f32.mrb[0].mxu0
    %2228 = vmatprep.mubr.f32.mxu0 0.0
    %2229 = vmatmul.mubr.f32.gmra.mrb[0].mxu0 %v1567
    %v2230 = vpop.f32.mrb[0].mxu0
    %v2231 = vadd.f32 0.0, %v2230
    %v2232 = vpop.f32.mrb[0].mxu0
    %2233 = vdwg.mxu0
    %s2234 = scalar_lea.vmem [#allocation14], 64
    %v2235 = vld [vmem:[%s2234] sm:$0xff]
    %v2236 = vld [vmem:[%s2234 + $0x8] sm:$0xff]
    %v2237 = vld [vmem:[%s2234 + $0x10] sm:$0xff]
    %v2238 = vld [vmem:[%s2234 + $0x18] sm:$0xff]
    %v2239 = vld [vmem:[%s2234 + $0x20] sm:$0xff]
    %v2240 = vld [vmem:[%s2234 + $0x28] sm:$0xff]
    %v2241 = vld [vmem:[%s2234 + $0x30] sm:$0xff]
    %v2242 = vld [vmem:[%s2234 + $0x38] sm:$0xff]
    %v2244 = vsel %vm520, %v2226, 0
    %v2247 = vsel %vm520, %v2231, 0
    %2249 = vmatprep.subr.mxu0 0.0
    %2250 = vmatpush1.msra.mxu0 %v2235
    %2251 = vmatprep.subr.mxu0 0.0
    %2252 = vmatpush1.msra.mxu0 %v2236
    %2253 = vmatprep.subr.mxu0 0.0
    %2254 = vmatpush1.msra.mxu0 %v2237
    %2255 = vmatprep.subr.mxu0 0.0
    %2256 = vmatpush1.msra.mxu0 %v2238
    %2257 = vmatprep.subr.mxu0 0.0
    %2258 = vmatpush1.msra.mxu0 %v2239
    %2259 = vmatprep.subr.mxu0 0.0
    %2260 = vmatpush1.msra.mxu0 %v2240
    %2261 = vmatprep.subr.mxu0 0.0
    %2262 = vmatpush1.msra.mxu0 %v2241
    %2263 = vmatprep.subr.mxu0 0.0
    %2264 = vmatpush1.msra.mxu0 %v2242
    %2265 = vmatprep.subr.mxu0 0.0
    %2266 = vmatpush1.msra.mxu0 0.0
    %2267 = vmatprep.subr.mxu0 0.0
    %2268 = vmatpush1.msra.mxu0 0.0
    %2269 = vmatprep.subr.mxu0 0.0
    %2270 = vmatpush1.msra.mxu0 0.0
    %2271 = vmatprep.subr.mxu0 0.0
    %2272 = vmatpush1.msra.mxu0 0.0
    %2273 = vmatprep.subr.mxu0 0.0
    %2274 = vmatpush1.msra.mxu0 0.0
    %2275 = vmatprep.subr.mxu0 0.0
    %2276 = vmatpush1.msra.mxu0 0.0
    %2277 = vmatprep.subr.mxu0 0.0
    %2278 = vmatpush1.msra.mxu0 0.0
    %2279 = vmatprep.subr.mxu0 0.0
    %2280 = vmatpush1.msra.mxu0 0.0
    %2281 = vmatprep.subr.mxu0 0.0
    %2282 = vmatpush1.msra.mxu0 0.0
    %2283 = vmatprep.subr.mxu0 0.0
    %2284 = vmatpush1.msra.mxu0 0.0
    %2285 = vmatprep.subr.mxu0 0.0
    %2286 = vmatpush1.msra.mxu0 0.0
    %2287 = vmatprep.subr.mxu0 0.0
    %2288 = vmatpush1.msra.mxu0 0.0
    %2289 = vmatprep.subr.mxu0 0.0
    %2290 = vmatpush1.msra.mxu0 0.0
    %2291 = vmatprep.subr.mxu0 0.0
    %2292 = vmatpush1.msra.mxu0 0.0
    %2293 = vmatprep.subr.mxu0 0.0
    %2294 = vmatpush1.msra.mxu0 0.0
    %2295 = vmatprep.subr.mxu0 0.0
    %2296 = vmatpush1.msra.mxu0 0.0
    %2297 = vmatprep.subr.mxu0 0.0
    %2298 = vmatpush1.msra.mxu0 0.0
    %2299 = vmatprep.subr.mxu0 0.0
    %2300 = vmatpush1.msra.mxu0 0.0
    %2301 = vmatprep.subr.mxu0 0.0
    %2302 = vmatpush1.msra.mxu0 0.0
    %2303 = vmatprep.subr.mxu0 0.0
    %2304 = vmatpush1.msra.mxu0 0.0
    %2305 = vmatprep.subr.mxu0 0.0
    %2306 = vmatpush1.msra.mxu0 0.0
    %2307 = vmatprep.subr.mxu0 0.0
    %2308 = vmatpush1.msra.mxu0 0.0
    %2309 = vmatprep.subr.mxu0 0.0
    %2310 = vmatpush1.msra.mxu0 0.0
    %2311 = vmatprep.subr.mxu0 0.0
    %2312 = vmatpush1.msra.mxu0 0.0
    %2313 = vmatprep.mubr.f32.mxu0 0.0
    %2314 = vmatmul.mubr.f32.gmra.mrb[0].mxu0 %v2244
    %v2315 = vpop.f32.mrb[0].mxu0
    %v2316 = vadd.f32 0.0, %v2315
    %v2317 = vpop.f32.mrb[0].mxu0
    %2318 = vmatprep.mubr.f32.mxu0 0.0
    %2319 = vmatmul.mubr.f32.gmra.mrb[0].mxu0 %v2247
    %v2320 = vpop.f32.mrb[0].mxu0
    %v2321 = vadd.f32 0.0, %v2320
    %v2322 = vpop.f32.mrb[0].mxu0
    %2323 = vdwg.mxu0
    %v2324 = vmul.f32 %v2316, %v274
    %v2325 = vmul.f32 %v2321, %v276
    %s2326 = scalar_lea.vmem [#allocation16], 1
    %v2327 = vld [vmem:[%s2326] sm:$0x1]
    %v2329 = vlaneseq
    %v2330 = vshrl.u32 %v2329, 7
    %v2331 = vsub.s32 0, %v2330
    %v2332 = vrot.slane %v2327, %v2331
    %v2334 = vmul.f32 %v277, %v2332
    %v2335 = vmul.f32 %v278, %v2332
    %v2336 = vadd.f32 %v2324, %v2334
    %v2337 = vadd.f32 %v2325, %v2335
    %v2338 = vadd.f32 %v2336, %v1960
    %v2339 = vadd.f32 %v2337, %v1965
    %s2340 = scalar_lea.vmem [#allocation17], 1
    %v2341 = vld [vmem:[%s2340] sm:$0x1]
    %v2343 = vlaneseq
    %v2344 = vshrl.u32 %v2343, 7
    %v2345 = vsub.s32 0, %v2344
    %v2346 = vrot.slane %v2341, %v2345
    %v2348 = vmul.f32 %v2338, %v2346
    %v2349 = vmul.f32 %v2339, %v2346
    %s2350 = scalar_lea.vmem [#allocation19], 1
    %v2351 = vld [vmem:[%s2350] sm:$0x1]
    %v2353 = vlaneseq
    %v2354 = vshrl.u32 %v2353, 7
    %v2355 = vsub.s32 0, %v2354
    %v2356 = vrot.slane %v2351, %v2355
    %v2358 = vadd.f32 %v2348, %v2356
    %v2359 = vadd.f32 %v2349, %v2356
    %v2360 = vmax.f32 %v2358, 0.0
    %v2361 = vmax.f32 %v2359, 0.0
    %v2362 = vadd.f32 %v1768, %v2360
    %v2363 = vadd.f32 %v1769, %v2361
    %s2364 = scalar_lea.vmem %s6, 128
    %v2365 = vld [vmem:[%s2364] sm:$0xff]
    %v2366 = vld [vmem:[%s2364 + $0x8] sm:$0xff]
    %v2367 = vld [vmem:[%s2364 + $0x10] sm:$0xff]
    %v2368 = vld [vmem:[%s2364 + $0x18] sm:$0xff]
    %v2369 = vld [vmem:[%s2364 + $0x20] sm:$0xff]
    %v2370 = vld [vmem:[%s2364 + $0x28] sm:$0xff]
    %v2371 = vld [vmem:[%s2364 + $0x30] sm:$0xff]
    %v2372 = vld [vmem:[%s2364 + $0x38] sm:$0xff]
    %s2373 = scalar_lea.vmem %s7, 2
    %v2374 = vld [vmem:[%s2373] sm:$0x1]
    %v2376 = vlaneseq
    %v2377 = vshrl.u32 %v2376, 7
    %v2378 = vsub.s32 0, %v2377
    %v2379 = vrot.slane %v2374, %v2378
    %v2382 = vsel %vm520, %v2362, 0
    %v2385 = vsel %vm520, %v2363, 0
    %2387 = vmatprep.subr.mxu0 0.0
    %2388 = vmatpush1.msra.mxu0 %v2365
    %2389 = vmatprep.subr.mxu0 0.0
    %2390 = vmatpush1.msra.mxu0 %v2366
    %2391 = vmatprep.subr.mxu0 0.0
    %2392 = vmatpush1.msra.mxu0 %v2367
    %2393 = vmatprep.subr.mxu0 0.0
    %2394 = vmatpush1.msra.mxu0 %v2368
    %2395 = vmatprep.subr.mxu0 0.0
    %2396 = vmatpush1.msra.mxu0 %v2369
    %2397 = vmatprep.subr.mxu0 0.0
    %2398 = vmatpush1.msra.mxu0 %v2370
    %2399 = vmatprep.subr.mxu0 0.0
    %2400 = vmatpush1.msra.mxu0 %v2371
    %2401 = vmatprep.subr.mxu0 0.0
    %2402 = vmatpush1.msra.mxu0 %v2372
    %2403 = vmatprep.subr.mxu0 0.0
    %2404 = vmatpush1.msra.mxu0 0.0
    %2405 = vmatprep.subr.mxu0 0.0
    %2406 = vmatpush1.msra.mxu0 0.0
    %2407 = vmatprep.subr.mxu0 0.0
    %2408 = vmatpush1.msra.mxu0 0.0
    %2409 = vmatprep.subr.mxu0 0.0
    %2410 = vmatpush1.msra.mxu0 0.0
    %2411 = vmatprep.subr.mxu0 0.0
    %2412 = vmatpush1.msra.mxu0 0.0
    %2413 = vmatprep.subr.mxu0 0.0
    %2414 = vmatpush1.msra.mxu0 0.0
    %2415 = vmatprep.subr.mxu0 0.0
    %2416 = vmatpush1.msra.mxu0 0.0
    %2417 = vmatprep.subr.mxu0 0.0
    %2418 = vmatpush1.msra.mxu0 0.0
    %2419 = vmatprep.subr.mxu0 0.0
    %2420 = vmatpush1.msra.mxu0 0.0
    %2421 = vmatprep.subr.mxu0 0.0
    %2422 = vmatpush1.msra.mxu0 0.0
    %2423 = vmatprep.subr.mxu0 0.0
    %2424 = vmatpush1.msra.mxu0 0.0
    %2425 = vmatprep.subr.mxu0 0.0
    %2426 = vmatpush1.msra.mxu0 0.0
    %2427 = vmatprep.subr.mxu0 0.0
    %2428 = vmatpush1.msra.mxu0 0.0
    %2429 = vmatprep.subr.mxu0 0.0
    %2430 = vmatpush1.msra.mxu0 0.0
    %2431 = vmatprep.subr.mxu0 0.0
    %2432 = vmatpush1.msra.mxu0 0.0
    %2433 = vmatprep.subr.mxu0 0.0
    %2434 = vmatpush1.msra.mxu0 0.0
    %2435 = vmatprep.subr.mxu0 0.0
    %2436 = vmatpush1.msra.mxu0 0.0
    %2437 = vmatprep.subr.mxu0 0.0
    %2438 = vmatpush1.msra.mxu0 0.0
    %2439 = vmatprep.subr.mxu0 0.0
    %2440 = vmatpush1.msra.mxu0 0.0
    %2441 = vmatprep.subr.mxu0 0.0
    %2442 = vmatpush1.msra.mxu0 0.0
    %2443 = vmatprep.subr.mxu0 0.0
    %2444 = vmatpush1.msra.mxu0 0.0
    %2445 = vmatprep.subr.mxu0 0.0
    %2446 = vmatpush1.msra.mxu0 0.0
    %2447 = vmatprep.subr.mxu0 0.0
    %2448 = vmatpush1.msra.mxu0 0.0
    %2449 = vmatprep.subr.mxu0 0.0
    %2450 = vmatpush1.msra.mxu0 0.0
    %2451 = vmatprep.mubr.f32.mxu0 0.0
    %2452 = vmatmul.mubr.f32.gmra.mrb[0].mxu0 %v2382
    %v2453 = vpop.f32.mrb[0].mxu0
    %v2454 = vadd.f32 %v2379, %v2453
    %v2455 = vpop.f32.mrb[0].mxu0
    %2456 = vmatprep.mubr.f32.mxu0 0.0
    %2457 = vmatmul.mubr.f32.gmra.mrb[0].mxu0 %v2385
    %v2458 = vpop.f32.mrb[0].mxu0
    %v2459 = vadd.f32 %v2379, %v2458
    %v2460 = vpop.f32.mrb[0].mxu0
    %2461 = vdwg.mxu0
    %v2462 = vmax.f32 %v2454, 0.0
    %v2463 = vmax.f32 %v2459, 0.0
    %s2464 = scalar_lea.vmem [#allocation5], 128
    %v2465 = vld [vmem:[%s2464] sm:$0xff]
    %v2466 = vld [vmem:[%s2464 + $0x8] sm:$0xff]
    %v2467 = vld [vmem:[%s2464 + $0x10] sm:$0xff]
    %v2468 = vld [vmem:[%s2464 + $0x18] sm:$0xff]
    %v2469 = vld [vmem:[%s2464 + $0x20] sm:$0xff]
    %v2470 = vld [vmem:[%s2464 + $0x28] sm:$0xff]
    %v2471 = vld [vmem:[%s2464 + $0x30] sm:$0xff]
    %v2472 = vld [vmem:[%s2464 + $0x38] sm:$0xff]
    %s2473 = scalar_lea.vmem %s9, 2
    %v2474 = vld [vmem:[%s2473] sm:$0x1]
    %v2476 = vlaneseq
    %v2477 = vshrl.u32 %v2476, 7
    %v2478 = vsub.s32 0, %v2477
    %v2479 = vrot.slane %v2474, %v2478
    %v2482 = vsel %vm520, %v2462, 0
    %v2485 = vsel %vm520, %v2463, 0
    %2487 = vmatprep.subr.mxu0 0.0
    %2488 = vmatpush1.msra.mxu0 %v2465
    %2489 = vmatprep.subr.mxu0 0.0
    %2490 = vmatpush1.msra.mxu0 %v2466
    %2491 = vmatprep.subr.mxu0 0.0
    %2492 = vmatpush1.msra.mxu0 %v2467
    %2493 = vmatprep.subr.mxu0 0.0
    %2494 = vmatpush1.msra.mxu0 %v2468
    %2495 = vmatprep.subr.mxu0 0.0
    %2496 = vmatpush1.msra.mxu0 %v2469
    %2497 = vmatprep.subr.mxu0 0.0
    %2498 = vmatpush1.msra.mxu0 %v2470
    %2499 = vmatprep.subr.mxu0 0.0
    %2500 = vmatpush1.msra.mxu0 %v2471
    %2501 = vmatprep.subr.mxu0 0.0
    %2502 = vmatpush1.msra.mxu0 %v2472
    %2503 = vmatprep.subr.mxu0 0.0
    %2504 = vmatpush1.msra.mxu0 0.0
    %2505 = vmatprep.subr.mxu0 0.0
    %2506 = vmatpush1.msra.mxu0 0.0
    %2507 = vmatprep.subr.mxu0 0.0
    %2508 = vmatpush1.msra.mxu0 0.0
    %2509 = vmatprep.subr.mxu0 0.0
    %2510 = vmatpush1.msra.mxu0 0.0
    %2511 = vmatprep.subr.mxu0 0.0
    %2512 = vmatpush1.msra.mxu0 0.0
    %2513 = vmatprep.subr.mxu0 0.0
    %2514 = vmatpush1.msra.mxu0 0.0
    %2515 = vmatprep.subr.mxu0 0.0
    %2516 = vmatpush1.msra.mxu0 0.0
    %2517 = vmatprep.subr.mxu0 0.0
    %2518 = vmatpush1.msra.mxu0 0.0
    %2519 = vmatprep.subr.mxu0 0.0
    %2520 = vmatpush1.msra.mxu0 0.0
    %2521 = vmatprep.subr.mxu0 0.0
    %2522 = vmatpush1.msra.mxu0 0.0
    %2523 = vmatprep.subr.mxu0 0.0
    %2524 = vmatpush1.msra.mxu0 0.0
    %2525 = vmatprep.subr.mxu0 0.0
    %2526 = vmatpush1.msra.mxu0 0.0
    %2527 = vmatprep.subr.mxu0 0.0
    %2528 = vmatpush1.msra.mxu0 0.0
    %2529 = vmatprep.subr.mxu0 0.0
    %2530 = vmatpush1.msra.mxu0 0.0
    %2531 = vmatprep.subr.mxu0 0.0
    %2532 = vmatpush1.msra.mxu0 0.0
    %2533 = vmatprep.subr.mxu0 0.0
    %2534 = vmatpush1.msra.mxu0 0.0
    %2535 = vmatprep.subr.mxu0 0.0
    %2536 = vmatpush1.msra.mxu0 0.0
    %2537 = vmatprep.subr.mxu0 0.0
    %2538 = vmatpush1.msra.mxu0 0.0
    %2539 = vmatprep.subr.mxu0 0.0
    %2540 = vmatpush1.msra.mxu0 0.0
    %2541 = vmatprep.subr.mxu0 0.0
    %2542 = vmatpush1.msra.mxu0 0.0
    %2543 = vmatprep.subr.mxu0 0.0
    %2544 = vmatpush1.msra.mxu0 0.0
    %2545 = vmatprep.subr.mxu0 0.0
    %2546 = vmatpush1.msra.mxu0 0.0
    %2547 = vmatprep.subr.mxu0 0.0
    %2548 = vmatpush1.msra.mxu0 0.0
    %2549 = vmatprep.subr.mxu0 0.0
    %2550 = vmatpush1.msra.mxu0 0.0
    %2551 = vmatprep.mubr.f32.mxu0 0.0
    %2552 = vmatmul.mubr.f32.gmra.mrb[0].mxu0 %v2482
    %v2553 = vpop.f32.mrb[0].mxu0
    %v2554 = vadd.f32 %v2479, %v2553
    %v2555 = vpop.f32.mrb[0].mxu0
    %2556 = vmatprep.mubr.f32.mxu0 0.0
    %2557 = vmatmul.mubr.f32.gmra.mrb[0].mxu0 %v2485
    %v2558 = vpop.f32.mrb[0].mxu0
    %v2559 = vadd.f32 %v2479, %v2558
    %v2560 = vpop.f32.mrb[0].mxu0
    %2561 = vdwg.mxu0
    %s2562 = scalar_lea.vmem [#allocation10], 128
    %v2563 = vld [vmem:[%s2562] sm:$0xff]
    %v2564 = vld [vmem:[%s2562 + $0x8] sm:$0xff]
    %v2565 = vld [vmem:[%s2562 + $0x10] sm:$0xff]
    %v2566 = vld [vmem:[%s2562 + $0x18] sm:$0xff]
    %v2567 = vld [vmem:[%s2562 + $0x20] sm:$0xff]
    %v2568 = vld [vmem:[%s2562 + $0x28] sm:$0xff]
    %v2569 = vld [vmem:[%s2562 + $0x30] sm:$0xff]
    %v2570 = vld [vmem:[%s2562 + $0x38] sm:$0xff]
    %v2572 = vsel %vm520, %v2554, 0
    %v2575 = vsel %vm520, %v2559, 0
    %2577 = vmatprep.subr.mxu0 0.0
    %2578 = vmatpush1.msra.mxu0 %v2563
    %2579 = vmatprep.subr.mxu0 0.0
    %2580 = vmatpush1.msra.mxu0 %v2564
    %2581 = vmatprep.subr.mxu0 0.0
    %2582 = vmatpush1.msra.mxu0 %v2565
    %2583 = vmatprep.subr.mxu0 0.0
    %2584 = vmatpush1.msra.mxu0 %v2566
    %2585 = vmatprep.subr.mxu0 0.0
    %2586 = vmatpush1.msra.mxu0 %v2567
    %2587 = vmatprep.subr.mxu0 0.0
    %2588 = vmatpush1.msra.mxu0 %v2568
    %2589 = vmatprep.subr.mxu0 0.0
    %2590 = vmatpush1.msra.mxu0 %v2569
    %2591 = vmatprep.subr.mxu0 0.0
    %2592 = vmatpush1.msra.mxu0 %v2570
    %2593 = vmatprep.subr.mxu0 0.0
    %2594 = vmatpush1.msra.mxu0 0.0
    %2595 = vmatprep.subr.mxu0 0.0
    %2596 = vmatpush1.msra.mxu0 0.0
    %2597 = vmatprep.subr.mxu0 0.0
    %2598 = vmatpush1.msra.mxu0 0.0
    %2599 = vmatprep.subr.mxu0 0.0
    %2600 = vmatpush1.msra.mxu0 0.0
    %2601 = vmatprep.subr.mxu0 0.0
    %2602 = vmatpush1.msra.mxu0 0.0
    %2603 = vmatprep.subr.mxu0 0.0
    %2604 = vmatpush1.msra.mxu0 0.0
    %2605 = vmatprep.subr.mxu0 0.0
    %2606 = vmatpush1.msra.mxu0 0.0
    %2607 = vmatprep.subr.mxu0 0.0
    %2608 = vmatpush1.msra.mxu0 0.0
    %2609 = vmatprep.subr.mxu0 0.0
    %2610 = vmatpush1.msra.mxu0 0.0
    %2611 = vmatprep.subr.mxu0 0.0
    %2612 = vmatpush1.msra.mxu0 0.0
    %2613 = vmatprep.subr.mxu0 0.0
    %2614 = vmatpush1.msra.mxu0 0.0
    %2615 = vmatprep.subr.mxu0 0.0
    %2616 = vmatpush1.msra.mxu0 0.0
    %2617 = vmatprep.subr.mxu0 0.0
    %2618 = vmatpush1.msra.mxu0 0.0
    %2619 = vmatprep.subr.mxu0 0.0
    %2620 = vmatpush1.msra.mxu0 0.0
    %2621 = vmatprep.subr.mxu0 0.0
    %2622 = vmatpush1.msra.mxu0 0.0
    %2623 = vmatprep.subr.mxu0 0.0
    %2624 = vmatpush1.msra.mxu0 0.0
    %2625 = vmatprep.subr.mxu0 0.0
    %2626 = vmatpush1.msra.mxu0 0.0
    %2627 = vmatprep.subr.mxu0 0.0
    %2628 = vmatpush1.msra.mxu0 0.0
    %2629 = vmatprep.subr.mxu0 0.0
    %2630 = vmatpush1.msra.mxu0 0.0
    %2631 = vmatprep.subr.mxu0 0.0
    %2632 = vmatpush1.msra.mxu0 0.0
    %2633 = vmatprep.subr.mxu0 0.0
    %2634 = vmatpush1.msra.mxu0 0.0
    %2635 = vmatprep.subr.mxu0 0.0
    %2636 = vmatpush1.msra.mxu0 0.0
    %2637 = vmatprep.subr.mxu0 0.0
    %2638 = vmatpush1.msra.mxu0 0.0
    %2639 = vmatprep.subr.mxu0 0.0
    %2640 = vmatpush1.msra.mxu0 0.0
    %2641 = vmatprep.mubr.f32.mxu0 0.0
    %2642 = vmatmul.mubr.f32.gmra.mrb[0].mxu0 %v2572
    %v2643 = vpop.f32.mrb[0].mxu0
    %v2644 = vadd.f32 0.0, %v2643
    %v2645 = vpop.f32.mrb[0].mxu0
    %2646 = vmatprep.mubr.f32.mxu0 0.0
    %2647 = vmatmul.mubr.f32.gmra.mrb[0].mxu0 %v2575
    %v2648 = vpop.f32.mrb[0].mxu0
    %v2649 = vadd.f32 0.0, %v2648
    %v2650 = vpop.f32.mrb[0].mxu0
    %2651 = vdwg.mxu0
    %2652 = vmatprep.subr.mxu0 0.0
    %2653 = vmatpush1.msra.mxu0 %v2644
    %2654 = vmatprep.subr.mxu0 0.0
    %2655 = vmatpush1.msra.mxu0 %v2649
    %2656 = vmatprep.subr.mxu0 0.0
    %2657 = vmatpush1.msra.mxu0 0.0
    %2658 = vmatprep.subr.mxu0 0.0
    %2659 = vmatpush1.msra.mxu0 0.0
    %2660 = vmatprep.subr.mxu0 0.0
    %2661 = vmatpush1.msra.mxu0 0.0
    %2662 = vmatprep.subr.mxu0 0.0
    %2663 = vmatpush1.msra.mxu0 0.0
    %2664 = vmatprep.subr.mxu0 0.0
    %2665 = vmatpush1.msra.mxu0 0.0
    %2666 = vmatprep.subr.mxu0 0.0
    %2667 = vmatpush1.msra.mxu0 0.0
    %2668 = vmatprep.subr.mxu0 0.0
    %2669 = vmatpush1.msra.mxu0 0.0
    %2670 = vmatprep.subr.mxu0 0.0
    %2671 = vmatpush1.msra.mxu0 0.0
    %2672 = vmatprep.subr.mxu0 0.0
    %2673 = vmatpush1.msra.mxu0 0.0
    %2674 = vmatprep.subr.mxu0 0.0
    %2675 = vmatpush1.msra.mxu0 0.0
    %2676 = vmatprep.subr.mxu0 0.0
    %2677 = vmatpush1.msra.mxu0 0.0
    %2678 = vmatprep.subr.mxu0 0.0
    %2679 = vmatpush1.msra.mxu0 0.0
    %2680 = vmatprep.subr.mxu0 0.0
    %2681 = vmatpush1.msra.mxu0 0.0
    %2682 = vmatprep.subr.mxu0 0.0
    %2683 = vmatpush1.msra.mxu0 0.0
    %2684 = vmatprep.subr.mxu0 0.0
    %2685 = vmatpush1.msra.mxu0 0.0
    %2686 = vmatprep.subr.mxu0 0.0
    %2687 = vmatpush1.msra.mxu0 0.0
    %2688 = vmatprep.subr.mxu0 0.0
    %2689 = vmatpush1.msra.mxu0 0.0
    %2690 = vmatprep.subr.mxu0 0.0
    %2691 = vmatpush1.msra.mxu0 0.0
    %2692 = vmatprep.subr.mxu0 0.0
    %2693 = vmatpush1.msra.mxu0 0.0
    %2694 = vmatprep.subr.mxu0 0.0
    %2695 = vmatpush1.msra.mxu0 0.0
    %2696 = vmatprep.subr.mxu0 0.0
    %2697 = vmatpush1.msra.mxu0 0.0
    %2698 = vmatprep.subr.mxu0 0.0
    %2699 = vmatpush1.msra.mxu0 0.0
    %2700 = vmatprep.subr.mxu0 0.0
    %2701 = vmatpush1.msra.mxu0 0.0
    %2702 = vmatprep.subr.mxu0 0.0
    %2703 = vmatpush1.msra.mxu0 0.0
    %2704 = vmatprep.subr.mxu0 0.0
    %2705 = vmatpush1.msra.mxu0 0.0
    %2706 = vmatprep.subr.mxu0 0.0
    %2707 = vmatpush1.msra.mxu0 0.0
    %2708 = vmatprep.subr.mxu0 0.0
    %2709 = vmatpush1.msra.mxu0 0.0
    %2710 = vmatprep.subr.mxu0 0.0
    %2711 = vmatpush1.msra.mxu0 0.0
    %2712 = vmatprep.subr.mxu0 0.0
    %2713 = vmatpush1.msra.mxu0 0.0
    %2714 = vmatprep.subr.mxu0 0.0
    %2715 = vmatpush1.msra.mxu0 0.0
    %2716 = vmatprep.mubr.f32.mxu0 0.0
    %2717 = vmatmul.mubr.f32.gmra.mrb[0].mxu0 %v1452
    %v2718 = vpop.f32.mrb[0].mxu0
    %v2719 = vadd.f32 %v1149, %v2718
    %v2720 = vpop.f32.mrb[0].mxu0
    %2721 = vmatprep.mubr.f32.mxu0 0.0
    %2722 = vmatmul.mubr.f32.gmra.mrb[0].mxu0 %v1455
    %v2723 = vpop.f32.mrb[0].mxu0
    %v2724 = vadd.f32 %v1154, %v2723
    %v2725 = vpop.f32.mrb[0].mxu0
    %2726 = vmatprep.mubr.f32.mxu0 0.0
    %2727 = vmatmul.mubr.f32.gmra.mrb[0].mxu0 %v1458
    %v2728 = vpop.f32.mrb[0].mxu0
    %v2729 = vadd.f32 %v1159, %v2728
    %v2730 = vpop.f32.mrb[0].mxu0
    %2731 = vmatprep.mubr.f32.mxu0 0.0
    %2732 = vmatmul.mubr.f32.gmra.mrb[0].mxu0 %v1461
    %v2733 = vpop.f32.mrb[0].mxu0
    %v2734 = vadd.f32 %v1164, %v2733
    %v2735 = vpop.f32.mrb[0].mxu0
    %2736 = vdwg.mxu0
    %s2737 = scalar_lea.vmem [#allocation13], 2
    %v2738 = vld [vmem:[%s2737] sm:$0x1]
    %v2740 = vlaneseq
    %v2741 = vshrl.u32 %v2740, 7
    %v2742 = vsub.s32 0, %v2741
    %v2743 = vrot.slane %v2738, %v2742
    %v2745 = vadd.f32 %v2719, %v2743
    %v2746 = vadd.f32 %v2724, %v2743
    %v2747 = vadd.f32 %v2729, %v2743
    %v2748 = vadd.f32 %v2734, %v2743
    %v2749 = vmax.f32 %v2745, 0.0
    %v2750 = vmax.f32 %v2746, 0.0
    %v2751 = vmax.f32 %v2747, 0.0
    %v2752 = vmax.f32 %v2748, 0.0
    %2753 = vmatprep.subr.mxu0 0.0
    %2754 = vmatpush1.msra.mxu0 %v2749
    %2755 = vmatprep.subr.mxu0 0.0
    %2756 = vmatpush1.msra.mxu0 %v2750
    %2757 = vmatprep.subr.mxu0 0.0
    %2758 = vmatpush1.msra.mxu0 %v2751
    %2759 = vmatprep.subr.mxu0 0.0
    %2760 = vmatpush1.msra.mxu0 %v2752
    %2761 = vmatprep.subr.mxu0 0.0
    %2762 = vmatpush1.msra.mxu0 0.0
    %2763 = vmatprep.subr.mxu0 0.0
    %2764 = vmatpush1.msra.mxu0 0.0
    %2765 = vmatprep.subr.mxu0 0.0
    %2766 = vmatpush1.msra.mxu0 0.0
    %2767 = vmatprep.subr.mxu0 0.0
    %2768 = vmatpush1.msra.mxu0 0.0
    %2769 = vmatprep.subr.mxu0 0.0
    %2770 = vmatpush1.msra.mxu0 0.0
    %2771 = vmatprep.subr.mxu0 0.0
    %2772 = vmatpush1.msra.mxu0 0.0
    %2773 = vmatprep.subr.mxu0 0.0
    %2774 = vmatpush1.msra.mxu0 0.0
    %2775 = vmatprep.subr.mxu0 0.0
    %2776 = vmatpush1.msra.mxu0 0.0
    %2777 = vmatprep.subr.mxu0 0.0
    %2778 = vmatpush1.msra.mxu0 0.0
    %2779 = vmatprep.subr.mxu0 0.0
    %2780 = vmatpush1.msra.mxu0 0.0
    %2781 = vmatprep.subr.mxu0 0.0
    %2782 = vmatpush1.msra.mxu0 0.0
    %2783 = vmatprep.subr.mxu0 0.0
    %2784 = vmatpush1.msra.mxu0 0.0
    %2785 = vmatprep.subr.mxu0 0.0
    %2786 = vmatpush1.msra.mxu0 0.0
    %2787 = vmatprep.subr.mxu0 0.0
    %2788 = vmatpush1.msra.mxu0 0.0
    %2789 = vmatprep.subr.mxu0 0.0
    %2790 = vmatpush1.msra.mxu0 0.0
    %2791 = vmatprep.subr.mxu0 0.0
    %2792 = vmatpush1.msra.mxu0 0.0
    %2793 = vmatprep.subr.mxu0 0.0
    %2794 = vmatpush1.msra.mxu0 0.0
    %2795 = vmatprep.subr.mxu0 0.0
    %2796 = vmatpush1.msra.mxu0 0.0
    %2797 = vmatprep.subr.mxu0 0.0
    %2798 = vmatpush1.msra.mxu0 0.0
    %2799 = vmatprep.subr.mxu0 0.0
    %2800 = vmatpush1.msra.mxu0 0.0
    %2801 = vmatprep.subr.mxu0 0.0
    %2802 = vmatpush1.msra.mxu0 0.0
    %2803 = vmatprep.subr.mxu0 0.0
    %2804 = vmatpush1.msra.mxu0 0.0
    %2805 = vmatprep.subr.mxu0 0.0
    %2806 = vmatpush1.msra.mxu0 0.0
    %2807 = vmatprep.subr.mxu0 0.0
    %2808 = vmatpush1.msra.mxu0 0.0
    %2809 = vmatprep.subr.mxu0 0.0
    %2810 = vmatpush1.msra.mxu0 0.0
    %2811 = vmatprep.subr.mxu0 0.0
    %2812 = vmatpush1.msra.mxu0 0.0
    %2813 = vmatprep.subr.mxu0 0.0
    %2814 = vmatpush1.msra.mxu0 0.0
    %2815 = vmatprep.subr.mxu0 0.0
    %2816 = vmatpush1.msra.mxu0 0.0
    %2817 = vmatprep.mubr.f32.mxu0 0.0
    %2818 = vmatmul.mubr.f32.gmra.mrb[0].mxu0 %v1564
    %v2819 = vpop.f32.mrb[0].mxu0
    %v2820 = vadd.f32 0.0, %v2819
    %v2821 = vpop.f32.mrb[0].mxu0
    %2822 = vmatprep.mubr.f32.mxu0 0.0
    %2823 = vmatmul.mubr.f32.gmra.mrb[0].mxu0 %v1567
    %v2824 = vpop.f32.mrb[0].mxu0
    %v2825 = vadd.f32 0.0, %v2824
    %v2826 = vpop.f32.mrb[0].mxu0
    %2827 = vdwg.mxu0
    %s2828 = scalar_lea.vmem [#allocation14], 128
    %v2829 = vld [vmem:[%s2828] sm:$0xff]
    %v2830 = vld [vmem:[%s2828 + $0x8] sm:$0xff]
    %v2831 = vld [vmem:[%s2828 + $0x10] sm:$0xff]
    %v2832 = vld [vmem:[%s2828 + $0x18] sm:$0xff]
    %v2833 = vld [vmem:[%s2828 + $0x20] sm:$0xff]
    %v2834 = vld [vmem:[%s2828 + $0x28] sm:$0xff]
    %v2835 = vld [vmem:[%s2828 + $0x30] sm:$0xff]
    %v2836 = vld [vmem:[%s2828 + $0x38] sm:$0xff]
    %v2838 = vsel %vm520, %v2820, 0
    %v2841 = vsel %vm520, %v2825, 0
    %2843 = vmatprep.subr.mxu0 0.0
    %2844 = vmatpush1.msra.mxu0 %v2829
    %2845 = vmatprep.subr.mxu0 0.0
    %2846 = vmatpush1.msra.mxu0 %v2830
    %2847 = vmatprep.subr.mxu0 0.0
    %2848 = vmatpush1.msra.mxu0 %v2831
    %2849 = vmatprep.subr.mxu0 0.0
    %2850 = vmatpush1.msra.mxu0 %v2832
    %2851 = vmatprep.subr.mxu0 0.0
    %2852 = vmatpush1.msra.mxu0 %v2833
    %2853 = vmatprep.subr.mxu0 0.0
    %2854 = vmatpush1.msra.mxu0 %v2834
    %2855 = vmatprep.subr.mxu0 0.0
    %2856 = vmatpush1.msra.mxu0 %v2835
    %2857 = vmatprep.subr.mxu0 0.0
    %2858 = vmatpush1.msra.mxu0 %v2836
    %2859 = vmatprep.subr.mxu0 0.0
    %2860 = vmatpush1.msra.mxu0 0.0
    %2861 = vmatprep.subr.mxu0 0.0
    %2862 = vmatpush1.msra.mxu0 0.0
    %2863 = vmatprep.subr.mxu0 0.0
    %2864 = vmatpush1.msra.mxu0 0.0
    %2865 = vmatprep.subr.mxu0 0.0
    %2866 = vmatpush1.msra.mxu0 0.0
    %2867 = vmatprep.subr.mxu0 0.0
    %2868 = vmatpush1.msra.mxu0 0.0
    %2869 = vmatprep.subr.mxu0 0.0
    %2870 = vmatpush1.msra.mxu0 0.0
    %2871 = vmatprep.subr.mxu0 0.0
    %2872 = vmatpush1.msra.mxu0 0.0
    %2873 = vmatprep.subr.mxu0 0.0
    %2874 = vmatpush1.msra.mxu0 0.0
    %2875 = vmatprep.subr.mxu0 0.0
    %2876 = vmatpush1.msra.mxu0 0.0
    %2877 = vmatprep.subr.mxu0 0.0
    %2878 = vmatpush1.msra.mxu0 0.0
    %2879 = vmatprep.subr.mxu0 0.0
    %2880 = vmatpush1.msra.mxu0 0.0
    %2881 = vmatprep.subr.mxu0 0.0
    %2882 = vmatpush1.msra.mxu0 0.0
    %2883 = vmatprep.subr.mxu0 0.0
    %2884 = vmatpush1.msra.mxu0 0.0
    %2885 = vmatprep.subr.mxu0 0.0
    %2886 = vmatpush1.msra.mxu0 0.0
    %2887 = vmatprep.subr.mxu0 0.0
    %2888 = vmatpush1.msra.mxu0 0.0
    %2889 = vmatprep.subr.mxu0 0.0
    %2890 = vmatpush1.msra.mxu0 0.0
    %2891 = vmatprep.subr.mxu0 0.0
    %2892 = vmatpush1.msra.mxu0 0.0
    %2893 = vmatprep.subr.mxu0 0.0
    %2894 = vmatpush1.msra.mxu0 0.0
    %2895 = vmatprep.subr.mxu0 0.0
    %2896 = vmatpush1.msra.mxu0 0.0
    %2897 = vmatprep.subr.mxu0 0.0
    %2898 = vmatpush1.msra.mxu0 0.0
    %2899 = vmatprep.subr.mxu0 0.0
    %2900 = vmatpush1.msra.mxu0 0.0
    %2901 = vmatprep.subr.mxu0 0.0
    %2902 = vmatpush1.msra.mxu0 0.0
    %2903 = vmatprep.subr.mxu0 0.0
    %2904 = vmatpush1.msra.mxu0 0.0
    %2905 = vmatprep.subr.mxu0 0.0
    %2906 = vmatpush1.msra.mxu0 0.0
    %2907 = vmatprep.mubr.f32.mxu0 0.0
    %2908 = vmatmul.mubr.f32.gmra.mrb[0].mxu0 %v2838
    %v2909 = vpop.f32.mrb[0].mxu0
    %v2910 = vadd.f32 0.0, %v2909
    %v2911 = vpop.f32.mrb[0].mxu0
    %2912 = vmatprep.mubr.f32.mxu0 0.0
    %2913 = vmatmul.mubr.f32.gmra.mrb[0].mxu0 %v2841
    %v2914 = vpop.f32.mrb[0].mxu0
    %v2915 = vadd.f32 0.0, %v2914
    %v2916 = vpop.f32.mrb[0].mxu0
    %2917 = vdwg.mxu0
    %v2918 = vmul.f32 %v2910, %v274
    %v2919 = vmul.f32 %v2915, %v276
    %s2920 = scalar_lea.vmem [#allocation16], 2
    %v2921 = vld [vmem:[%s2920] sm:$0x1]
    %v2923 = vlaneseq
    %v2924 = vshrl.u32 %v2923, 7
    %v2925 = vsub.s32 0, %v2924
    %v2926 = vrot.slane %v2921, %v2925
    %v2928 = vmul.f32 %v277, %v2926
    %v2929 = vmul.f32 %v278, %v2926
    %v2930 = vadd.f32 %v2918, %v2928
    %v2931 = vadd.f32 %v2919, %v2929
    %v2932 = vadd.f32 %v2930, %v2554
    %v2933 = vadd.f32 %v2931, %v2559
    %s2934 = scalar_lea.vmem [#allocation17], 2
    %v2935 = vld [vmem:[%s2934] sm:$0x1]
    %v2937 = vlaneseq
    %v2938 = vshrl.u32 %v2937, 7
    %v2939 = vsub.s32 0, %v2938
    %v2940 = vrot.slane %v2935, %v2939
    %v2942 = vmul.f32 %v2932, %v2940
    %v2943 = vmul.f32 %v2933, %v2940
    %s2944 = scalar_lea.vmem [#allocation19], 2
    %v2945 = vld [vmem:[%s2944] sm:$0x1]
    %v2947 = vlaneseq
    %v2948 = vshrl.u32 %v2947, 7
    %v2949 = vsub.s32 0, %v2948
    %v2950 = vrot.slane %v2945, %v2949
    %v2952 = vadd.f32 %v2942, %v2950
    %v2953 = vadd.f32 %v2943, %v2950
    %v2954 = vmax.f32 %v2952, 0.0
    %v2955 = vmax.f32 %v2953, 0.0
    %v2956 = vadd.f32 %v2362, %v2954
    %v2957 = vadd.f32 %v2363, %v2955
    %v2958 = vld [vmem:[%s21] sm:$0xff]
    %v2959 = vld [vmem:[%s21 + $0x8] sm:$0xff]
    %v2960 = vld [vmem:[%s21 + $0x10] sm:$0xff]
    %v2961 = vld [vmem:[%s21 + $0x18] sm:$0xff]
    %v2962 = vld [vmem:[%s21 + $0x20] sm:$0xff]
    %v2963 = vld [vmem:[%s21 + $0x28] sm:$0xff]
    %v2964 = vld [vmem:[%s21 + $0x30] sm:$0xff]
    %v2965 = vld [vmem:[%s21 + $0x38] sm:$0xff]
    %v2966 = vld [vmem:[%s22] sm:$0x1]
    %v2968 = vlaneseq
    %v2969 = vshrl.u32 %v2968, 7
    %v2970 = vsub.s32 0, %v2969
    %v2971 = vrot.slane %v2966, %v2970
    %v2974 = vsel %vm520, %v2956, 0
    %v2977 = vsel %vm520, %v2957, 0
    %2979 = vmatprep.subr.mxu0 0.0
    %2980 = vmatpush1.msra.mxu0 %v2958
    %2981 = vmatprep.subr.mxu0 0.0
    %2982 = vmatpush1.msra.mxu0 %v2959
    %2983 = vmatprep.subr.mxu0 0.0
    %2984 = vmatpush1.msra.mxu0 %v2960
    %2985 = vmatprep.subr.mxu0 0.0
    %2986 = vmatpush1.msra.mxu0 %v2961
    %2987 = vmatprep.subr.mxu0 0.0
    %2988 = vmatpush1.msra.mxu0 %v2962
    %2989 = vmatprep.subr.mxu0 0.0
    %2990 = vmatpush1.msra.mxu0 %v2963
    %2991 = vmatprep.subr.mxu0 0.0
    %2992 = vmatpush1.msra.mxu0 %v2964
    %2993 = vmatprep.subr.mxu0 0.0
    %2994 = vmatpush1.msra.mxu0 %v2965
    %2995 = vmatprep.subr.mxu0 0.0
    %2996 = vmatpush1.msra.mxu0 0.0
    %2997 = vmatprep.subr.mxu0 0.0
    %2998 = vmatpush1.msra.mxu0 0.0
    %2999 = vmatprep.subr.mxu0 0.0
    %3000 = vmatpush1.msra.mxu0 0.0
    %3001 = vmatprep.subr.mxu0 0.0
    %3002 = vmatpush1.msra.mxu0 0.0
    %3003 = vmatprep.subr.mxu0 0.0
    %3004 = vmatpush1.msra.mxu0 0.0
    %3005 = vmatprep.subr.mxu0 0.0
    %3006 = vmatpush1.msra.mxu0 0.0
    %3007 = vmatprep.subr.mxu0 0.0
    %3008 = vmatpush1.msra.mxu0 0.0
    %3009 = vmatprep.subr.mxu0 0.0
    %3010 = vmatpush1.msra.mxu0 0.0
    %3011 = vmatprep.subr.mxu0 0.0
    %3012 = vmatpush1.msra.mxu0 0.0
    %3013 = vmatprep.subr.mxu0 0.0
    %3014 = vmatpush1.msra.mxu0 0.0
    %3015 = vmatprep.subr.mxu0 0.0
    %3016 = vmatpush1.msra.mxu0 0.0
    %3017 = vmatprep.subr.mxu0 0.0
    %3018 = vmatpush1.msra.mxu0 0.0
    %3019 = vmatprep.subr.mxu0 0.0
    %3020 = vmatpush1.msra.mxu0 0.0
    %3021 = vmatprep.subr.mxu0 0.0
    %3022 = vmatpush1.msra.mxu0 0.0
    %3023 = vmatprep.subr.mxu0 0.0
    %3024 = vmatpush1.msra.mxu0 0.0
    %3025 = vmatprep.subr.mxu0 0.0
    %3026 = vmatpush1.msra.mxu0 0.0
    %3027 = vmatprep.subr.mxu0 0.0
    %3028 = vmatpush1.msra.mxu0 0.0
    %3029 = vmatprep.subr.mxu0 0.0
    %3030 = vmatpush1.msra.mxu0 0.0
    %3031 = vmatprep.subr.mxu0 0.0
    %3032 = vmatpush1.msra.mxu0 0.0
    %3033 = vmatprep.subr.mxu0 0.0
    %3034 = vmatpush1.msra.mxu0 0.0
    %3035 = vmatprep.subr.mxu0 0.0
    %3036 = vmatpush1.msra.mxu0 0.0
    %3037 = vmatprep.subr.mxu0 0.0
    %3038 = vmatpush1.msra.mxu0 0.0
    %3039 = vmatprep.subr.mxu0 0.0
    %3040 = vmatpush1.msra.mxu0 0.0
    %3041 = vmatprep.subr.mxu0 0.0
    %3042 = vmatpush1.msra.mxu0 0.0
    %3043 = vmatprep.mubr.f32.mxu0 0.0
    %3044 = vmatmul.mubr.f32.gmra.mrb[0].mxu0 %v2974
    %v3045 = vpop.f32.mrb[0].mxu0
    %v3046 = vadd.f32 %v2971, %v3045
    %v3047 = vpop.f32.mrb[0].mxu0
    %3048 = vmatprep.mubr.f32.mxu0 0.0
    %3049 = vmatmul.mubr.f32.gmra.mrb[0].mxu0 %v2977
    %v3050 = vpop.f32.mrb[0].mxu0
    %v3051 = vadd.f32 %v2971, %v3050
    %v3052 = vpop.f32.mrb[0].mxu0
    %3053 = vdwg.mxu0
    %3054 = vst.msk [vmem:[#allocation20] sm:$0xff] %vm264, %v3046
    %3055 = vst.msk [vmem:[#allocation20 + $0x8] sm:$0xff] %vm264, %v3051
    // Predicated region
    $region138: #{spatial_graph_network_forward.1} parent=1 // pred_check
      _
    $region139: #{spatial_graph_network_forward.1} parent=1 // pred_check_branch
      %3057 = sbr.rel (0) target = $region141
    $region140: #{spatial_graph_network_forward.1} parent=1 // pred_region
      %s3059 = ssub.s32 256, 256
      %3060 = vsyncadd [#allocation4], %s3059
      %s3061 = sshll.u32 [#allocation20], 4
      %s3062 = int_to_ptr.vmem [resolvable:$true] %s3061
      %3067 = dma.vmem_to_hbm [thread:$0]  %s3062, 256, %s23, [#allocation4], 128, 128, 8
    $region141: #{spatial_graph_network_forward.1} parent=1 // pred_fallthru
      _
    // Predicated region
    $region142: #{spatial_graph_network_forward.1} parent=1 // pred_check
      _
    $region143: #{spatial_graph_network_forward.1} parent=1 // pred_check_branch
      %3069 = sbr.rel (0) target = $region145
    $region144: #{spatial_graph_network_forward.1} parent=1 // pred_region
      %3070 = dma.done [#allocation4], 256
    $region145: #{spatial_graph_network_forward.1} parent=1 // pred_fallthru
      _
    %3071 = vsyncpa [#allocation3], 1
    %3072 = vsyncpa [#allocation6], 1
    %3073 = vsyncpa [#allocation9], 1
    %3074 = vsyncpa [#allocation12], 1
    %3075 = vsyncpa [#allocation15], 1
    %3076 = vsyncpa [#allocation18], 1
    %3077 = vsyncpa [#allocation4], 1

</llo_original>
